<compile_context>
chip_gen: v5e
topology: v5e:2x2
jax: 0.10.0
libtpu: 0.0.40
codegen_flags: <defaults>
</compile_context>

<pallas_src>
import functools

import jax
import jax.numpy as jnp
from jax.experimental import pallas as pl
from jax.experimental.pallas import tpu as pltpu


def _conv3x3_shuffle_prelu_kernel(x_ref, w_ref, b_ref, alpha_ref, out_ref, *,
                                  tile_h, width, cin, c_final, r, compute_dtype):
    # x_ref    : (1, 1, (tile_h+3)*(width+2), cin)  flattened, zero-padded row strip
    # w_ref    : (9*cin, c_final*r*r)               rows ordered (dy, dx, cin)
    # b_ref    : (1, c_final*r*r)
    # alpha_ref: (1,)  in SMEM (PReLU shared slope)
    # out_ref  : (1, c_final, tile_h, r*r*width)    lane index = (i, w, j)
    w_ext = width + 2
    m_ext = tile_h * w_ext

    # --- im2col: each tap is a contiguous sublane-shifted slice of the flat strip.
    cols = []
    for dy in range(3):
        for dx in range(3):
            off = dy * w_ext + dx
            cols.append(x_ref[0, 0, off:off + m_ext, :])
    patch = jnp.concatenate(cols, axis=-1)                     # (m_ext, 9*cin)

    w = w_ref[...]
    if compute_dtype is not None:
        patch = patch.astype(compute_dtype)
        w = w.astype(compute_dtype)

    # --- single MXU contraction, K = 9*cin, f32 accumulation.
    acc = jnp.dot(patch, w, preferred_element_type=jnp.float32)  # (m_ext, Cout)
    acc = acc + b_ref[...].astype(jnp.float32)

    # --- PReLU (single shared alpha; commutes with pixel shuffle).
    alpha = alpha_ref[0].astype(jnp.float32)
    acc = jnp.where(acc >= 0.0, acc, alpha * acc)

    # --- fused pixel shuffle: drop the 2 junk columns from the extended width and
    #     interleave (w, j) on the lane axis; i goes to the lane-offset i*W*r.
    #     out[c, h, i*W*r + w*r + j] = acc[(h, w), c*r*r + i*r + j]
    acc3 = acc.reshape(tile_h, w_ext, c_final * r * r)
    # TODO(synk): for large C (e.g. 64) replace this static per-(c, i) unroll with
    # a cout-blocked grid axis to bound compile-time code size.
    for c in range(c_final):
        rows = []
        for i in range(r):
            lo = c * r * r + i * r
            piece = acc3[:, :width, lo:lo + r]                 # (tile_h, W, r)
            rows.append(piece.reshape(tile_h, width * r))      # (w, j) interleave
        out_ref[0, c] = jnp.concatenate(rows, axis=-1).astype(out_ref.dtype)


def upsample_block(x_nchw, w_oihw, bias, alpha, up_scale, *,
                   tile_h=None, compute_dtype=None):
    """UpsampleBLock forward: (N, Cin, H, W) -> (N, Cin, H*r, W*r)."""
    N, Cin, H, W = x_nchw.shape
    r = int(up_scale)
    Cout = w_oihw.shape[0]
    assert Cout == Cin * r * r
    C = Cin

    if tile_h is None:
        tile_h = 8 if H % 8 == 0 else H
    assert H % tile_h == 0
    n_strips = H // tile_h
    w_ext = W + 2
    strip_len = (tile_h + 3) * w_ext

    # Layout plumbing (one fused XLA prep pass over the small input):
    # NCHW -> NHWC, zero-pad (top 1 / bottom 2 / left 1 / right 1), gather the
    # halo'd row strips and flatten each strip spatially.
    x_nhwc = jnp.transpose(x_nchw, (0, 2, 3, 1))
    xpad = jnp.pad(x_nhwc, ((0, 0), (1, 2), (1, 1), (0, 0)))       # (N, H+3, W+2, Cin)
    row_idx = (jnp.arange(n_strips) * tile_h)[:, None] + jnp.arange(tile_h + 3)[None, :]
    strips = jnp.take(xpad, row_idx, axis=1)                        # (N, nS, tH+3, W+2, Cin)
    strips = strips.reshape(N, n_strips, strip_len, Cin)

    # Weights OIHW -> (9*Cin, Cout): row order (dy, dx, cin), cout order (c, i, j).
    wk = jnp.transpose(w_oihw, (2, 3, 1, 0)).reshape(9 * Cin, Cout)
    bias2d = bias.reshape(1, Cout)
    alpha1d = jnp.asarray(alpha, jnp.float32).reshape(1)

    kernel = functools.partial(
        _conv3x3_shuffle_prelu_kernel,
        tile_h=tile_h, width=W, cin=Cin, c_final=C, r=r,
        compute_dtype=compute_dtype)

    out_flat = pl.pallas_call(
        kernel,
        out_shape=jax.ShapeDtypeStruct((N, C, H, r * r * W), x_nchw.dtype),
        grid_spec=pltpu.PrefetchScalarGridSpec(
            num_scalar_prefetch=0,
            grid=(N, n_strips),
            in_specs=[
                pl.BlockSpec((1, 1, strip_len, Cin), lambda n, s: (n, s, 0, 0)),
                pl.BlockSpec((9 * Cin, Cout), lambda n, s: (0, 0)),
                pl.BlockSpec((1, Cout), lambda n, s: (0, 0)),
                pl.BlockSpec(memory_space=pltpu.MemorySpace.SMEM),   # alpha scalar
            ],
            out_specs=pl.BlockSpec((1, C, tile_h, r * r * W),
                                   lambda n, s: (n, 0, s, 0)),
        ),
        compiler_params=pltpu.CompilerParams(
            dimension_semantics=("parallel", "parallel"),
            vmem_limit_bytes=32 * 1024 * 1024,
        ),
    )(strips, wk, bias2d, alpha1d)

    # Pixel shuffle is already folded into the output layout; this reshape is free.
    return out_flat.reshape(N, C, H * r, W * r)


def _reference(x_nchw, w_oihw, bias, alpha, up_scale):
    """Pure-JAX reference (conv -> pixel shuffle -> PReLU)."""
    y = jax.lax.conv_general_dilated(
        x_nchw, w_oihw, window_strides=(1, 1), padding=((1, 1), (1, 1)),
        dimension_numbers=("NCHW", "OIHW", "NCHW"),
    ) + bias.reshape(1, -1, 1, 1)
    N, C_r2, H, W = y.shape
    r = up_scale
    C = C_r2 // (r * r)
    y = y.reshape(N, C, r, r, H, W)
    y = jnp.transpose(y, (0, 1, 4, 2, 5, 3)).reshape(N, C, H * r, W * r)
    return jnp.where(y >= 0.0, y, alpha * y)


if __name__ == "__main__":
    key = jax.random.PRNGKey(0)
    k_x, k_w, k_b = jax.random.split(key, 3)

    N, Cin, H, W = 2, 4, 16, 16
    up_scale = 2
    Cout = Cin * up_scale ** 2

    x = jax.random.normal(k_x, (N, Cin, H, W), jnp.float32)
    # Deterministic params mimicking Conv2d init scale (fan_in = Cin*3*3).
    fan_in = Cin * 3 * 3
    bound = 1.0 / (fan_in ** 0.5)
    w = jax.random.uniform(k_w, (Cout, Cin, 3, 3), jnp.float32, -bound, bound)
    b = jax.random.uniform(k_b, (Cout,), jnp.float32, -bound, bound)
    alpha = jnp.float32(0.25)  # PReLU default init

    out = upsample_block(x, w, b, alpha, up_scale)
    out = jax.block_until_ready(out)

    ref = _reference(x, w, b, alpha, up_scale)
    assert out.shape == (N, Cin, H * up_scale, W * up_scale)
    assert jnp.allclose(out, ref, atol=1e-3, rtol=1e-3), float(jnp.max(jnp.abs(out - ref)))

    print("KERNEL_OK")
</pallas_src>

<mosaic_0001>
module attributes {stable_mosaic.version = 11 : i64} {
  func.func @_conv3x3_shuffle_prelu_kernel(%arg0: i32, %arg1: i32, %arg2: memref<1x1x198x4xf32, #tpu.memory_space<vmem>>, %arg3: memref<36x16xf32, #tpu.memory_space<vmem>>, %arg4: memref<1x16xf32, #tpu.memory_space<vmem>>, %arg5: memref<1xf32, #tpu.memory_space<smem>>, %arg6: memref<1x4x8x64xf32, #tpu.memory_space<vmem>>) attributes {dimension_semantics = [#tpu.dimension_semantics<parallel>, #tpu.dimension_semantics<parallel>], iteration_bounds = array<i64: 2, 2>, scalar_prefetch = 0 : i64, scratch_operands = 0 : i64, tpu.core_type = #tpu.core_type<tc>, window_params = [{transform_indices = @transform_0, window_bounds = array<i64: 1, 1, 198, 4>}, {pipeline_mode = #tpu.pipeline_mode<synchronous>, transform_indices = @transform_1, window_bounds = array<i64: 36, 16>}, {pipeline_mode = #tpu.pipeline_mode<synchronous>, transform_indices = @transform_2, window_bounds = array<i64: 1, 16>}, {transform_indices = @transform_3, window_bounds = array<i64: 1>}, {transform_indices = @transform_4, window_bounds = array<i64: 1, 4, 8, 64>}]} {
    %c0 = arith.constant 0 : index
    %c0_0 = arith.constant 0 : index
    %c0_1 = arith.constant 0 : index
    %c0_2 = arith.constant 0 : index
    %0 = vector.load %arg2[%c0, %c0_0, %c0_1, %c0_2] : memref<1x1x198x4xf32, #tpu.memory_space<vmem>>, vector<1x1x144x4xf32>
    %1 = vector.shape_cast %0 : vector<1x1x144x4xf32> to vector<144x4xf32>
    %c0_3 = arith.constant 0 : index
    %c0_4 = arith.constant 0 : index
    %c1 = arith.constant 1 : index
    %c0_5 = arith.constant 0 : index
    %2 = vector.load %arg2[%c0_3, %c0_4, %c1, %c0_5] : memref<1x1x198x4xf32, #tpu.memory_space<vmem>>, vector<1x1x144x4xf32>
    %3 = vector.shape_cast %2 : vector<1x1x144x4xf32> to vector<144x4xf32>
    %c0_6 = arith.constant 0 : index
    %c0_7 = arith.constant 0 : index
    %c2 = arith.constant 2 : index
    %c0_8 = arith.constant 0 : index
    %4 = vector.load %arg2[%c0_6, %c0_7, %c2, %c0_8] : memref<1x1x198x4xf32, #tpu.memory_space<vmem>>, vector<1x1x144x4xf32>
    %5 = vector.shape_cast %4 : vector<1x1x144x4xf32> to vector<144x4xf32>
    %c0_9 = arith.constant 0 : index
    %c0_10 = arith.constant 0 : index
    %c18 = arith.constant 18 : index
    %c0_11 = arith.constant 0 : index
    %6 = vector.load %arg2[%c0_9, %c0_10, %c18, %c0_11] : memref<1x1x198x4xf32, #tpu.memory_space<vmem>>, vector<1x1x144x4xf32>
    %7 = vector.shape_cast %6 : vector<1x1x144x4xf32> to vector<144x4xf32>
    %c0_12 = arith.constant 0 : index
    %c0_13 = arith.constant 0 : index
    %c19 = arith.constant 19 : index
    %c0_14 = arith.constant 0 : index
    %8 = vector.load %arg2[%c0_12, %c0_13, %c19, %c0_14] : memref<1x1x198x4xf32, #tpu.memory_space<vmem>>, vector<1x1x144x4xf32>
    %9 = vector.shape_cast %8 : vector<1x1x144x4xf32> to vector<144x4xf32>
    %c0_15 = arith.constant 0 : index
    %c0_16 = arith.constant 0 : index
    %c20 = arith.constant 20 : index
    %c0_17 = arith.constant 0 : index
    %10 = vector.load %arg2[%c0_15, %c0_16, %c20, %c0_17] : memref<1x1x198x4xf32, #tpu.memory_space<vmem>>, vector<1x1x144x4xf32>
    %11 = vector.shape_cast %10 : vector<1x1x144x4xf32> to vector<144x4xf32>
    %c0_18 = arith.constant 0 : index
    %c0_19 = arith.constant 0 : index
    %c36 = arith.constant 36 : index
    %c0_20 = arith.constant 0 : index
    %12 = vector.load %arg2[%c0_18, %c0_19, %c36, %c0_20] : memref<1x1x198x4xf32, #tpu.memory_space<vmem>>, vector<1x1x144x4xf32>
    %13 = vector.shape_cast %12 : vector<1x1x144x4xf32> to vector<144x4xf32>
    %c0_21 = arith.constant 0 : index
    %c0_22 = arith.constant 0 : index
    %c37 = arith.constant 37 : index
    %c0_23 = arith.constant 0 : index
    %14 = vector.load %arg2[%c0_21, %c0_22, %c37, %c0_23] : memref<1x1x198x4xf32, #tpu.memory_space<vmem>>, vector<1x1x144x4xf32>
    %15 = vector.shape_cast %14 : vector<1x1x144x4xf32> to vector<144x4xf32>
    %c0_24 = arith.constant 0 : index
    %c0_25 = arith.constant 0 : index
    %c38 = arith.constant 38 : index
    %c0_26 = arith.constant 0 : index
    %16 = vector.load %arg2[%c0_24, %c0_25, %c38, %c0_26] : memref<1x1x198x4xf32, #tpu.memory_space<vmem>>, vector<1x1x144x4xf32>
    %17 = vector.shape_cast %16 : vector<1x1x144x4xf32> to vector<144x4xf32>
    %18 = tpu.concatenate %1, %3, %5, %7, %9, %11, %13, %15, %17 in 1 : vector<144x4xf32>, vector<144x4xf32>, vector<144x4xf32>, vector<144x4xf32>, vector<144x4xf32>, vector<144x4xf32>, vector<144x4xf32>, vector<144x4xf32>, vector<144x4xf32> -> vector<144x36xf32>
    %c0_27 = arith.constant 0 : index
    %c0_28 = arith.constant 0 : index
    %19 = vector.load %arg3[%c0_27, %c0_28] : memref<36x16xf32, #tpu.memory_space<vmem>>, vector<36x16xf32>
    %cst = arith.constant dense<0.000000e+00> : vector<144x16xf32>
    %20 = tpu.matmul %18, %19, %cst {dimension_numbers = #tpu.dot_dimension_numbers<[1], [0], [0], [1], [0, 0, 1, 1], [], []>} : vector<144x36xf32>, vector<36x16xf32>, vector<144x16xf32> -> vector<144x16xf32>
    %c0_29 = arith.constant 0 : index
    %c0_30 = arith.constant 0 : index
    %21 = vector.load %arg4[%c0_29, %c0_30] : memref<1x16xf32, #tpu.memory_space<vmem>>, vector<1x16xf32>
    %22 = vector.broadcast %21 : vector<1x16xf32> to vector<144x16xf32>
    %23 = arith.addf %20, %22 : vector<144x16xf32>
    %c0_31 = arith.constant 0 : index
    %24 = memref.load %arg5[%c0_31] : memref<1xf32, #tpu.memory_space<smem>>
    %cst_32 = arith.constant 0.000000e+00 : f32
    %25 = vector.broadcast %cst_32 : f32 to vector<144x16xf32>
    %26 = arith.cmpf oge, %23, %25 : vector<144x16xf32>
    %27 = vector.broadcast %24 : f32 to vector<144x16xf32>
    %28 = arith.mulf %27, %23 : vector<144x16xf32>
    %29 = arith.select %26, %23, %28 : vector<144x16xi1>, vector<144x16xf32>
    %30 = vector.shape_cast %29 : vector<144x16xf32> to vector<8x18x16xf32>
    %31 = vector.extract_strided_slice %30 {offsets = [0, 0, 0], sizes = [8, 16, 2], strides = [1, 1, 1]} : vector<8x18x16xf32> to vector<8x16x2xf32>
    %32 = vector.shape_cast %31 : vector<8x16x2xf32> to vector<8x32xf32>
    %33 = vector.extract_strided_slice %30 {offsets = [0, 0, 2], sizes = [8, 16, 2], strides = [1, 1, 1]} : vector<8x18x16xf32> to vector<8x16x2xf32>
    %34 = vector.shape_cast %33 : vector<8x16x2xf32> to vector<8x32xf32>
    %35 = tpu.concatenate %32, %34 in 1 : vector<8x32xf32>, vector<8x32xf32> -> vector<8x64xf32>
    %c0_33 = arith.constant 0 : index
    %c0_34 = arith.constant 0 : index
    %c0_35 = arith.constant 0 : index
    %c0_36 = arith.constant 0 : index
    %36 = vector.load %arg6[%c0_33, %c0_34, %c0_35, %c0_36] : memref<1x4x8x64xf32, #tpu.memory_space<vmem>>, vector<1x1x8x64xf32>
    %37 = vector.shape_cast %36 : vector<1x1x8x64xf32> to vector<8x64xf32>
    %38 = vector.shape_cast %35 : vector<8x64xf32> to vector<1x1x8x64xf32>
    tpu.vector_store %arg6[%c0_33, %c0_34, %c0_35, %c0_36], %38 {strides = array<i32>} : memref<1x4x8x64xf32, #tpu.memory_space<vmem>>, vector<1x1x8x64xf32>,
    %39 = vector.extract_strided_slice %30 {offsets = [0, 0, 4], sizes = [8, 16, 2], strides = [1, 1, 1]} : vector<8x18x16xf32> to vector<8x16x2xf32>
    %40 = vector.shape_cast %39 : vector<8x16x2xf32> to vector<8x32xf32>
    %41 = vector.extract_strided_slice %30 {offsets = [0, 0, 6], sizes = [8, 16, 2], strides = [1, 1, 1]} : vector<8x18x16xf32> to vector<8x16x2xf32>
    %42 = vector.shape_cast %41 : vector<8x16x2xf32> to vector<8x32xf32>
    %43 = tpu.concatenate %40, %42 in 1 : vector<8x32xf32>, vector<8x32xf32> -> vector<8x64xf32>
    %c0_37 = arith.constant 0 : index
    %c1_38 = arith.constant 1 : index
    %c0_39 = arith.constant 0 : index
    %c0_40 = arith.constant 0 : index
    %44 = vector.load %arg6[%c0_37, %c1_38, %c0_39, %c0_40] : memref<1x4x8x64xf32, #tpu.memory_space<vmem>>, vector<1x1x8x64xf32>
    %45 = vector.shape_cast %44 : vector<1x1x8x64xf32> to vector<8x64xf32>
    %46 = vector.shape_cast %43 : vector<8x64xf32> to vector<1x1x8x64xf32>
    tpu.vector_store %arg6[%c0_37, %c1_38, %c0_39, %c0_40], %46 {strides = array<i32>} : memref<1x4x8x64xf32, #tpu.memory_space<vmem>>, vector<1x1x8x64xf32>,
    %47 = vector.extract_strided_slice %30 {offsets = [0, 0, 8], sizes = [8, 16, 2], strides = [1, 1, 1]} : vector<8x18x16xf32> to vector<8x16x2xf32>
    %48 = vector.shape_cast %47 : vector<8x16x2xf32> to vector<8x32xf32>
    %49 = vector.extract_strided_slice %30 {offsets = [0, 0, 10], sizes = [8, 16, 2], strides = [1, 1, 1]} : vector<8x18x16xf32> to vector<8x16x2xf32>
    %50 = vector.shape_cast %49 : vector<8x16x2xf32> to vector<8x32xf32>
    %51 = tpu.concatenate %48, %50 in 1 : vector<8x32xf32>, vector<8x32xf32> -> vector<8x64xf32>
    %c0_41 = arith.constant 0 : index
    %c2_42 = arith.constant 2 : index
    %c0_43 = arith.constant 0 : index
    %c0_44 = arith.constant 0 : index
    %52 = vector.load %arg6[%c0_41, %c2_42, %c0_43, %c0_44] : memref<1x4x8x64xf32, #tpu.memory_space<vmem>>, vector<1x1x8x64xf32>
    %53 = vector.shape_cast %52 : vector<1x1x8x64xf32> to vector<8x64xf32>
    %54 = vector.shape_cast %51 : vector<8x64xf32> to vector<1x1x8x64xf32>
    tpu.vector_store %arg6[%c0_41, %c2_42, %c0_43, %c0_44], %54 {strides = array<i32>} : memref<1x4x8x64xf32, #tpu.memory_space<vmem>>, vector<1x1x8x64xf32>,
    %55 = vector.extract_strided_slice %30 {offsets = [0, 0, 12], sizes = [8, 16, 2], strides = [1, 1, 1]} : vector<8x18x16xf32> to vector<8x16x2xf32>
    %56 = vector.shape_cast %55 : vector<8x16x2xf32> to vector<8x32xf32>
    %57 = vector.extract_strided_slice %30 {offsets = [0, 0, 14], sizes = [8, 16, 2], strides = [1, 1, 1]} : vector<8x18x16xf32> to vector<8x16x2xf32>
    %58 = vector.shape_cast %57 : vector<8x16x2xf32> to vector<8x32xf32>
    %59 = tpu.concatenate %56, %58 in 1 : vector<8x32xf32>, vector<8x32xf32> -> vector<8x64xf32>
    %c0_45 = arith.constant 0 : index
    %c3 = arith.constant 3 : index
    %c0_46 = arith.constant 0 : index
    %c0_47 = arith.constant 0 : index
    %60 = vector.load %arg6[%c0_45, %c3, %c0_46, %c0_47] : memref<1x4x8x64xf32, #tpu.memory_space<vmem>>, vector<1x1x8x64xf32>
    %61 = vector.shape_cast %60 : vector<1x1x8x64xf32> to vector<8x64xf32>
    %62 = vector.shape_cast %59 : vector<8x64xf32> to vector<1x1x8x64xf32>
    tpu.vector_store %arg6[%c0_45, %c3, %c0_46, %c0_47], %62 {strides = array<i32>} : memref<1x4x8x64xf32, #tpu.memory_space<vmem>>, vector<1x1x8x64xf32>,
    return
  }
  func.func @transform_0(%arg0: i32, %arg1: i32) -> (i32, i32, i32, i32) {
    %c0_i32 = arith.constant 0 : i32
    %c0_i32_0 = arith.constant 0 : i32
    %c0_i32_1 = arith.constant 0 : i32
    return %arg0, %arg1, %c0_i32, %c0_i32_0 : i32, i32, i32, i32
  }
  func.func @transform_1(%arg0: i32, %arg1: i32) -> (i32, i32) {
    %c0_i32 = arith.constant 0 : i32
    %c0_i32_0 = arith.constant 0 : i32
    %c0_i32_1 = arith.constant 0 : i32
    return %c0_i32, %c0_i32_0 : i32, i32
  }
  func.func @transform_2(%arg0: i32, %arg1: i32) -> (i32, i32) {
    %c0_i32 = arith.constant 0 : i32
    %c0_i32_0 = arith.constant 0 : i32
    %c0_i32_1 = arith.constant 0 : i32
    return %c0_i32, %c0_i32_0 : i32, i32
  }
  func.func @transform_3(%arg0: i32, %arg1: i32) -> i32 {
    %c0_i32 = arith.constant 0 : i32
    %c0_i32_0 = arith.constant 0 : i32
    return %c0_i32 : i32
  }
  func.func @transform_4(%arg0: i32, %arg1: i32) -> (i32, i32, i32, i32) {
    %c0_i32 = arith.constant 0 : i32
    %c0_i32_0 = arith.constant 0 : i32
    %c0_i32_1 = arith.constant 0 : i32
    return %arg0, %c0_i32, %arg1, %c0_i32_0 : i32, i32, i32, i32
  }
}

</mosaic_0001>

<llo_original>
// kernel: tpu_custom_call.1
$region0: #{tpu_custom_call.1}
  #allocation0 [shape = 'u32[]', space=smem, size = 0x4, offset = 0x4, fixed_abs, tag = 'smem constant byte address 0x4 - core index']
  #allocation1 [shape = 'u32[72,128]{1,0:T(1,128)}', space=vmem, size = 0x9000, scoped, tag = 'internal scratch']
  #allocation2 [shape = 'f32[1]{0:T(128)S(6)}', space=smem, size = 0x200, scoped, tag = 'scoped memory for tpu_custom_call.1']
  %s0 = inlined_call_operand.vmem [shape: f32[2,2,198,4], index: 0, kind: input, shape index: {}]
  %s1 = inlined_call_operand.vmem [shape: f32[36,16], index: 1, kind: input, shape index: {}]
  %s2 = inlined_call_operand.vmem [shape: f32[1,16], index: 2, kind: input, shape index: {}]
  %s3 = inlined_call_operand.<no memory space> [shape: f32[1], index: 3, kind: input, shape index: {}]
  %s4 = inlined_call_operand.hbm [shape: f32[2,4,16,64], index: 4, kind: output, shape index: {}]
  %s5 = sld [smem:[#allocation0]]
  $region49: #{tpu_custom_call.1} parent=0
    _
  %s7 = ssub.s32 1, %s5
  %s8 = scalar_select 0, %s7, %s5
  %9 = sst [smem:[#allocation2]] %s3
  $region1: #{tpu_custom_call.1} parent=0
    #allocation3 [shape = 'u8[32768]{0}', space=vmem, size = 0x8000, scoped, tag = 'output window, operand 0']
    #allocation4 [shape = 's32[2]{0}', space=sflag, size = 0x8, scoped, tag = 'scoped memory for tpu_custom_call.1']
    %10 = vsyncpa [#allocation4], 0
    %s11 = scalar_lea.sflag [#allocation4], 1
    %12 = vsyncpa %s11, 0
    loop: start=0, step=1, limit=6
    $region2: #{tpu_custom_call.1} parent=1 // loop_pre_header
      _
    $region3: #{tpu_custom_call.1} parent=1 // loop_header
      %s14 = sphi 0, %s18
      %p15 = scmp.ge.s32.totalorder %s14, 6
      %s21 = sphi 0, %s33
      %s22 = sphi 0, %s29
      %s23 = sphi 0, %s21
      %s24 = sphi 0, %s22
      %s25 = sphi 0, %s23
      %s26 = sphi 0, %s24
      %s38 = sphi 0, %s40
      %s41 = sphi 0, %s38
      %s42 = sphi 0, %s41
      %s58 = sphi 0, %s42
      %s62 = sphi 0, %s62
      %s64 = sphi 0, %s62
      %s65 = sphi 0, %s64
      %s79 = sphi 0, %s65
      %s83 = sphi 0, %s83
      %s85 = sphi 0, %s83
      %s86 = sphi 0, %s85
      %s100 = sphi 0, %s86
      %s104 = sphi 0, %s104
      %s106 = sphi 0, %s104
      %s107 = sphi 0, %s106
      %s121 = sphi 0, %s107
      %s129 = sphi 0, %s131
      %s132 = sphi 0, %s129
      %s133 = sphi 0, %s132
      %s149 = sphi 0, %s133
    $region4: #{tpu_custom_call.1} parent=1 // loop_header_branch
      %17 = sbr.rel (%p15) target = $region8
    $region5: #{tpu_custom_call.1} parent=1 // loop_body
      %s19 = ssub.s32 %s14, 1
      %s20 = ssub.s32 %s14, 2
      %s27 = sadd.s32 1, %s22
      %p28 = scmp.ge.s32.totalorder %s27, 2
      %s29 = scalar_select %p28, 0, %s27
      %s30 = sadd.s32 1, %s21
      %s31 = scalar_select %p28, %s30, %s21
      %p32 = scmp.ge.s32.totalorder %s31, 2
      %s33 = scalar_select %p32, 0, %s31
      %s34 = ssub.s32 %s21, %s33
      %s35 = ssub.s32 %s22, %s29
      %s36 = sor.u32 %s34, %s35
      %p37 = scmp.eq.s32.totalorder %s36, 0
      %s39 = sadd.s32 %s38, 1
      %s40 = scalar_select %p37, %s38, %s39
      %p43 = pneg %p37
      %p44 = scmp.eq.s32.totalorder %s14, 3
      %p45 = por %p43, %p44
      %p46 = scmp.ne.s32.totalorder %s38, %s41
      %p47 = scmp.eq.s32.totalorder %s14, 0
      %p48 = por %p46, %p47
      %p49 = scmp.ne.s32.totalorder %s38, %s41
      %p50 = scmp.eq.s32.totalorder %s19, 3
      %p51 = por %p49, %p50
      %p52 = scmp.ne.s32.totalorder %s41, %s42
      %p53 = scmp.eq.s32.totalorder %s19, 0
      %p54 = por %p52, %p53
      %p55 = scmp.ne.s32.totalorder %s41, %s42
      %p56 = scmp.eq.s32.totalorder %s20, 3
      %p57 = por %p55, %p56
      %p59 = scmp.ne.s32.totalorder %s42, %s58
      %p60 = scmp.eq.s32.totalorder %s20, 0
      %p61 = por %p59, %p60
      %s63 = sadd.s32 %s62, 1
      %p66 = scmp.eq.s32.totalorder %s14, 3
      %p67 = scmp.ne.s32.totalorder %s62, %s64
      %p68 = scmp.eq.s32.totalorder %s14, 0
      %p69 = por %p67, %p68
      %p70 = scmp.ne.s32.totalorder %s62, %s64
      %p71 = scmp.eq.s32.totalorder %s19, 3
      %p72 = por %p70, %p71
      %p73 = scmp.ne.s32.totalorder %s64, %s65
      %p74 = scmp.eq.s32.totalorder %s19, 0
      %p75 = por %p73, %p74
      %p76 = scmp.ne.s32.totalorder %s64, %s65
      %p77 = scmp.eq.s32.totalorder %s20, 3
      %p78 = por %p76, %p77
      %p80 = scmp.ne.s32.totalorder %s65, %s79
      %p81 = scmp.eq.s32.totalorder %s20, 0
      %p82 = por %p80, %p81
      %s84 = sadd.s32 %s83, 1
      %p87 = scmp.eq.s32.totalorder %s14, 3
      %p88 = scmp.ne.s32.totalorder %s83, %s85
      %p89 = scmp.eq.s32.totalorder %s14, 0
      %p90 = por %p88, %p89
      %p91 = scmp.ne.s32.totalorder %s83, %s85
      %p92 = scmp.eq.s32.totalorder %s19, 3
      %p93 = por %p91, %p92
      %p94 = scmp.ne.s32.totalorder %s85, %s86
      %p95 = scmp.eq.s32.totalorder %s19, 0
      %p96 = por %p94, %p95
      %p97 = scmp.ne.s32.totalorder %s85, %s86
      %p98 = scmp.eq.s32.totalorder %s20, 3
      %p99 = por %p97, %p98
      %p101 = scmp.ne.s32.totalorder %s86, %s100
      %p102 = scmp.eq.s32.totalorder %s20, 0
      %p103 = por %p101, %p102
      %s105 = sadd.s32 %s104, 1
      %p108 = scmp.eq.s32.totalorder %s14, 3
      %p109 = scmp.ne.s32.totalorder %s104, %s106
      %p110 = scmp.eq.s32.totalorder %s14, 0
      %p111 = por %p109, %p110
      %p112 = scmp.ne.s32.totalorder %s104, %s106
      %p113 = scmp.eq.s32.totalorder %s19, 3
      %p114 = por %p112, %p113
      %p115 = scmp.ne.s32.totalorder %s106, %s107
      %p116 = scmp.eq.s32.totalorder %s19, 0
      %p117 = por %p115, %p116
      %p118 = scmp.ne.s32.totalorder %s106, %s107
      %p119 = scmp.eq.s32.totalorder %s20, 3
      %p120 = por %p118, %p119
      %p122 = scmp.ne.s32.totalorder %s107, %s121
      %p123 = scmp.eq.s32.totalorder %s20, 0
      %p124 = por %p122, %p123
      %s125 = ssub.s32 %s21, %s33
      %s126 = ssub.s32 %s22, %s29
      %s127 = sor.u32 %s125, %s126
      %p128 = scmp.eq.s32.totalorder %s127, 0
      %s130 = sadd.s32 %s129, 1
      %s131 = scalar_select %p128, %s129, %s130
      %p134 = pneg %p128
      %p135 = scmp.eq.s32.totalorder %s14, 3
      %p136 = por %p134, %p135
      %p137 = scmp.ne.s32.totalorder %s129, %s132
      %p138 = scmp.eq.s32.totalorder %s14, 0
      %p139 = por %p137, %p138
      %p140 = scmp.ne.s32.totalorder %s129, %s132
      %p141 = scmp.eq.s32.totalorder %s19, 3
      %p142 = por %p140, %p141
      %p143 = scmp.ne.s32.totalorder %s132, %s133
      %p144 = scmp.eq.s32.totalorder %s19, 0
      %p145 = por %p143, %p144
      %p146 = scmp.ne.s32.totalorder %s132, %s133
      %p147 = scmp.eq.s32.totalorder %s20, 3
      %p148 = por %p146, %p147
      %p150 = scmp.ne.s32.totalorder %s133, %s149
      %p151 = scmp.eq.s32.totalorder %s20, 0
      %p152 = por %p150, %p151
      %p153 = scmp.le.s32.totalorder 1, %s14
      %p154 = scmp.lt.s32.totalorder %s14, 5
      %p155 = pnand %p153, %p154
      %p156 = pneg %p155
      // Predicated region
      $region9: #{tpu_custom_call.1} parent=5 // pred_check
        _
      $region10: #{tpu_custom_call.1} parent=5 // pred_check_branch
        %158 = sbr.rel (%p155) target = $region12
      $region11: #{tpu_custom_call.1} parent=5 // pred_region
        %s159 = ssub.s32 %s14, 1
        // Predicated region
        $region13: #{tpu_custom_call.1} parent=11 // pred_check
          %p160 = pneg %p75
        $region14: #{tpu_custom_call.1} parent=11 // pred_check_branch
          %162 = sbr.rel (%p160) target = $region16
        $region15: #{tpu_custom_call.1} parent=11 // pred_region
          _
        $region16: #{tpu_custom_call.1} parent=11 // pred_fallthru
          _
        // Predicated region
        $region17: #{tpu_custom_call.1} parent=11 // pred_check
          %p163 = pneg %p96
        $region18: #{tpu_custom_call.1} parent=11 // pred_check_branch
          %165 = sbr.rel (%p163) target = $region20
        $region19: #{tpu_custom_call.1} parent=11 // pred_region
          _
        $region20: #{tpu_custom_call.1} parent=11 // pred_fallthru
          _
        // Predicated region
        $region21: #{tpu_custom_call.1} parent=11 // pred_check
          %p166 = pneg %p117
        $region22: #{tpu_custom_call.1} parent=11 // pred_check_branch
          %168 = sbr.rel (%p166) target = $region24
        $region23: #{tpu_custom_call.1} parent=11 // pred_region
          _
        $region24: #{tpu_custom_call.1} parent=11 // pred_fallthru
          _
      $region12: #{tpu_custom_call.1} parent=5 // pred_fallthru
        _
      %p169 = scmp.lt.s32.totalorder %s14, 4
      // Predicated region
      $region25: #{tpu_custom_call.1} parent=5 // pred_check
        %p170 = pneg %p169
      $region26: #{tpu_custom_call.1} parent=5 // pred_check_branch
        %172 = sbr.rel (%p170) target = $region28
      $region27: #{tpu_custom_call.1} parent=5 // pred_region
        // Predicated region
        $region29: #{tpu_custom_call.1} parent=27 // pred_check
          %p173 = pneg %p48
        $region30: #{tpu_custom_call.1} parent=27 // pred_check_branch
          %175 = sbr.rel (%p173) target = $region32
        $region31: #{tpu_custom_call.1} parent=27 // pred_region
          %p176 = scmp.lt.s32.totalorder %s21, 1
          %s177 = scalar_select %p176, %s21, 1
          %p178 = scmp.lt.s32.totalorder %s22, 1
          %s179 = scalar_select %p178, %s22, 1
          %s180 = smul.addr %s179, 25
          %s181 = smul.addr %s177, 50
          %s182 = sadd.s32 %s180, %s181
          %s183 = smul.addr %s182, 8
          %s184 = scalar_lea.vmem %s0, %s183
        $region32: #{tpu_custom_call.1} parent=27 // pred_fallthru
          _
      $region28: #{tpu_custom_call.1} parent=5 // pred_fallthru
        _
      %p185 = scmp.le.s32.totalorder 1, %s14
      %p186 = scmp.lt.s32.totalorder %s14, 5
      %p187 = pnand %p185, %p186
      %p188 = pneg %p187
      // Predicated region
      $region33: #{tpu_custom_call.1} parent=5 // pred_check
        _
      $region34: #{tpu_custom_call.1} parent=5 // pred_check_branch
        %190 = sbr.rel (%p187) target = $region36
      $region35: #{tpu_custom_call.1} parent=5 // pred_region
        %s191 = ssub.s32 %s14, 1
        %p192 = scmp.lt.s32.totalorder %s23, 1
        %s193 = scalar_select %p192, %s23, 1
        %p194 = scmp.lt.s32.totalorder %s24, 1
        %s195 = scalar_select %p194, %s24, 1
        %s196 = smul.addr %s195, 25
        %s197 = smul.addr %s193, 50
        %s198 = sadd.s32 %s196, %s197
        %s199 = smul.addr %s198, 8
        %s200 = scalar_lea.vmem %s0, %s199
        %p201 = pneg %p54
        %p202 = pneg %p51
        %p203 = pneg %p75
        %p204 = pneg %p72
        %p205 = pneg %p96
        %p206 = pneg %p93
        %p207 = pneg %p117
        %p208 = pneg %p114
        %p209 = pneg %p145
        %p210 = pneg %p142
        %s211 = sand.u32 %s132, 1
        %s212 = scalar_lea.sflag [#allocation4], %s211
        %s213 = sand.u32 %s132, 1
        %s214 = smul.addr %s213, 32
        %s215 = scalar_lea.vmem [#allocation3], %s214
        %p216 = scmp.lt.s32.totalorder %s23, 1
        %s217 = scalar_select %p216, %s23, 1
        %p218 = scmp.lt.s32.totalorder %s24, 1
        %s219 = scalar_select %p218, %s24, 1
        %s220 = smul.addr %s219, 25
        %s221 = smul.addr %s217, 50
        %s222 = sadd.s32 %s220, %s221
        %s223 = smul.addr %s222, 8
        %s224 = scalar_lea.vmem %s0, %s223
        %v225 = vld [vmem:[%s224] sm:$0xff]
        %v226 = vld [vmem:[%s224 + $0x8] sm:$0xff]
        %v227 = vld [vmem:[%s224 + $0x10] sm:$0xff]
        %v228 = vld [vmem:[%s224 + $0x18] sm:$0xff]
        %v229 = vld [vmem:[%s224 + $0x20] sm:$0xff]
        %v230 = vld [vmem:[%s224 + $0x28] sm:$0xff]
        %v231 = vld [vmem:[%s224 + $0x30] sm:$0xff]
        %v232 = vld [vmem:[%s224 + $0x38] sm:$0xff]
        %v233 = vld [vmem:[%s224 + $0x40] sm:$0xff]
        %v234 = vld [vmem:[%s224 + $0x48] sm:$0xff]
        %v235 = vld [vmem:[%s224 + $0x50] sm:$0xff]
        %v236 = vld [vmem:[%s224 + $0x58] sm:$0xff]
        %v237 = vld [vmem:[%s224 + $0x60] sm:$0xff]
        %v238 = vld [vmem:[%s224 + $0x68] sm:$0xff]
        %v239 = vld [vmem:[%s224 + $0x70] sm:$0xff]
        %v240 = vld [vmem:[%s224 + $0x78] sm:$0xff]
        %v241 = vld [vmem:[%s224 + $0x80] sm:$0xff]
        %v242 = vld [vmem:[%s224 + $0x88] sm:$0xff]
        %v243 = vld [vmem:[%s224 + $0x1] sm:$0xff]
        %v244 = vld [vmem:[%s224 + $0x9] sm:$0xff]
        %v245 = vld [vmem:[%s224 + $0x11] sm:$0xff]
        %v246 = vld [vmem:[%s224 + $0x19] sm:$0xff]
        %v247 = vld [vmem:[%s224 + $0x21] sm:$0xff]
        %v248 = vld [vmem:[%s224 + $0x29] sm:$0xff]
        %v249 = vld [vmem:[%s224 + $0x31] sm:$0xff]
        %v250 = vld [vmem:[%s224 + $0x39] sm:$0xff]
        %v251 = vld [vmem:[%s224 + $0x41] sm:$0xff]
        %v252 = vld [vmem:[%s224 + $0x49] sm:$0xff]
        %v253 = vld [vmem:[%s224 + $0x51] sm:$0xff]
        %v254 = vld [vmem:[%s224 + $0x59] sm:$0xff]
        %v255 = vld [vmem:[%s224 + $0x61] sm:$0xff]
        %v256 = vld [vmem:[%s224 + $0x69] sm:$0xff]
        %v257 = vld [vmem:[%s224 + $0x71] sm:$0xff]
        %v258 = vld [vmem:[%s224 + $0x79] sm:$0xff]
        %v259 = vld [vmem:[%s224 + $0x81] sm:$0xff]
        %v260 = vld [vmem:[%s224 + $0x89] sm:$0xff]
        %v261 = vld [vmem:[%s224 + $0x2] sm:$0xff]
        %v262 = vld [vmem:[%s224 + $0xa] sm:$0xff]
        %v263 = vld [vmem:[%s224 + $0x12] sm:$0xff]
        %v264 = vld [vmem:[%s224 + $0x1a] sm:$0xff]
        %v265 = vld [vmem:[%s224 + $0x22] sm:$0xff]
        %v266 = vld [vmem:[%s224 + $0x2a] sm:$0xff]
        %v267 = vld [vmem:[%s224 + $0x32] sm:$0xff]
        %v268 = vld [vmem:[%s224 + $0x3a] sm:$0xff]
        %v269 = vld [vmem:[%s224 + $0x42] sm:$0xff]
        %v270 = vld [vmem:[%s224 + $0x4a] sm:$0xff]
        %v271 = vld [vmem:[%s224 + $0x52] sm:$0xff]
        %v272 = vld [vmem:[%s224 + $0x5a] sm:$0xff]
        %v273 = vld [vmem:[%s224 + $0x62] sm:$0xff]
        %v274 = vld [vmem:[%s224 + $0x6a] sm:$0xff]
        %v275 = vld [vmem:[%s224 + $0x72] sm:$0xff]
        %v276 = vld [vmem:[%s224 + $0x7a] sm:$0xff]
        %v277 = vld [vmem:[%s224 + $0x82] sm:$0xff]
        %v278 = vld [vmem:[%s224 + $0x8a] sm:$0xff]
        %v279 = vld [vmem:[%s224 + $0x92] sm:$0xff]
        %v280 = vld [vmem:[%s224 + $0x9a] sm:$0xff]
        %v281 = vld [vmem:[%s224 + $0x13] sm:$0xff]
        %v282 = vld [vmem:[%s224 + $0x1b] sm:$0xff]
        %v283 = vld [vmem:[%s224 + $0x23] sm:$0xff]
        %v284 = vld [vmem:[%s224 + $0x2b] sm:$0xff]
        %v285 = vld [vmem:[%s224 + $0x33] sm:$0xff]
        %v286 = vld [vmem:[%s224 + $0x3b] sm:$0xff]
        %v287 = vld [vmem:[%s224 + $0x43] sm:$0xff]
        %v288 = vld [vmem:[%s224 + $0x4b] sm:$0xff]
        %v289 = vld [vmem:[%s224 + $0x53] sm:$0xff]
        %v290 = vld [vmem:[%s224 + $0x5b] sm:$0xff]
        %v291 = vld [vmem:[%s224 + $0x63] sm:$0xff]
        %v292 = vld [vmem:[%s224 + $0x6b] sm:$0xff]
        %v293 = vld [vmem:[%s224 + $0x73] sm:$0xff]
        %v294 = vld [vmem:[%s224 + $0x7b] sm:$0xff]
        %v295 = vld [vmem:[%s224 + $0x83] sm:$0xff]
        %v296 = vld [vmem:[%s224 + $0x8b] sm:$0xff]
        %v297 = vld [vmem:[%s224 + $0x93] sm:$0xff]
        %v298 = vld [vmem:[%s224 + $0x9b] sm:$0xff]
        %v299 = vld [vmem:[%s224 + $0x14] sm:$0xff]
        %v300 = vld [vmem:[%s224 + $0x1c] sm:$0xff]
        %v301 = vld [vmem:[%s224 + $0x24] sm:$0xff]
        %v302 = vld [vmem:[%s224 + $0x2c] sm:$0xff]
        %v303 = vld [vmem:[%s224 + $0x34] sm:$0xff]
        %v304 = vld [vmem:[%s224 + $0x3c] sm:$0xff]
        %v305 = vld [vmem:[%s224 + $0x44] sm:$0xff]
        %v306 = vld [vmem:[%s224 + $0x4c] sm:$0xff]
        %v307 = vld [vmem:[%s224 + $0x54] sm:$0xff]
        %v308 = vld [vmem:[%s224 + $0x5c] sm:$0xff]
        %v309 = vld [vmem:[%s224 + $0x64] sm:$0xff]
        %v310 = vld [vmem:[%s224 + $0x6c] sm:$0xff]
        %v311 = vld [vmem:[%s224 + $0x74] sm:$0xff]
        %v312 = vld [vmem:[%s224 + $0x7c] sm:$0xff]
        %v313 = vld [vmem:[%s224 + $0x84] sm:$0xff]
        %v314 = vld [vmem:[%s224 + $0x8c] sm:$0xff]
        %v315 = vld [vmem:[%s224 + $0x94] sm:$0xff]
        %v316 = vld [vmem:[%s224 + $0x9c] sm:$0xff]
        %v317 = vld [vmem:[%s224 + $0xa4] sm:$0xff]
        %v318 = vld [vmem:[%s224 + $0xac] sm:$0xff]
        %v319 = vld [vmem:[%s224 + $0x25] sm:$0xff]
        %v320 = vld [vmem:[%s224 + $0x2d] sm:$0xff]
        %v321 = vld [vmem:[%s224 + $0x35] sm:$0xff]
        %v322 = vld [vmem:[%s224 + $0x3d] sm:$0xff]
        %v323 = vld [vmem:[%s224 + $0x45] sm:$0xff]
        %v324 = vld [vmem:[%s224 + $0x4d] sm:$0xff]
        %v325 = vld [vmem:[%s224 + $0x55] sm:$0xff]
        %v326 = vld [vmem:[%s224 + $0x5d] sm:$0xff]
        %v327 = vld [vmem:[%s224 + $0x65] sm:$0xff]
        %v328 = vld [vmem:[%s224 + $0x6d] sm:$0xff]
        %v329 = vld [vmem:[%s224 + $0x75] sm:$0xff]
        %v330 = vld [vmem:[%s224 + $0x7d] sm:$0xff]
        %v331 = vld [vmem:[%s224 + $0x85] sm:$0xff]
        %v332 = vld [vmem:[%s224 + $0x8d] sm:$0xff]
        %v333 = vld [vmem:[%s224 + $0x95] sm:$0xff]
        %v334 = vld [vmem:[%s224 + $0x9d] sm:$0xff]
        %v335 = vld [vmem:[%s224 + $0xa5] sm:$0xff]
        %v336 = vld [vmem:[%s224 + $0xad] sm:$0xff]
        %v337 = vld [vmem:[%s224 + $0x26] sm:$0xff]
        %v338 = vld [vmem:[%s224 + $0x2e] sm:$0xff]
        %v339 = vld [vmem:[%s224 + $0x36] sm:$0xff]
        %v340 = vld [vmem:[%s224 + $0x3e] sm:$0xff]
        %v341 = vld [vmem:[%s224 + $0x46] sm:$0xff]
        %v342 = vld [vmem:[%s224 + $0x4e] sm:$0xff]
        %v343 = vld [vmem:[%s224 + $0x56] sm:$0xff]
        %v344 = vld [vmem:[%s224 + $0x5e] sm:$0xff]
        %v345 = vld [vmem:[%s224 + $0x66] sm:$0xff]
        %v346 = vld [vmem:[%s224 + $0x6e] sm:$0xff]
        %v347 = vld [vmem:[%s224 + $0x76] sm:$0xff]
        %v348 = vld [vmem:[%s224 + $0x7e] sm:$0xff]
        %v349 = vld [vmem:[%s224 + $0x86] sm:$0xff]
        %v350 = vld [vmem:[%s224 + $0x8e] sm:$0xff]
        %v351 = vld [vmem:[%s224 + $0x96] sm:$0xff]
        %v352 = vld [vmem:[%s224 + $0x9e] sm:$0xff]
        %v353 = vld [vmem:[%s224 + $0xa6] sm:$0xff]
        %v354 = vld [vmem:[%s224 + $0xae] sm:$0xff]
        %373 = vrot.lane.b32.xlu0 %v243, 4
        %v374 = vpop.permute.xlu0 %373
        %375 = vrot.lane.b32.xlu0 %v244, 4
        %v376 = vpop.permute.xlu0 %375
        %377 = vrot.lane.b32.xlu0 %v245, 4
        %v378 = vpop.permute.xlu0 %377
        %379 = vrot.lane.b32.xlu0 %v246, 4
        %v380 = vpop.permute.xlu0 %379
        %381 = vrot.lane.b32.xlu0 %v247, 4
        %v382 = vpop.permute.xlu0 %381
        %383 = vrot.lane.b32.xlu0 %v248, 4
        %v384 = vpop.permute.xlu0 %383
        %385 = vrot.lane.b32.xlu0 %v249, 4
        %v386 = vpop.permute.xlu0 %385
        %387 = vrot.lane.b32.xlu0 %v250, 4
        %v388 = vpop.permute.xlu0 %387
        %389 = vrot.lane.b32.xlu0 %v251, 4
        %v390 = vpop.permute.xlu0 %389
        %391 = vrot.lane.b32.xlu0 %v252, 4
        %v392 = vpop.permute.xlu0 %391
        %393 = vrot.lane.b32.xlu0 %v253, 4
        %v394 = vpop.permute.xlu0 %393
        %395 = vrot.lane.b32.xlu0 %v254, 4
        %v396 = vpop.permute.xlu0 %395
        %397 = vrot.lane.b32.xlu0 %v255, 4
        %v398 = vpop.permute.xlu0 %397
        %399 = vrot.lane.b32.xlu0 %v256, 4
        %v400 = vpop.permute.xlu0 %399
        %401 = vrot.lane.b32.xlu0 %v257, 4
        %v402 = vpop.permute.xlu0 %401
        %403 = vrot.lane.b32.xlu0 %v258, 4
        %v404 = vpop.permute.xlu0 %403
        %405 = vrot.lane.b32.xlu0 %v259, 4
        %v406 = vpop.permute.xlu0 %405
        %407 = vrot.lane.b32.xlu0 %v260, 4
        %v408 = vpop.permute.xlu0 %407
        %445 = vrot.lane.b32.xlu0 %v261, 8
        %v446 = vpop.permute.xlu0 %445
        %447 = vrot.lane.b32.xlu0 %v262, 8
        %v448 = vpop.permute.xlu0 %447
        %449 = vrot.lane.b32.xlu0 %v263, 8
        %v450 = vpop.permute.xlu0 %449
        %451 = vrot.lane.b32.xlu0 %v264, 8
        %v452 = vpop.permute.xlu0 %451
        %453 = vrot.lane.b32.xlu0 %v265, 8
        %v454 = vpop.permute.xlu0 %453
        %455 = vrot.lane.b32.xlu0 %v266, 8
        %v456 = vpop.permute.xlu0 %455
        %457 = vrot.lane.b32.xlu0 %v267, 8
        %v458 = vpop.permute.xlu0 %457
        %459 = vrot.lane.b32.xlu0 %v268, 8
        %v460 = vpop.permute.xlu0 %459
        %461 = vrot.lane.b32.xlu0 %v269, 8
        %v462 = vpop.permute.xlu0 %461
        %463 = vrot.lane.b32.xlu0 %v270, 8
        %v464 = vpop.permute.xlu0 %463
        %465 = vrot.lane.b32.xlu0 %v271, 8
        %v466 = vpop.permute.xlu0 %465
        %467 = vrot.lane.b32.xlu0 %v272, 8
        %v468 = vpop.permute.xlu0 %467
        %469 = vrot.lane.b32.xlu0 %v273, 8
        %v470 = vpop.permute.xlu0 %469
        %471 = vrot.lane.b32.xlu0 %v274, 8
        %v472 = vpop.permute.xlu0 %471
        %473 = vrot.lane.b32.xlu0 %v275, 8
        %v474 = vpop.permute.xlu0 %473
        %475 = vrot.lane.b32.xlu0 %v276, 8
        %v476 = vpop.permute.xlu0 %475
        %477 = vrot.lane.b32.xlu0 %v277, 8
        %v478 = vpop.permute.xlu0 %477
        %479 = vrot.lane.b32.xlu0 %v278, 8
        %v480 = vpop.permute.xlu0 %479
        %501 = vrot.lane.b32.xlu0 %v263, 12
        %v502 = vpop.permute.xlu0 %501
        %503 = vrot.lane.b32.xlu0 %v264, 12
        %v504 = vpop.permute.xlu0 %503
        %505 = vrot.lane.b32.xlu0 %v265, 12
        %v506 = vpop.permute.xlu0 %505
        %507 = vrot.lane.b32.xlu0 %v266, 12
        %v508 = vpop.permute.xlu0 %507
        %509 = vrot.lane.b32.xlu0 %v267, 12
        %v510 = vpop.permute.xlu0 %509
        %511 = vrot.lane.b32.xlu0 %v268, 12
        %v512 = vpop.permute.xlu0 %511
        %513 = vrot.lane.b32.xlu0 %v269, 12
        %v514 = vpop.permute.xlu0 %513
        %515 = vrot.lane.b32.xlu0 %v270, 12
        %v516 = vpop.permute.xlu0 %515
        %517 = vrot.lane.b32.xlu0 %v271, 12
        %v518 = vpop.permute.xlu0 %517
        %519 = vrot.lane.b32.xlu0 %v272, 12
        %v520 = vpop.permute.xlu0 %519
        %521 = vrot.lane.b32.xlu0 %v273, 12
        %v522 = vpop.permute.xlu0 %521
        %523 = vrot.lane.b32.xlu0 %v274, 12
        %v524 = vpop.permute.xlu0 %523
        %525 = vrot.lane.b32.xlu0 %v275, 12
        %v526 = vpop.permute.xlu0 %525
        %527 = vrot.lane.b32.xlu0 %v276, 12
        %v528 = vpop.permute.xlu0 %527
        %529 = vrot.lane.b32.xlu0 %v277, 12
        %v530 = vpop.permute.xlu0 %529
        %531 = vrot.lane.b32.xlu0 %v278, 12
        %v532 = vpop.permute.xlu0 %531
        %533 = vrot.lane.b32.xlu0 %v279, 12
        %v534 = vpop.permute.xlu0 %533
        %535 = vrot.lane.b32.xlu0 %v280, 12
        %v536 = vpop.permute.xlu0 %535
        %573 = vrot.lane.b32.xlu0 %v281, 16
        %v574 = vpop.permute.xlu0 %573
        %575 = vrot.lane.b32.xlu0 %v282, 16
        %v576 = vpop.permute.xlu0 %575
        %577 = vrot.lane.b32.xlu0 %v283, 16
        %v578 = vpop.permute.xlu0 %577
        %579 = vrot.lane.b32.xlu0 %v284, 16
        %v580 = vpop.permute.xlu0 %579
        %581 = vrot.lane.b32.xlu0 %v285, 16
        %v582 = vpop.permute.xlu0 %581
        %583 = vrot.lane.b32.xlu0 %v286, 16
        %v584 = vpop.permute.xlu0 %583
        %585 = vrot.lane.b32.xlu0 %v287, 16
        %v586 = vpop.permute.xlu0 %585
        %587 = vrot.lane.b32.xlu0 %v288, 16
        %v588 = vpop.permute.xlu0 %587
        %589 = vrot.lane.b32.xlu0 %v289, 16
        %v590 = vpop.permute.xlu0 %589
        %591 = vrot.lane.b32.xlu0 %v290, 16
        %v592 = vpop.permute.xlu0 %591
        %593 = vrot.lane.b32.xlu0 %v291, 16
        %v594 = vpop.permute.xlu0 %593
        %595 = vrot.lane.b32.xlu0 %v292, 16
        %v596 = vpop.permute.xlu0 %595
        %597 = vrot.lane.b32.xlu0 %v293, 16
        %v598 = vpop.permute.xlu0 %597
        %599 = vrot.lane.b32.xlu0 %v294, 16
        %v600 = vpop.permute.xlu0 %599
        %601 = vrot.lane.b32.xlu0 %v295, 16
        %v602 = vpop.permute.xlu0 %601
        %603 = vrot.lane.b32.xlu0 %v296, 16
        %v604 = vpop.permute.xlu0 %603
        %605 = vrot.lane.b32.xlu0 %v297, 16
        %v606 = vpop.permute.xlu0 %605
        %607 = vrot.lane.b32.xlu0 %v298, 16
        %v608 = vpop.permute.xlu0 %607
        %645 = vrot.lane.b32.xlu0 %v299, 20
        %v646 = vpop.permute.xlu0 %645
        %647 = vrot.lane.b32.xlu0 %v300, 20
        %v648 = vpop.permute.xlu0 %647
        %649 = vrot.lane.b32.xlu0 %v301, 20
        %v650 = vpop.permute.xlu0 %649
        %651 = vrot.lane.b32.xlu0 %v302, 20
        %v652 = vpop.permute.xlu0 %651
        %653 = vrot.lane.b32.xlu0 %v303, 20
        %v654 = vpop.permute.xlu0 %653
        %655 = vrot.lane.b32.xlu0 %v304, 20
        %v656 = vpop.permute.xlu0 %655
        %657 = vrot.lane.b32.xlu0 %v305, 20
        %v658 = vpop.permute.xlu0 %657
        %659 = vrot.lane.b32.xlu0 %v306, 20
        %v660 = vpop.permute.xlu0 %659
        %661 = vrot.lane.b32.xlu0 %v307, 20
        %v662 = vpop.permute.xlu0 %661
        %663 = vrot.lane.b32.xlu0 %v308, 20
        %v664 = vpop.permute.xlu0 %663
        %665 = vrot.lane.b32.xlu0 %v309, 20
        %v666 = vpop.permute.xlu0 %665
        %667 = vrot.lane.b32.xlu0 %v310, 20
        %v668 = vpop.permute.xlu0 %667
        %669 = vrot.lane.b32.xlu0 %v311, 20
        %v670 = vpop.permute.xlu0 %669
        %671 = vrot.lane.b32.xlu0 %v312, 20
        %v672 = vpop.permute.xlu0 %671
        %673 = vrot.lane.b32.xlu0 %v313, 20
        %v674 = vpop.permute.xlu0 %673
        %675 = vrot.lane.b32.xlu0 %v314, 20
        %v676 = vpop.permute.xlu0 %675
        %677 = vrot.lane.b32.xlu0 %v315, 20
        %v678 = vpop.permute.xlu0 %677
        %679 = vrot.lane.b32.xlu0 %v316, 20
        %v680 = vpop.permute.xlu0 %679
        %701 = vrot.lane.b32.xlu0 %v301, 24
        %v702 = vpop.permute.xlu0 %701
        %703 = vrot.lane.b32.xlu0 %v302, 24
        %v704 = vpop.permute.xlu0 %703
        %705 = vrot.lane.b32.xlu0 %v303, 24
        %v706 = vpop.permute.xlu0 %705
        %707 = vrot.lane.b32.xlu0 %v304, 24
        %v708 = vpop.permute.xlu0 %707
        %709 = vrot.lane.b32.xlu0 %v305, 24
        %v710 = vpop.permute.xlu0 %709
        %711 = vrot.lane.b32.xlu0 %v306, 24
        %v712 = vpop.permute.xlu0 %711
        %713 = vrot.lane.b32.xlu0 %v307, 24
        %v714 = vpop.permute.xlu0 %713
        %715 = vrot.lane.b32.xlu0 %v308, 24
        %v716 = vpop.permute.xlu0 %715
        %717 = vrot.lane.b32.xlu0 %v309, 24
        %v718 = vpop.permute.xlu0 %717
        %719 = vrot.lane.b32.xlu0 %v310, 24
        %v720 = vpop.permute.xlu0 %719
        %721 = vrot.lane.b32.xlu0 %v311, 24
        %v722 = vpop.permute.xlu0 %721
        %723 = vrot.lane.b32.xlu0 %v312, 24
        %v724 = vpop.permute.xlu0 %723
        %725 = vrot.lane.b32.xlu0 %v313, 24
        %v726 = vpop.permute.xlu0 %725
        %727 = vrot.lane.b32.xlu0 %v314, 24
        %v728 = vpop.permute.xlu0 %727
        %729 = vrot.lane.b32.xlu0 %v315, 24
        %v730 = vpop.permute.xlu0 %729
        %731 = vrot.lane.b32.xlu0 %v316, 24
        %v732 = vpop.permute.xlu0 %731
        %733 = vrot.lane.b32.xlu0 %v317, 24
        %v734 = vpop.permute.xlu0 %733
        %735 = vrot.lane.b32.xlu0 %v318, 24
        %v736 = vpop.permute.xlu0 %735
        %773 = vrot.lane.b32.xlu0 %v319, 28
        %v774 = vpop.permute.xlu0 %773
        %775 = vrot.lane.b32.xlu0 %v320, 28
        %v776 = vpop.permute.xlu0 %775
        %777 = vrot.lane.b32.xlu0 %v321, 28
        %v778 = vpop.permute.xlu0 %777
        %779 = vrot.lane.b32.xlu0 %v322, 28
        %v780 = vpop.permute.xlu0 %779
        %781 = vrot.lane.b32.xlu0 %v323, 28
        %v782 = vpop.permute.xlu0 %781
        %783 = vrot.lane.b32.xlu0 %v324, 28
        %v784 = vpop.permute.xlu0 %783
        %785 = vrot.lane.b32.xlu0 %v325, 28
        %v786 = vpop.permute.xlu0 %785
        %787 = vrot.lane.b32.xlu0 %v326, 28
        %v788 = vpop.permute.xlu0 %787
        %789 = vrot.lane.b32.xlu0 %v327, 28
        %v790 = vpop.permute.xlu0 %789
        %791 = vrot.lane.b32.xlu0 %v328, 28
        %v792 = vpop.permute.xlu0 %791
        %793 = vrot.lane.b32.xlu0 %v329, 28
        %v794 = vpop.permute.xlu0 %793
        %795 = vrot.lane.b32.xlu0 %v330, 28
        %v796 = vpop.permute.xlu0 %795
        %797 = vrot.lane.b32.xlu0 %v331, 28
        %v798 = vpop.permute.xlu0 %797
        %799 = vrot.lane.b32.xlu0 %v332, 28
        %v800 = vpop.permute.xlu0 %799
        %801 = vrot.lane.b32.xlu0 %v333, 28
        %v802 = vpop.permute.xlu0 %801
        %803 = vrot.lane.b32.xlu0 %v334, 28
        %v804 = vpop.permute.xlu0 %803
        %805 = vrot.lane.b32.xlu0 %v335, 28
        %v806 = vpop.permute.xlu0 %805
        %807 = vrot.lane.b32.xlu0 %v336, 28
        %v808 = vpop.permute.xlu0 %807
        %845 = vrot.lane.b32.xlu0 %v337, 32
        %v846 = vpop.permute.xlu0 %845
        %847 = vrot.lane.b32.xlu0 %v338, 32
        %v848 = vpop.permute.xlu0 %847
        %849 = vrot.lane.b32.xlu0 %v339, 32
        %v850 = vpop.permute.xlu0 %849
        %851 = vrot.lane.b32.xlu0 %v340, 32
        %v852 = vpop.permute.xlu0 %851
        %853 = vrot.lane.b32.xlu0 %v341, 32
        %v854 = vpop.permute.xlu0 %853
        %855 = vrot.lane.b32.xlu0 %v342, 32
        %v856 = vpop.permute.xlu0 %855
        %857 = vrot.lane.b32.xlu0 %v343, 32
        %v858 = vpop.permute.xlu0 %857
        %859 = vrot.lane.b32.xlu0 %v344, 32
        %v860 = vpop.permute.xlu0 %859
        %861 = vrot.lane.b32.xlu0 %v345, 32
        %v862 = vpop.permute.xlu0 %861
        %863 = vrot.lane.b32.xlu0 %v346, 32
        %v864 = vpop.permute.xlu0 %863
        %865 = vrot.lane.b32.xlu0 %v347, 32
        %v866 = vpop.permute.xlu0 %865
        %867 = vrot.lane.b32.xlu0 %v348, 32
        %v868 = vpop.permute.xlu0 %867
        %869 = vrot.lane.b32.xlu0 %v349, 32
        %v870 = vpop.permute.xlu0 %869
        %871 = vrot.lane.b32.xlu0 %v350, 32
        %v872 = vpop.permute.xlu0 %871
        %873 = vrot.lane.b32.xlu0 %v351, 32
        %v874 = vpop.permute.xlu0 %873
        %875 = vrot.lane.b32.xlu0 %v352, 32
        %v876 = vpop.permute.xlu0 %875
        %877 = vrot.lane.b32.xlu0 %v353, 32
        %v878 = vpop.permute.xlu0 %877
        %879 = vrot.lane.b32.xlu0 %v354, 32
        %v880 = vpop.permute.xlu0 %879
        %vm899 = vcmask 31744
        %v900 = vsel %vm899, %v225, %v374
        %v901 = vsel %vm899, %v226, %v376
        %v902 = vsel %vm899, %v227, %v378
        %v903 = vsel %vm899, %v228, %v380
        %v904 = vsel %vm899, %v229, %v382
        %v905 = vsel %vm899, %v230, %v384
        %v906 = vsel %vm899, %v231, %v386
        %v907 = vsel %vm899, %v232, %v388
        %v908 = vsel %vm899, %v233, %v390
        %v909 = vsel %vm899, %v234, %v392
        %v910 = vsel %vm899, %v235, %v394
        %v911 = vsel %vm899, %v236, %v396
        %v912 = vsel %vm899, %v237, %v398
        %v913 = vsel %vm899, %v238, %v400
        %v914 = vsel %vm899, %v239, %v402
        %v915 = vsel %vm899, %v240, %v404
        %v916 = vsel %vm899, %v241, %v406
        %v917 = vsel %vm899, %v242, %v408
        %vm918 = vcmask 64512
        %v919 = vsel %vm918, %v900, %v446
        %v920 = vsel %vm918, %v901, %v448
        %v921 = vsel %vm918, %v902, %v450
        %v922 = vsel %vm918, %v903, %v452
        %v923 = vsel %vm918, %v904, %v454
        %v924 = vsel %vm918, %v905, %v456
        %v925 = vsel %vm918, %v906, %v458
        %v926 = vsel %vm918, %v907, %v460
        %v927 = vsel %vm918, %v908, %v462
        %v928 = vsel %vm918, %v909, %v464
        %v929 = vsel %vm918, %v910, %v466
        %v930 = vsel %vm918, %v911, %v468
        %v931 = vsel %vm918, %v912, %v470
        %v932 = vsel %vm918, %v913, %v472
        %v933 = vsel %vm918, %v914, %v474
        %v934 = vsel %vm918, %v915, %v476
        %v935 = vsel %vm918, %v916, %v478
        %v936 = vsel %vm918, %v917, %v480
        %vm937 = vcmask 97280
        %v938 = vsel %vm937, %v919, %v502
        %v939 = vsel %vm937, %v920, %v504
        %v940 = vsel %vm937, %v921, %v506
        %v941 = vsel %vm937, %v922, %v508
        %v942 = vsel %vm937, %v923, %v510
        %v943 = vsel %vm937, %v924, %v512
        %v944 = vsel %vm937, %v925, %v514
        %v945 = vsel %vm937, %v926, %v516
        %v946 = vsel %vm937, %v927, %v518
        %v947 = vsel %vm937, %v928, %v520
        %v948 = vsel %vm937, %v929, %v522
        %v949 = vsel %vm937, %v930, %v524
        %v950 = vsel %vm937, %v931, %v526
        %v951 = vsel %vm937, %v932, %v528
        %v952 = vsel %vm937, %v933, %v530
        %v953 = vsel %vm937, %v934, %v532
        %v954 = vsel %vm937, %v935, %v534
        %v955 = vsel %vm937, %v936, %v536
        %vm956 = vcmask 130048
        %v957 = vsel %vm956, %v938, %v574
        %v958 = vsel %vm956, %v939, %v576
        %v959 = vsel %vm956, %v940, %v578
        %v960 = vsel %vm956, %v941, %v580
        %v961 = vsel %vm956, %v942, %v582
        %v962 = vsel %vm956, %v943, %v584
        %v963 = vsel %vm956, %v944, %v586
        %v964 = vsel %vm956, %v945, %v588
        %v965 = vsel %vm956, %v946, %v590
        %v966 = vsel %vm956, %v947, %v592
        %v967 = vsel %vm956, %v948, %v594
        %v968 = vsel %vm956, %v949, %v596
        %v969 = vsel %vm956, %v950, %v598
        %v970 = vsel %vm956, %v951, %v600
        %v971 = vsel %vm956, %v952, %v602
        %v972 = vsel %vm956, %v953, %v604
        %v973 = vsel %vm956, %v954, %v606
        %v974 = vsel %vm956, %v955, %v608
        %vm975 = vcmask 162816
        %v976 = vsel %vm975, %v957, %v646
        %v977 = vsel %vm975, %v958, %v648
        %v978 = vsel %vm975, %v959, %v650
        %v979 = vsel %vm975, %v960, %v652
        %v980 = vsel %vm975, %v961, %v654
        %v981 = vsel %vm975, %v962, %v656
        %v982 = vsel %vm975, %v963, %v658
        %v983 = vsel %vm975, %v964, %v660
        %v984 = vsel %vm975, %v965, %v662
        %v985 = vsel %vm975, %v966, %v664
        %v986 = vsel %vm975, %v967, %v666
        %v987 = vsel %vm975, %v968, %v668
        %v988 = vsel %vm975, %v969, %v670
        %v989 = vsel %vm975, %v970, %v672
        %v990 = vsel %vm975, %v971, %v674
        %v991 = vsel %vm975, %v972, %v676
        %v992 = vsel %vm975, %v973, %v678
        %v993 = vsel %vm975, %v974, %v680
        %vm994 = vcmask 195584
        %v995 = vsel %vm994, %v976, %v702
        %v996 = vsel %vm994, %v977, %v704
        %v997 = vsel %vm994, %v978, %v706
        %v998 = vsel %vm994, %v979, %v708
        %v999 = vsel %vm994, %v980, %v710
        %v1000 = vsel %vm994, %v981, %v712
        %v1001 = vsel %vm994, %v982, %v714
        %v1002 = vsel %vm994, %v983, %v716
        %v1003 = vsel %vm994, %v984, %v718
        %v1004 = vsel %vm994, %v985, %v720
        %v1005 = vsel %vm994, %v986, %v722
        %v1006 = vsel %vm994, %v987, %v724
        %v1007 = vsel %vm994, %v988, %v726
        %v1008 = vsel %vm994, %v989, %v728
        %v1009 = vsel %vm994, %v990, %v730
        %v1010 = vsel %vm994, %v991, %v732
        %v1011 = vsel %vm994, %v992, %v734
        %v1012 = vsel %vm994, %v993, %v736
        %vm1013 = vcmask 228352
        %v1014 = vsel %vm1013, %v995, %v774
        %v1015 = vsel %vm1013, %v996, %v776
        %v1016 = vsel %vm1013, %v997, %v778
        %v1017 = vsel %vm1013, %v998, %v780
        %v1018 = vsel %vm1013, %v999, %v782
        %v1019 = vsel %vm1013, %v1000, %v784
        %v1020 = vsel %vm1013, %v1001, %v786
        %v1021 = vsel %vm1013, %v1002, %v788
        %v1022 = vsel %vm1013, %v1003, %v790
        %v1023 = vsel %vm1013, %v1004, %v792
        %v1024 = vsel %vm1013, %v1005, %v794
        %v1025 = vsel %vm1013, %v1006, %v796
        %v1026 = vsel %vm1013, %v1007, %v798
        %v1027 = vsel %vm1013, %v1008, %v800
        %v1028 = vsel %vm1013, %v1009, %v802
        %v1029 = vsel %vm1013, %v1010, %v804
        %v1030 = vsel %vm1013, %v1011, %v806
        %v1031 = vsel %vm1013, %v1012, %v808
        %vm1032 = vcmask 261120
        %v1033 = vsel %vm1032, %v1014, %v846
        %v1034 = vsel %vm1032, %v1015, %v848
        %v1035 = vsel %vm1032, %v1016, %v850
        %v1036 = vsel %vm1032, %v1017, %v852
        %v1037 = vsel %vm1032, %v1018, %v854
        %v1038 = vsel %vm1032, %v1019, %v856
        %v1039 = vsel %vm1032, %v1020, %v858
        %v1040 = vsel %vm1032, %v1021, %v860
        %v1041 = vsel %vm1032, %v1022, %v862
        %v1042 = vsel %vm1032, %v1023, %v864
        %v1043 = vsel %vm1032, %v1024, %v866
        %v1044 = vsel %vm1032, %v1025, %v868
        %v1045 = vsel %vm1032, %v1026, %v870
        %v1046 = vsel %vm1032, %v1027, %v872
        %v1047 = vsel %vm1032, %v1028, %v874
        %v1048 = vsel %vm1032, %v1029, %v876
        %v1049 = vsel %vm1032, %v1030, %v878
        %v1050 = vsel %vm1032, %v1031, %v880
        %v1051 = vld [vmem:[%s1] sm:$0xff]
        %v1052 = vld [vmem:[%s1 + $0x8] sm:$0xff]
        %v1053 = vld [vmem:[%s1 + $0x10] sm:$0xff]
        %v1054 = vld [vmem:[%s1 + $0x18] sm:$0xff]
        %v1055 = vld [vmem:[%s1 + $0x20] sm:$0xf]
        %v1056 = vld [vmem:[%s2] sm:$0x1]
        %v1058 = vperm.slane %v1056, 0
        %vm1060 = vcmask 293888
        %v1062 = vsel %vm1060, %v1033, 0
        %v1065 = vsel %vm1060, %v1034, 0
        %v1068 = vsel %vm1060, %v1035, 0
        %v1071 = vsel %vm1060, %v1036, 0
        %v1074 = vsel %vm1060, %v1037, 0
        %v1077 = vsel %vm1060, %v1038, 0
        %v1080 = vsel %vm1060, %v1039, 0
        %v1083 = vsel %vm1060, %v1040, 0
        %v1086 = vsel %vm1060, %v1041, 0
        %v1089 = vsel %vm1060, %v1042, 0
        %v1092 = vsel %vm1060, %v1043, 0
        %v1095 = vsel %vm1060, %v1044, 0
        %v1098 = vsel %vm1060, %v1045, 0
        %v1101 = vsel %vm1060, %v1046, 0
        %v1104 = vsel %vm1060, %v1047, 0
        %v1107 = vsel %vm1060, %v1048, 0
        %v1110 = vsel %vm1060, %v1049, 0
        %v1113 = vsel %vm1060, %v1050, 0
        %vm1115 = vcmask 1043456
        %v1117 = vsel %vm1115, %v1055, 0
        %1119 = vmatpush.msra.mxu0 0.0
        %1120 = vmatpush.msra.mxu0 0.0
        %1121 = vmatpush.msra.mxu0 0.0
        %1122 = vmatpush.msra.mxu0 0.0
        %1123 = vmatpush.msra.mxu0 0.0
        %1124 = vmatpush.msra.mxu0 0.0
        %1125 = vmatpush.msra.mxu0 0.0
        %1126 = vmatpush.msra.mxu0 0.0
        %1127 = vmatpush.msra.mxu0 0.0
        %1128 = vmatpush.msra.mxu0 0.0
        %1129 = vmatpush.msra.mxu0 0.0
        %1130 = vmatpush.msra.mxu0 %v1117
        %1131 = vmatpush.msra.mxu0 %v1054
        %1132 = vmatpush.msra.mxu0 %v1053
        %1133 = vmatpush.msra.mxu0 %v1052
        %1134 = vmatpush.msra.mxu0 %v1051
        %1135 = vmatmul.f32.gmra.mxu0 %v1062
        %v1136 = vpop.f32.mrf.mxu0
        %v1137 = vadd.f32 %v1058, %v1136
        %1138 = vmatmul.f32.gmra.mxu0 %v1065
        %v1139 = vpop.f32.mrf.mxu0
        %v1140 = vadd.f32 %v1058, %v1139
        %1141 = vmatmul.f32.gmra.mxu0 %v1068
        %v1142 = vpop.f32.mrf.mxu0
        %v1143 = vadd.f32 %v1058, %v1142
        %1144 = vmatmul.f32.gmra.mxu0 %v1071
        %v1145 = vpop.f32.mrf.mxu0
        %v1146 = vadd.f32 %v1058, %v1145
        %1147 = vmatmul.f32.gmra.mxu0 %v1074
        %v1148 = vpop.f32.mrf.mxu0
        %v1149 = vadd.f32 %v1058, %v1148
        %1150 = vmatmul.f32.gmra.mxu0 %v1077
        %v1151 = vpop.f32.mrf.mxu0
        %v1152 = vadd.f32 %v1058, %v1151
        %1153 = vmatmul.f32.gmra.mxu0 %v1080
        %v1154 = vpop.f32.mrf.mxu0
        %v1155 = vadd.f32 %v1058, %v1154
        %1156 = vmatmul.f32.gmra.mxu0 %v1083
        %v1157 = vpop.f32.mrf.mxu0
        %v1158 = vadd.f32 %v1058, %v1157
        %1159 = vmatmul.f32.gmra.mxu0 %v1086
        %v1160 = vpop.f32.mrf.mxu0
        %v1161 = vadd.f32 %v1058, %v1160
        %1162 = vmatmul.f32.gmra.mxu0 %v1089
        %v1163 = vpop.f32.mrf.mxu0
        %v1164 = vadd.f32 %v1058, %v1163
        %1165 = vmatmul.f32.gmra.mxu0 %v1092
        %v1166 = vpop.f32.mrf.mxu0
        %v1167 = vadd.f32 %v1058, %v1166
        %1168 = vmatmul.f32.gmra.mxu0 %v1095
        %v1169 = vpop.f32.mrf.mxu0
        %v1170 = vadd.f32 %v1058, %v1169
        %1171 = vmatmul.f32.gmra.mxu0 %v1098
        %v1172 = vpop.f32.mrf.mxu0
        %v1173 = vadd.f32 %v1058, %v1172
        %1174 = vmatmul.f32.gmra.mxu0 %v1101
        %v1175 = vpop.f32.mrf.mxu0
        %v1176 = vadd.f32 %v1058, %v1175
        %1177 = vmatmul.f32.gmra.mxu0 %v1104
        %v1178 = vpop.f32.mrf.mxu0
        %v1179 = vadd.f32 %v1058, %v1178
        %1180 = vmatmul.f32.gmra.mxu0 %v1107
        %v1181 = vpop.f32.mrf.mxu0
        %v1182 = vadd.f32 %v1058, %v1181
        %1183 = vmatmul.f32.gmra.mxu0 %v1110
        %v1184 = vpop.f32.mrf.mxu0
        %v1185 = vadd.f32 %v1058, %v1184
        %1186 = vmatmul.f32.gmra.mxu0 %v1113
        %v1187 = vpop.f32.mrf.mxu0
        %v1188 = vadd.f32 %v1058, %v1187
        %1189 = vdwg.mxu0
        %s1190 = sld [smem:[#allocation2]]
        %vm1191 = vcmp.ge.f32.partialorder %v1137, 0.0
        %vm1192 = vcmp.ge.f32.partialorder %v1140, 0.0
        %vm1193 = vcmp.ge.f32.partialorder %v1143, 0.0
        %vm1194 = vcmp.ge.f32.partialorder %v1146, 0.0
        %vm1195 = vcmp.ge.f32.partialorder %v1149, 0.0
        %vm1196 = vcmp.ge.f32.partialorder %v1152, 0.0
        %vm1197 = vcmp.ge.f32.partialorder %v1155, 0.0
        %vm1198 = vcmp.ge.f32.partialorder %v1158, 0.0
        %vm1199 = vcmp.ge.f32.partialorder %v1161, 0.0
        %vm1200 = vcmp.ge.f32.partialorder %v1164, 0.0
        %vm1201 = vcmp.ge.f32.partialorder %v1167, 0.0
        %vm1202 = vcmp.ge.f32.partialorder %v1170, 0.0
        %vm1203 = vcmp.ge.f32.partialorder %v1173, 0.0
        %vm1204 = vcmp.ge.f32.partialorder %v1176, 0.0
        %vm1205 = vcmp.ge.f32.partialorder %v1179, 0.0
        %vm1206 = vcmp.ge.f32.partialorder %v1182, 0.0
        %vm1207 = vcmp.ge.f32.partialorder %v1185, 0.0
        %vm1208 = vcmp.ge.f32.partialorder %v1188, 0.0
        %v1209 = vstv %s1190
        %v1210 = vmul.f32 %v1209, %v1137
        %v1211 = vmul.f32 %v1209, %v1140
        %v1212 = vmul.f32 %v1209, %v1143
        %v1213 = vmul.f32 %v1209, %v1146
        %v1214 = vmul.f32 %v1209, %v1149
        %v1215 = vmul.f32 %v1209, %v1152
        %v1216 = vmul.f32 %v1209, %v1155
        %v1217 = vmul.f32 %v1209, %v1158
        %v1218 = vmul.f32 %v1209, %v1161
        %v1219 = vmul.f32 %v1209, %v1164
        %v1220 = vmul.f32 %v1209, %v1167
        %v1221 = vmul.f32 %v1209, %v1170
        %v1222 = vmul.f32 %v1209, %v1173
        %v1223 = vmul.f32 %v1209, %v1176
        %v1224 = vmul.f32 %v1209, %v1179
        %v1225 = vmul.f32 %v1209, %v1182
        %v1226 = vmul.f32 %v1209, %v1185
        %v1227 = vmul.f32 %v1209, %v1188
        %v1228 = vsel %vm1191, %v1137, %v1210
        %v1229 = vsel %vm1192, %v1140, %v1211
        %v1230 = vsel %vm1193, %v1143, %v1212
        %v1231 = vsel %vm1194, %v1146, %v1213
        %v1232 = vsel %vm1195, %v1149, %v1214
        %v1233 = vsel %vm1196, %v1152, %v1215
        %v1234 = vsel %vm1197, %v1155, %v1216
        %v1235 = vsel %vm1198, %v1158, %v1217
        %v1236 = vsel %vm1199, %v1161, %v1218
        %v1237 = vsel %vm1200, %v1164, %v1219
        %v1238 = vsel %vm1201, %v1167, %v1220
        %v1239 = vsel %vm1202, %v1170, %v1221
        %v1240 = vsel %vm1203, %v1173, %v1222
        %v1241 = vsel %vm1204, %v1176, %v1223
        %v1242 = vsel %vm1205, %v1179, %v1224
        %v1243 = vsel %vm1206, %v1182, %v1225
        %v1244 = vsel %vm1207, %v1185, %v1226
        %v1245 = vsel %vm1208, %v1188, %v1227
        %v1264 = vrot.slane %v1228, 2
        %v1265 = vrot.slane %v1228, 4
        %v1266 = vrot.slane %v1228, 6
        %v1267 = vrot.slane %v1229, 2
        %v1268 = vrot.slane %v1229, 4
        %v1269 = vrot.slane %v1229, 6
        %v1270 = vrot.slane %v1230, 2
        %v1271 = vrot.slane %v1230, 4
        %v1272 = vrot.slane %v1230, 6
        %v1273 = vrot.slane %v1231, 2
        %v1274 = vrot.slane %v1231, 4
        %v1275 = vrot.slane %v1231, 6
        %v1276 = vrot.slane %v1232, 4
        %v1277 = vrot.slane %v1232, 6
        %v1278 = vrot.slane %v1233, 2
        %v1279 = vrot.slane %v1233, 4
        %v1280 = vrot.slane %v1233, 6
        %v1281 = vrot.slane %v1234, 2
        %v1282 = vrot.slane %v1234, 6
        %v1283 = vrot.slane %v1235, 2
        %v1284 = vrot.slane %v1235, 4
        %v1285 = vrot.slane %v1235, 6
        %v1286 = vrot.slane %v1236, 2
        %v1287 = vrot.slane %v1236, 4
        %v1288 = vrot.slane %v1237, 2
        %v1289 = vrot.slane %v1237, 4
        %v1290 = vrot.slane %v1237, 6
        %v1291 = vrot.slane %v1238, 2
        %v1292 = vrot.slane %v1238, 4
        %v1293 = vrot.slane %v1238, 6
        %v1294 = vrot.slane %v1239, 2
        %v1295 = vrot.slane %v1239, 4
        %v1296 = vrot.slane %v1239, 6
        %v1297 = vrot.slane %v1240, 2
        %v1298 = vrot.slane %v1240, 4
        %v1299 = vrot.slane %v1240, 6
        %v1300 = vrot.slane %v1241, 4
        %v1301 = vrot.slane %v1241, 6
        %v1302 = vrot.slane %v1242, 2
        %v1303 = vrot.slane %v1242, 4
        %v1304 = vrot.slane %v1242, 6
        %v1305 = vrot.slane %v1243, 2
        %v1306 = vrot.slane %v1243, 6
        %v1307 = vrot.slane %v1244, 2
        %v1308 = vrot.slane %v1244, 4
        %v1309 = vrot.slane %v1244, 6
        %v1310 = vrot.slane %v1245, 2
        %v1311 = vrot.slane %v1245, 4
        %v1360 = vrot.slane %v1270, 4
        %vm1361 = vcmask 1047556
        %v1362 = vsel %vm1361, %v1360, %v1228
        %v1364 = vunpack.c.l.s4 1934713408
        %v1365 = vunpack.c.0.s8 %v1364
        %v1366 = vperm.slane %v1362, %v1365
        %v1367 = vrot.slane %v1366, 4
        %v1368 = vsel %vm1361, 0.0, %v1367
        %v1369 = vrot.slane %v1282, 4
        %v1370 = vsel %vm1361, %v1369, %v1276
        %v1372 = vunpack.c.l.s4 1934713408
        %v1373 = vunpack.c.0.s8 %v1372
        %v1374 = vperm.slane %v1370, %v1373
        %v1375 = vrot.slane %v1374, 4
        %v1376 = vsel %vm1361, 0.0, %v1375
        %v1377 = vrot.slane %v1294, 4
        %v1378 = vsel %vm1361, %v1377, %v1237
        %v1380 = vunpack.c.l.s4 1934713408
        %v1381 = vunpack.c.0.s8 %v1380
        %v1382 = vperm.slane %v1378, %v1381
        %v1383 = vrot.slane %v1382, 4
        %v1384 = vsel %vm1361, 0.0, %v1383
        %v1385 = vrot.slane %v1306, 4
        %v1386 = vsel %vm1361, %v1385, %v1300
        %v1388 = vunpack.c.l.s4 1934713408
        %v1389 = vunpack.c.0.s8 %v1388
        %v1390 = vperm.slane %v1386, %v1389
        %v1391 = vrot.slane %v1390, 4
        %v1392 = vsel %vm1361, 0.0, %v1391
        %v1393 = vrot.slane %v1271, 4
        %v1394 = vsel %vm1361, %v1393, %v1264
        %v1396 = vunpack.c.l.s4 1934713408
        %v1397 = vunpack.c.0.s8 %v1396
        %v1398 = vperm.slane %v1394, %v1397
        %v1399 = vrot.slane %v1398, 4
        %v1400 = vsel %vm1361, 0.0, %v1399
        %v1401 = vrot.slane %v1235, 4
        %v1402 = vsel %vm1361, %v1401, %v1277
        %v1404 = vunpack.c.l.s4 1934713408
        %v1405 = vunpack.c.0.s8 %v1404
        %v1406 = vperm.slane %v1402, %v1405
        %v1407 = vrot.slane %v1406, 4
        %v1408 = vsel %vm1361, 0.0, %v1407
        %v1409 = vrot.slane %v1295, 4
        %v1410 = vsel %vm1361, %v1409, %v1288
        %v1412 = vunpack.c.l.s4 1934713408
        %v1413 = vunpack.c.0.s8 %v1412
        %v1414 = vperm.slane %v1410, %v1413
        %v1415 = vrot.slane %v1414, 4
        %v1416 = vsel %vm1361, 0.0, %v1415
        %v1417 = vrot.slane %v1244, 4
        %v1418 = vsel %vm1361, %v1417, %v1301
        %v1420 = vunpack.c.l.s4 1934713408
        %v1421 = vunpack.c.0.s8 %v1420
        %v1422 = vperm.slane %v1418, %v1421
        %v1423 = vrot.slane %v1422, 4
        %v1424 = vsel %vm1361, 0.0, %v1423
        %v1425 = vrot.slane %v1272, 4
        %v1426 = vsel %vm1361, %v1425, %v1265
        %v1428 = vunpack.c.l.s4 1934713408
        %v1429 = vunpack.c.0.s8 %v1428
        %v1430 = vperm.slane %v1426, %v1429
        %v1431 = vrot.slane %v1430, 4
        %v1432 = vsel %vm1361, 0.0, %v1431
        %v1433 = vrot.slane %v1283, 4
        %v1434 = vsel %vm1361, %v1433, %v1233
        %v1436 = vunpack.c.l.s4 1934713408
        %v1437 = vunpack.c.0.s8 %v1436
        %v1438 = vperm.slane %v1434, %v1437
        %v1439 = vrot.slane %v1438, 4
        %v1440 = vsel %vm1361, 0.0, %v1439
        %v1441 = vrot.slane %v1296, 4
        %v1442 = vsel %vm1361, %v1441, %v1289
        %v1444 = vunpack.c.l.s4 1934713408
        %v1445 = vunpack.c.0.s8 %v1444
        %v1446 = vperm.slane %v1442, %v1445
        %v1447 = vrot.slane %v1446, 4
        %v1448 = vsel %vm1361, 0.0, %v1447
        %v1449 = vrot.slane %v1307, 4
        %v1450 = vsel %vm1361, %v1449, %v1242
        %v1452 = vunpack.c.l.s4 1934713408
        %v1453 = vunpack.c.0.s8 %v1452
        %v1454 = vperm.slane %v1450, %v1453
        %v1455 = vrot.slane %v1454, 4
        %v1456 = vsel %vm1361, 0.0, %v1455
        %v1457 = vrot.slane %v1231, 4
        %v1458 = vsel %vm1361, %v1457, %v1266
        %v1460 = vunpack.c.l.s4 1934713408
        %v1461 = vunpack.c.0.s8 %v1460
        %v1462 = vperm.slane %v1458, %v1461
        %v1463 = vrot.slane %v1462, 4
        %v1464 = vsel %vm1361, 0.0, %v1463
        %v1465 = vrot.slane %v1284, 4
        %v1466 = vsel %vm1361, %v1465, %v1278
        %v1468 = vunpack.c.l.s4 1934713408
        %v1469 = vunpack.c.0.s8 %v1468
        %v1470 = vperm.slane %v1466, %v1469
        %v1471 = vrot.slane %v1470, 4
        %v1472 = vsel %vm1361, 0.0, %v1471
        %v1473 = vrot.slane %v1240, 4
        %v1474 = vsel %vm1361, %v1473, %v1290
        %v1476 = vunpack.c.l.s4 1934713408
        %v1477 = vunpack.c.0.s8 %v1476
        %v1478 = vperm.slane %v1474, %v1477
        %v1479 = vrot.slane %v1478, 4
        %v1480 = vsel %vm1361, 0.0, %v1479
        %v1481 = vrot.slane %v1308, 4
        %v1482 = vsel %vm1361, %v1481, %v1302
        %v1484 = vunpack.c.l.s4 1934713408
        %v1485 = vunpack.c.0.s8 %v1484
        %v1486 = vperm.slane %v1482, %v1485
        %v1487 = vrot.slane %v1486, 4
        %v1488 = vsel %vm1361, 0.0, %v1487
        %v1489 = vrot.slane %v1273, 4
        %v1490 = vsel %vm1361, %v1489, %v1229
        %v1492 = vunpack.c.l.s4 1934713408
        %v1493 = vunpack.c.0.s8 %v1492
        %v1494 = vperm.slane %v1490, %v1493
        %v1495 = vrot.slane %v1494, 4
        %v1496 = vsel %vm1361, 0.0, %v1495
        %v1497 = vrot.slane %v1285, 4
        %v1498 = vsel %vm1361, %v1497, %v1279
        %v1500 = vunpack.c.l.s4 1934713408
        %v1501 = vunpack.c.0.s8 %v1500
        %v1502 = vperm.slane %v1498, %v1501
        %v1503 = vrot.slane %v1502, 4
        %v1504 = vsel %vm1361, 0.0, %v1503
        %v1505 = vrot.slane %v1297, 4
        %v1506 = vsel %vm1361, %v1505, %v1238
        %v1508 = vunpack.c.l.s4 1934713408
        %v1509 = vunpack.c.0.s8 %v1508
        %v1510 = vperm.slane %v1506, %v1509
        %v1511 = vrot.slane %v1510, 4
        %v1512 = vsel %vm1361, 0.0, %v1511
        %v1513 = vrot.slane %v1309, 4
        %v1514 = vsel %vm1361, %v1513, %v1303
        %v1516 = vunpack.c.l.s4 1934713408
        %v1517 = vunpack.c.0.s8 %v1516
        %v1518 = vperm.slane %v1514, %v1517
        %v1519 = vrot.slane %v1518, 4
        %v1520 = vsel %vm1361, 0.0, %v1519
        %v1521 = vrot.slane %v1274, 4
        %v1522 = vsel %vm1361, %v1521, %v1267
        %v1524 = vunpack.c.l.s4 1934713408
        %v1525 = vunpack.c.0.s8 %v1524
        %v1526 = vperm.slane %v1522, %v1525
        %v1527 = vrot.slane %v1526, 4
        %v1528 = vsel %vm1361, 0.0, %v1527
        %v1529 = vrot.slane %v1236, 4
        %v1530 = vsel %vm1361, %v1529, %v1280
        %v1532 = vunpack.c.l.s4 1934713408
        %v1533 = vunpack.c.0.s8 %v1532
        %v1534 = vperm.slane %v1530, %v1533
        %v1535 = vrot.slane %v1534, 4
        %v1536 = vsel %vm1361, 0.0, %v1535
        %v1537 = vrot.slane %v1298, 4
        %v1538 = vsel %vm1361, %v1537, %v1291
        %v1540 = vunpack.c.l.s4 1934713408
        %v1541 = vunpack.c.0.s8 %v1540
        %v1542 = vperm.slane %v1538, %v1541
        %v1543 = vrot.slane %v1542, 4
        %v1544 = vsel %vm1361, 0.0, %v1543
        %v1545 = vrot.slane %v1245, 4
        %v1546 = vsel %vm1361, %v1545, %v1304
        %v1548 = vunpack.c.l.s4 1934713408
        %v1549 = vunpack.c.0.s8 %v1548
        %v1550 = vperm.slane %v1546, %v1549
        %v1551 = vrot.slane %v1550, 4
        %v1552 = vsel %vm1361, 0.0, %v1551
        %v1553 = vrot.slane %v1275, 4
        %v1554 = vsel %vm1361, %v1553, %v1268
        %v1556 = vunpack.c.l.s4 1934713408
        %v1557 = vunpack.c.0.s8 %v1556
        %v1558 = vperm.slane %v1554, %v1557
        %v1559 = vrot.slane %v1558, 4
        %v1560 = vsel %vm1361, 0.0, %v1559
        %v1561 = vrot.slane %v1286, 4
        %v1562 = vsel %vm1361, %v1561, %v1234
        %v1564 = vunpack.c.l.s4 1934713408
        %v1565 = vunpack.c.0.s8 %v1564
        %v1566 = vperm.slane %v1562, %v1565
        %v1567 = vrot.slane %v1566, 4
        %v1568 = vsel %vm1361, 0.0, %v1567
        %v1569 = vrot.slane %v1299, 4
        %v1570 = vsel %vm1361, %v1569, %v1292
        %v1572 = vunpack.c.l.s4 1934713408
        %v1573 = vunpack.c.0.s8 %v1572
        %v1574 = vperm.slane %v1570, %v1573
        %v1575 = vrot.slane %v1574, 4
        %v1576 = vsel %vm1361, 0.0, %v1575
        %v1577 = vrot.slane %v1310, 4
        %v1578 = vsel %vm1361, %v1577, %v1243
        %v1580 = vunpack.c.l.s4 1934713408
        %v1581 = vunpack.c.0.s8 %v1580
        %v1582 = vperm.slane %v1578, %v1581
        %v1583 = vrot.slane %v1582, 4
        %v1584 = vsel %vm1361, 0.0, %v1583
        %v1585 = vrot.slane %v1232, 4
        %v1586 = vsel %vm1361, %v1585, %v1269
        %v1588 = vunpack.c.l.s4 1934713408
        %v1589 = vunpack.c.0.s8 %v1588
        %v1590 = vperm.slane %v1586, %v1589
        %v1591 = vrot.slane %v1590, 4
        %v1592 = vsel %vm1361, 0.0, %v1591
        %v1593 = vrot.slane %v1287, 4
        %v1594 = vsel %vm1361, %v1593, %v1281
        %v1596 = vunpack.c.l.s4 1934713408
        %v1597 = vunpack.c.0.s8 %v1596
        %v1598 = vperm.slane %v1594, %v1597
        %v1599 = vrot.slane %v1598, 4
        %v1600 = vsel %vm1361, 0.0, %v1599
        %v1601 = vrot.slane %v1241, 4
        %v1602 = vsel %vm1361, %v1601, %v1293
        %v1604 = vunpack.c.l.s4 1934713408
        %v1605 = vunpack.c.0.s8 %v1604
        %v1606 = vperm.slane %v1602, %v1605
        %v1607 = vrot.slane %v1606, 4
        %v1608 = vsel %vm1361, 0.0, %v1607
        %v1609 = vrot.slane %v1311, 4
        %v1610 = vsel %vm1361, %v1609, %v1305
        %v1612 = vunpack.c.l.s4 1934713408
        %v1613 = vunpack.c.0.s8 %v1612
        %v1614 = vperm.slane %v1610, %v1613
        %v1615 = vrot.slane %v1614, 4
        %v1616 = vsel %vm1361, 0.0, %v1615
        %1621 = vst [vmem:[#allocation1] ss:$4 sm:$0xff] %v1366
        %s1622 = scalar_lea.vmem [#allocation1], 1
        %1623 = vst [vmem:[%s1622] ss:$4 sm:$0xff] %v1374
        %s1624 = scalar_lea.vmem [#allocation1], 2
        %1625 = vst [vmem:[%s1624] ss:$4 sm:$0xff] %v1382
        %s1626 = scalar_lea.vmem [#allocation1], 3
        %1627 = vst [vmem:[%s1626] ss:$4 sm:$0xff] %v1390
        %v1628 = vld.sshfl [vmem:[#allocation1] sm:$0xff pattern:$0x73625140]
        %1634 = vst [vmem:[#allocation1] ss:$4 sm:$0xff] %v1368
        %s1635 = scalar_lea.vmem [#allocation1], 1
        %1636 = vst [vmem:[%s1635] ss:$4 sm:$0xff] %v1376
        %s1637 = scalar_lea.vmem [#allocation1], 2
        %1638 = vst [vmem:[%s1637] ss:$4 sm:$0xff] %v1384
        %s1639 = scalar_lea.vmem [#allocation1], 3
        %1640 = vst [vmem:[%s1639] ss:$4 sm:$0xff] %v1392
        %v1641 = vld.sshfl [vmem:[#allocation1] sm:$0xff pattern:$0x73625140]
        %1642 = vrot.lane.b32.xlu0 %v1641, 2
        %v1643 = vpop.permute.xlu0 %1642
        %1649 = vst [vmem:[#allocation1] ss:$4 sm:$0xff] %v1398
        %s1650 = scalar_lea.vmem [#allocation1], 1
        %1651 = vst [vmem:[%s1650] ss:$4 sm:$0xff] %v1406
        %s1652 = scalar_lea.vmem [#allocation1], 2
        %1653 = vst [vmem:[%s1652] ss:$4 sm:$0xff] %v1414
        %s1654 = scalar_lea.vmem [#allocation1], 3
        %1655 = vst [vmem:[%s1654] ss:$4 sm:$0xff] %v1422
        %v1656 = vld.sshfl [vmem:[#allocation1] sm:$0xff pattern:$0x73625140]
        %1657 = vrot.lane.b32.xlu0 %v1656, 4
        %v1658 = vpop.permute.xlu0 %1657
        %1664 = vst [vmem:[#allocation1] ss:$4 sm:$0xff] %v1400
        %s1665 = scalar_lea.vmem [#allocation1], 1
        %1666 = vst [vmem:[%s1665] ss:$4 sm:$0xff] %v1408
        %s1667 = scalar_lea.vmem [#allocation1], 2
        %1668 = vst [vmem:[%s1667] ss:$4 sm:$0xff] %v1416
        %s1669 = scalar_lea.vmem [#allocation1], 3
        %1670 = vst [vmem:[%s1669] ss:$4 sm:$0xff] %v1424
        %v1671 = vld.sshfl [vmem:[#allocation1] sm:$0xff pattern:$0x73625140]
        %1672 = vrot.lane.b32.xlu0 %v1671, 6
        %v1673 = vpop.permute.xlu0 %1672
        %1679 = vst [vmem:[#allocation1] ss:$4 sm:$0xff] %v1430
        %s1680 = scalar_lea.vmem [#allocation1], 1
        %1681 = vst [vmem:[%s1680] ss:$4 sm:$0xff] %v1438
        %s1682 = scalar_lea.vmem [#allocation1], 2
        %1683 = vst [vmem:[%s1682] ss:$4 sm:$0xff] %v1446
        %s1684 = scalar_lea.vmem [#allocation1], 3
        %1685 = vst [vmem:[%s1684] ss:$4 sm:$0xff] %v1454
        %v1686 = vld.sshfl [vmem:[#allocation1] sm:$0xff pattern:$0x73625140]
        %1687 = vrot.lane.b32.xlu0 %v1686, 8
        %v1688 = vpop.permute.xlu0 %1687
        %1694 = vst [vmem:[#allocation1] ss:$4 sm:$0xff] %v1432
        %s1695 = scalar_lea.vmem [#allocation1], 1
        %1696 = vst [vmem:[%s1695] ss:$4 sm:$0xff] %v1440
        %s1697 = scalar_lea.vmem [#allocation1], 2
        %1698 = vst [vmem:[%s1697] ss:$4 sm:$0xff] %v1448
        %s1699 = scalar_lea.vmem [#allocation1], 3
        %1700 = vst [vmem:[%s1699] ss:$4 sm:$0xff] %v1456
        %v1701 = vld.sshfl [vmem:[#allocation1] sm:$0xff pattern:$0x73625140]
        %1702 = vrot.lane.b32.xlu0 %v1701, 10
        %v1703 = vpop.permute.xlu0 %1702
        %1709 = vst [vmem:[#allocation1] ss:$4 sm:$0xff] %v1462
        %s1710 = scalar_lea.vmem [#allocation1], 1
        %1711 = vst [vmem:[%s1710] ss:$4 sm:$0xff] %v1470
        %s1712 = scalar_lea.vmem [#allocation1], 2
        %1713 = vst [vmem:[%s1712] ss:$4 sm:$0xff] %v1478
        %s1714 = scalar_lea.vmem [#allocation1], 3
        %1715 = vst [vmem:[%s1714] ss:$4 sm:$0xff] %v1486
        %v1716 = vld.sshfl [vmem:[#allocation1] sm:$0xff pattern:$0x73625140]
        %1717 = vrot.lane.b32.xlu0 %v1716, 12
        %v1718 = vpop.permute.xlu0 %1717
        %1724 = vst [vmem:[#allocation1] ss:$4 sm:$0xff] %v1464
        %s1725 = scalar_lea.vmem [#allocation1], 1
        %1726 = vst [vmem:[%s1725] ss:$4 sm:$0xff] %v1472
        %s1727 = scalar_lea.vmem [#allocation1], 2
        %1728 = vst [vmem:[%s1727] ss:$4 sm:$0xff] %v1480
        %s1729 = scalar_lea.vmem [#allocation1], 3
        %1730 = vst [vmem:[%s1729] ss:$4 sm:$0xff] %v1488
        %v1731 = vld.sshfl [vmem:[#allocation1] sm:$0xff pattern:$0x73625140]
        %1732 = vrot.lane.b32.xlu0 %v1731, 14
        %v1733 = vpop.permute.xlu0 %1732
        %1739 = vst [vmem:[#allocation1] ss:$4 sm:$0xff] %v1494
        %s1740 = scalar_lea.vmem [#allocation1], 1
        %1741 = vst [vmem:[%s1740] ss:$4 sm:$0xff] %v1502
        %s1742 = scalar_lea.vmem [#allocation1], 2
        %1743 = vst [vmem:[%s1742] ss:$4 sm:$0xff] %v1510
        %s1744 = scalar_lea.vmem [#allocation1], 3
        %1745 = vst [vmem:[%s1744] ss:$4 sm:$0xff] %v1518
        %v1746 = vld.sshfl [vmem:[#allocation1] sm:$0xff pattern:$0x73625140]
        %1747 = vrot.lane.b32.xlu0 %v1746, 16
        %v1748 = vpop.permute.xlu0 %1747
        %1754 = vst [vmem:[#allocation1] ss:$4 sm:$0xff] %v1496
        %s1755 = scalar_lea.vmem [#allocation1], 1
        %1756 = vst [vmem:[%s1755] ss:$4 sm:$0xff] %v1504
        %s1757 = scalar_lea.vmem [#allocation1], 2
        %1758 = vst [vmem:[%s1757] ss:$4 sm:$0xff] %v1512
        %s1759 = scalar_lea.vmem [#allocation1], 3
        %1760 = vst [vmem:[%s1759] ss:$4 sm:$0xff] %v1520
        %v1761 = vld.sshfl [vmem:[#allocation1] sm:$0xff pattern:$0x73625140]
        %1762 = vrot.lane.b32.xlu0 %v1761, 18
        %v1763 = vpop.permute.xlu0 %1762
        %1769 = vst [vmem:[#allocation1] ss:$4 sm:$0xff] %v1526
        %s1770 = scalar_lea.vmem [#allocation1], 1
        %1771 = vst [vmem:[%s1770] ss:$4 sm:$0xff] %v1534
        %s1772 = scalar_lea.vmem [#allocation1], 2
        %1773 = vst [vmem:[%s1772] ss:$4 sm:$0xff] %v1542
        %s1774 = scalar_lea.vmem [#allocation1], 3
        %1775 = vst [vmem:[%s1774] ss:$4 sm:$0xff] %v1550
        %v1776 = vld.sshfl [vmem:[#allocation1] sm:$0xff pattern:$0x73625140]
        %1777 = vrot.lane.b32.xlu0 %v1776, 20
        %v1778 = vpop.permute.xlu0 %1777
        %1784 = vst [vmem:[#allocation1] ss:$4 sm:$0xff] %v1528
        %s1785 = scalar_lea.vmem [#allocation1], 1
        %1786 = vst [vmem:[%s1785] ss:$4 sm:$0xff] %v1536
        %s1787 = scalar_lea.vmem [#allocation1], 2
        %1788 = vst [vmem:[%s1787] ss:$4 sm:$0xff] %v1544
        %s1789 = scalar_lea.vmem [#allocation1], 3
        %1790 = vst [vmem:[%s1789] ss:$4 sm:$0xff] %v1552
        %v1791 = vld.sshfl [vmem:[#allocation1] sm:$0xff pattern:$0x73625140]
        %1792 = vrot.lane.b32.xlu0 %v1791, 22
        %v1793 = vpop.permute.xlu0 %1792
        %1799 = vst [vmem:[#allocation1] ss:$4 sm:$0xff] %v1558
        %s1800 = scalar_lea.vmem [#allocation1], 1
        %1801 = vst [vmem:[%s1800] ss:$4 sm:$0xff] %v1566
        %s1802 = scalar_lea.vmem [#allocation1], 2
        %1803 = vst [vmem:[%s1802] ss:$4 sm:$0xff] %v1574
        %s1804 = scalar_lea.vmem [#allocation1], 3
        %1805 = vst [vmem:[%s1804] ss:$4 sm:$0xff] %v1582
        %v1806 = vld.sshfl [vmem:[#allocation1] sm:$0xff pattern:$0x73625140]
        %1807 = vrot.lane.b32.xlu0 %v1806, 24
        %v1808 = vpop.permute.xlu0 %1807
        %1814 = vst [vmem:[#allocation1] ss:$4 sm:$0xff] %v1560
        %s1815 = scalar_lea.vmem [#allocation1], 1
        %1816 = vst [vmem:[%s1815] ss:$4 sm:$0xff] %v1568
        %s1817 = scalar_lea.vmem [#allocation1], 2
        %1818 = vst [vmem:[%s1817] ss:$4 sm:$0xff] %v1576
        %s1819 = scalar_lea.vmem [#allocation1], 3
        %1820 = vst [vmem:[%s1819] ss:$4 sm:$0xff] %v1584
        %v1821 = vld.sshfl [vmem:[#allocation1] sm:$0xff pattern:$0x73625140]
        %1822 = vrot.lane.b32.xlu0 %v1821, 26
        %v1823 = vpop.permute.xlu0 %1822
        %1829 = vst [vmem:[#allocation1] ss:$4 sm:$0xff] %v1590
        %s1830 = scalar_lea.vmem [#allocation1], 1
        %1831 = vst [vmem:[%s1830] ss:$4 sm:$0xff] %v1598
        %s1832 = scalar_lea.vmem [#allocation1], 2
        %1833 = vst [vmem:[%s1832] ss:$4 sm:$0xff] %v1606
        %s1834 = scalar_lea.vmem [#allocation1], 3
        %1835 = vst [vmem:[%s1834] ss:$4 sm:$0xff] %v1614
        %v1836 = vld.sshfl [vmem:[#allocation1] sm:$0xff pattern:$0x73625140]
        %1837 = vrot.lane.b32.xlu0 %v1836, 28
        %v1838 = vpop.permute.xlu0 %1837
        %1844 = vst [vmem:[#allocation1] ss:$4 sm:$0xff] %v1592
        %s1845 = scalar_lea.vmem [#allocation1], 1
        %1846 = vst [vmem:[%s1845] ss:$4 sm:$0xff] %v1600
        %s1847 = scalar_lea.vmem [#allocation1], 2
        %1848 = vst [vmem:[%s1847] ss:$4 sm:$0xff] %v1608
        %s1849 = scalar_lea.vmem [#allocation1], 3
        %1850 = vst [vmem:[%s1849] ss:$4 sm:$0xff] %v1616
        %v1851 = vld.sshfl [vmem:[#allocation1] sm:$0xff pattern:$0x73625140]
        %1852 = vrot.lane.b32.xlu0 %v1851, 30
        %v1853 = vpop.permute.xlu0 %1852
        %vm1855 = vcmask 15360
        %v1856 = vsel %vm1855, %v1628, %v1643
        %v1857 = vsel %vm899, %v1856, %v1658
        %vm1858 = vcmask 48128
        %v1859 = vsel %vm1858, %v1857, %v1673
        %v1860 = vsel %vm918, %v1859, %v1688
        %vm1861 = vcmask 80896
        %v1862 = vsel %vm1861, %v1860, %v1703
        %v1863 = vsel %vm937, %v1862, %v1718
        %vm1864 = vcmask 113664
        %v1865 = vsel %vm1864, %v1863, %v1733
        %v1866 = vsel %vm956, %v1865, %v1748
        %vm1867 = vcmask 146432
        %v1868 = vsel %vm1867, %v1866, %v1763
        %v1869 = vsel %vm975, %v1868, %v1778
        %vm1870 = vcmask 179200
        %v1871 = vsel %vm1870, %v1869, %v1793
        %v1872 = vsel %vm994, %v1871, %v1808
        %vm1873 = vcmask 211968
        %v1874 = vsel %vm1873, %v1872, %v1823
        %v1875 = vsel %vm1013, %v1874, %v1838
        %vm1876 = vcmask 244736
        %v1877 = vsel %vm1876, %v1875, %v1853
        %1878 = vrot.lane.b32.xlu0 %v1228, 126
        %v1879 = vpop.permute.xlu0 %1878
        %1880 = vrot.lane.b32.xlu0 %v1264, 126
        %v1881 = vpop.permute.xlu0 %1880
        %1882 = vrot.lane.b32.xlu0 %v1265, 126
        %v1883 = vpop.permute.xlu0 %1882
        %1884 = vrot.lane.b32.xlu0 %v1266, 126
        %v1885 = vpop.permute.xlu0 %1884
        %1886 = vrot.lane.b32.xlu0 %v1229, 126
        %v1887 = vpop.permute.xlu0 %1886
        %1888 = vrot.lane.b32.xlu0 %v1267, 126
        %v1889 = vpop.permute.xlu0 %1888
        %1890 = vrot.lane.b32.xlu0 %v1268, 126
        %v1891 = vpop.permute.xlu0 %1890
        %1892 = vrot.lane.b32.xlu0 %v1269, 126
        %v1893 = vpop.permute.xlu0 %1892
        %1894 = vrot.lane.b32.xlu0 %v1270, 126
        %v1895 = vpop.permute.xlu0 %1894
        %1896 = vrot.lane.b32.xlu0 %v1271, 126
        %v1897 = vpop.permute.xlu0 %1896
        %1898 = vrot.lane.b32.xlu0 %v1272, 126
        %v1899 = vpop.permute.xlu0 %1898
        %1900 = vrot.lane.b32.xlu0 %v1231, 126
        %v1901 = vpop.permute.xlu0 %1900
        %1902 = vrot.lane.b32.xlu0 %v1273, 126
        %v1903 = vpop.permute.xlu0 %1902
        %1904 = vrot.lane.b32.xlu0 %v1274, 126
        %v1905 = vpop.permute.xlu0 %1904
        %1906 = vrot.lane.b32.xlu0 %v1275, 126
        %v1907 = vpop.permute.xlu0 %1906
        %1908 = vrot.lane.b32.xlu0 %v1232, 126
        %v1909 = vpop.permute.xlu0 %1908
        %1910 = vrot.lane.b32.xlu0 %v1276, 126
        %v1911 = vpop.permute.xlu0 %1910
        %1912 = vrot.lane.b32.xlu0 %v1277, 126
        %v1913 = vpop.permute.xlu0 %1912
        %1914 = vrot.lane.b32.xlu0 %v1233, 126
        %v1915 = vpop.permute.xlu0 %1914
        %1916 = vrot.lane.b32.xlu0 %v1278, 126
        %v1917 = vpop.permute.xlu0 %1916
        %1918 = vrot.lane.b32.xlu0 %v1279, 126
        %v1919 = vpop.permute.xlu0 %1918
        %1920 = vrot.lane.b32.xlu0 %v1280, 126
        %v1921 = vpop.permute.xlu0 %1920
        %1922 = vrot.lane.b32.xlu0 %v1234, 126
        %v1923 = vpop.permute.xlu0 %1922
        %1924 = vrot.lane.b32.xlu0 %v1281, 126
        %v1925 = vpop.permute.xlu0 %1924
        %1926 = vrot.lane.b32.xlu0 %v1282, 126
        %v1927 = vpop.permute.xlu0 %1926
        %1928 = vrot.lane.b32.xlu0 %v1235, 126
        %v1929 = vpop.permute.xlu0 %1928
        %1930 = vrot.lane.b32.xlu0 %v1283, 126
        %v1931 = vpop.permute.xlu0 %1930
        %1932 = vrot.lane.b32.xlu0 %v1284, 126
        %v1933 = vpop.permute.xlu0 %1932
        %1934 = vrot.lane.b32.xlu0 %v1285, 126
        %v1935 = vpop.permute.xlu0 %1934
        %1936 = vrot.lane.b32.xlu0 %v1236, 126
        %v1937 = vpop.permute.xlu0 %1936
        %1938 = vrot.lane.b32.xlu0 %v1286, 126
        %v1939 = vpop.permute.xlu0 %1938
        %1940 = vrot.lane.b32.xlu0 %v1287, 126
        %v1941 = vpop.permute.xlu0 %1940
        %1942 = vrot.lane.b32.xlu0 %v1237, 126
        %v1943 = vpop.permute.xlu0 %1942
        %1944 = vrot.lane.b32.xlu0 %v1288, 126
        %v1945 = vpop.permute.xlu0 %1944
        %1946 = vrot.lane.b32.xlu0 %v1289, 126
        %v1947 = vpop.permute.xlu0 %1946
        %1948 = vrot.lane.b32.xlu0 %v1290, 126
        %v1949 = vpop.permute.xlu0 %1948
        %1950 = vrot.lane.b32.xlu0 %v1238, 126
        %v1951 = vpop.permute.xlu0 %1950
        %1952 = vrot.lane.b32.xlu0 %v1291, 126
        %v1953 = vpop.permute.xlu0 %1952
        %1954 = vrot.lane.b32.xlu0 %v1292, 126
        %v1955 = vpop.permute.xlu0 %1954
        %1956 = vrot.lane.b32.xlu0 %v1293, 126
        %v1957 = vpop.permute.xlu0 %1956
        %1958 = vrot.lane.b32.xlu0 %v1294, 126
        %v1959 = vpop.permute.xlu0 %1958
        %1960 = vrot.lane.b32.xlu0 %v1295, 126
        %v1961 = vpop.permute.xlu0 %1960
        %1962 = vrot.lane.b32.xlu0 %v1296, 126
        %v1963 = vpop.permute.xlu0 %1962
        %1964 = vrot.lane.b32.xlu0 %v1240, 126
        %v1965 = vpop.permute.xlu0 %1964
        %1966 = vrot.lane.b32.xlu0 %v1297, 126
        %v1967 = vpop.permute.xlu0 %1966
        %1968 = vrot.lane.b32.xlu0 %v1298, 126
        %v1969 = vpop.permute.xlu0 %1968
        %1970 = vrot.lane.b32.xlu0 %v1299, 126
        %v1971 = vpop.permute.xlu0 %1970
        %1972 = vrot.lane.b32.xlu0 %v1241, 126
        %v1973 = vpop.permute.xlu0 %1972
        %1974 = vrot.lane.b32.xlu0 %v1300, 126
        %v1975 = vpop.permute.xlu0 %1974
        %1976 = vrot.lane.b32.xlu0 %v1301, 126
        %v1977 = vpop.permute.xlu0 %1976
        %1978 = vrot.lane.b32.xlu0 %v1242, 126
        %v1979 = vpop.permute.xlu0 %1978
        %1980 = vrot.lane.b32.xlu0 %v1302, 126
        %v1981 = vpop.permute.xlu0 %1980
        %1982 = vrot.lane.b32.xlu0 %v1303, 126
        %v1983 = vpop.permute.xlu0 %1982
        %1984 = vrot.lane.b32.xlu0 %v1304, 126
        %v1985 = vpop.permute.xlu0 %1984
        %1986 = vrot.lane.b32.xlu0 %v1243, 126
        %v1987 = vpop.permute.xlu0 %1986
        %1988 = vrot.lane.b32.xlu0 %v1305, 126
        %v1989 = vpop.permute.xlu0 %1988
        %1990 = vrot.lane.b32.xlu0 %v1306, 126
        %v1991 = vpop.permute.xlu0 %1990
        %1992 = vrot.lane.b32.xlu0 %v1244, 126
        %v1993 = vpop.permute.xlu0 %1992
        %1994 = vrot.lane.b32.xlu0 %v1307, 126
        %v1995 = vpop.permute.xlu0 %1994
        %1996 = vrot.lane.b32.xlu0 %v1308, 126
        %v1997 = vpop.permute.xlu0 %1996
        %1998 = vrot.lane.b32.xlu0 %v1309, 126
        %v1999 = vpop.permute.xlu0 %1998
        %2000 = vrot.lane.b32.xlu0 %v1245, 126
        %v2001 = vpop.permute.xlu0 %2000
        %2002 = vrot.lane.b32.xlu0 %v1310, 126
        %v2003 = vpop.permute.xlu0 %2002
        %2004 = vrot.lane.b32.xlu0 %v1311, 126
        %v2005 = vpop.permute.xlu0 %2004
        %v2070 = vrot.slane %v1895, 4
        %v2071 = vsel %vm1361, %v2070, %v1879
        %v2073 = vunpack.c.l.s4 1934713408
        %v2074 = vunpack.c.0.s8 %v2073
        %v2075 = vperm.slane %v2071, %v2074
        %v2076 = vrot.slane %v2075, 4
        %v2077 = vsel %vm1361, 0.0, %v2076
        %v2078 = vrot.slane %v1927, 4
        %v2079 = vsel %vm1361, %v2078, %v1911
        %v2081 = vunpack.c.l.s4 1934713408
        %v2082 = vunpack.c.0.s8 %v2081
        %v2083 = vperm.slane %v2079, %v2082
        %v2084 = vrot.slane %v2083, 4
        %v2085 = vsel %vm1361, 0.0, %v2084
        %v2086 = vrot.slane %v1959, 4
        %v2087 = vsel %vm1361, %v2086, %v1943
        %v2089 = vunpack.c.l.s4 1934713408
        %v2090 = vunpack.c.0.s8 %v2089
        %v2091 = vperm.slane %v2087, %v2090
        %v2092 = vrot.slane %v2091, 4
        %v2093 = vsel %vm1361, 0.0, %v2092
        %v2094 = vrot.slane %v1991, 4
        %v2095 = vsel %vm1361, %v2094, %v1975
        %v2097 = vunpack.c.l.s4 1934713408
        %v2098 = vunpack.c.0.s8 %v2097
        %v2099 = vperm.slane %v2095, %v2098
        %v2100 = vrot.slane %v2099, 4
        %v2101 = vsel %vm1361, 0.0, %v2100
        %v2102 = vrot.slane %v1897, 4
        %v2103 = vsel %vm1361, %v2102, %v1881
        %v2105 = vunpack.c.l.s4 1934713408
        %v2106 = vunpack.c.0.s8 %v2105
        %v2107 = vperm.slane %v2103, %v2106
        %v2108 = vrot.slane %v2107, 4
        %v2109 = vsel %vm1361, 0.0, %v2108
        %v2110 = vrot.slane %v1929, 4
        %v2111 = vsel %vm1361, %v2110, %v1913
        %v2113 = vunpack.c.l.s4 1934713408
        %v2114 = vunpack.c.0.s8 %v2113
        %v2115 = vperm.slane %v2111, %v2114
        %v2116 = vrot.slane %v2115, 4
        %v2117 = vsel %vm1361, 0.0, %v2116
        %v2118 = vrot.slane %v1961, 4
        %v2119 = vsel %vm1361, %v2118, %v1945
        %v2121 = vunpack.c.l.s4 1934713408
        %v2122 = vunpack.c.0.s8 %v2121
        %v2123 = vperm.slane %v2119, %v2122
        %v2124 = vrot.slane %v2123, 4
        %v2125 = vsel %vm1361, 0.0, %v2124
        %v2126 = vrot.slane %v1993, 4
        %v2127 = vsel %vm1361, %v2126, %v1977
        %v2129 = vunpack.c.l.s4 1934713408
        %v2130 = vunpack.c.0.s8 %v2129
        %v2131 = vperm.slane %v2127, %v2130
        %v2132 = vrot.slane %v2131, 4
        %v2133 = vsel %vm1361, 0.0, %v2132
        %v2134 = vrot.slane %v1899, 4
        %v2135 = vsel %vm1361, %v2134, %v1883
        %v2137 = vunpack.c.l.s4 1934713408
        %v2138 = vunpack.c.0.s8 %v2137
        %v2139 = vperm.slane %v2135, %v2138
        %v2140 = vrot.slane %v2139, 4
        %v2141 = vsel %vm1361, 0.0, %v2140
        %v2142 = vrot.slane %v1931, 4
        %v2143 = vsel %vm1361, %v2142, %v1915
        %v2145 = vunpack.c.l.s4 1934713408
        %v2146 = vunpack.c.0.s8 %v2145
        %v2147 = vperm.slane %v2143, %v2146
        %v2148 = vrot.slane %v2147, 4
        %v2149 = vsel %vm1361, 0.0, %v2148
        %v2150 = vrot.slane %v1963, 4
        %v2151 = vsel %vm1361, %v2150, %v1947
        %v2153 = vunpack.c.l.s4 1934713408
        %v2154 = vunpack.c.0.s8 %v2153
        %v2155 = vperm.slane %v2151, %v2154
        %v2156 = vrot.slane %v2155, 4
        %v2157 = vsel %vm1361, 0.0, %v2156
        %v2158 = vrot.slane %v1995, 4
        %v2159 = vsel %vm1361, %v2158, %v1979
        %v2161 = vunpack.c.l.s4 1934713408
        %v2162 = vunpack.c.0.s8 %v2161
        %v2163 = vperm.slane %v2159, %v2162
        %v2164 = vrot.slane %v2163, 4
        %v2165 = vsel %vm1361, 0.0, %v2164
        %v2166 = vrot.slane %v1901, 4
        %v2167 = vsel %vm1361, %v2166, %v1885
        %v2169 = vunpack.c.l.s4 1934713408
        %v2170 = vunpack.c.0.s8 %v2169
        %v2171 = vperm.slane %v2167, %v2170
        %v2172 = vrot.slane %v2171, 4
        %v2173 = vsel %vm1361, 0.0, %v2172
        %v2174 = vrot.slane %v1933, 4
        %v2175 = vsel %vm1361, %v2174, %v1917
        %v2177 = vunpack.c.l.s4 1934713408
        %v2178 = vunpack.c.0.s8 %v2177
        %v2179 = vperm.slane %v2175, %v2178
        %v2180 = vrot.slane %v2179, 4
        %v2181 = vsel %vm1361, 0.0, %v2180
        %v2182 = vrot.slane %v1965, 4
        %v2183 = vsel %vm1361, %v2182, %v1949
        %v2185 = vunpack.c.l.s4 1934713408
        %v2186 = vunpack.c.0.s8 %v2185
        %v2187 = vperm.slane %v2183, %v2186
        %v2188 = vrot.slane %v2187, 4
        %v2189 = vsel %vm1361, 0.0, %v2188
        %v2190 = vrot.slane %v1997, 4
        %v2191 = vsel %vm1361, %v2190, %v1981
        %v2193 = vunpack.c.l.s4 1934713408
        %v2194 = vunpack.c.0.s8 %v2193
        %v2195 = vperm.slane %v2191, %v2194
        %v2196 = vrot.slane %v2195, 4
        %v2197 = vsel %vm1361, 0.0, %v2196
        %v2198 = vrot.slane %v1903, 4
        %v2199 = vsel %vm1361, %v2198, %v1887
        %v2201 = vunpack.c.l.s4 1934713408
        %v2202 = vunpack.c.0.s8 %v2201
        %v2203 = vperm.slane %v2199, %v2202
        %v2204 = vrot.slane %v2203, 4
        %v2205 = vsel %vm1361, 0.0, %v2204
        %v2206 = vrot.slane %v1935, 4
        %v2207 = vsel %vm1361, %v2206, %v1919
        %v2209 = vunpack.c.l.s4 1934713408
        %v2210 = vunpack.c.0.s8 %v2209
        %v2211 = vperm.slane %v2207, %v2210
        %v2212 = vrot.slane %v2211, 4
        %v2213 = vsel %vm1361, 0.0, %v2212
        %v2214 = vrot.slane %v1967, 4
        %v2215 = vsel %vm1361, %v2214, %v1951
        %v2217 = vunpack.c.l.s4 1934713408
        %v2218 = vunpack.c.0.s8 %v2217
        %v2219 = vperm.slane %v2215, %v2218
        %v2220 = vrot.slane %v2219, 4
        %v2221 = vsel %vm1361, 0.0, %v2220
        %v2222 = vrot.slane %v1999, 4
        %v2223 = vsel %vm1361, %v2222, %v1983
        %v2225 = vunpack.c.l.s4 1934713408
        %v2226 = vunpack.c.0.s8 %v2225
        %v2227 = vperm.slane %v2223, %v2226
        %v2228 = vrot.slane %v2227, 4
        %v2229 = vsel %vm1361, 0.0, %v2228
        %v2230 = vrot.slane %v1905, 4
        %v2231 = vsel %vm1361, %v2230, %v1889
        %v2233 = vunpack.c.l.s4 1934713408
        %v2234 = vunpack.c.0.s8 %v2233
        %v2235 = vperm.slane %v2231, %v2234
        %v2236 = vrot.slane %v2235, 4
        %v2237 = vsel %vm1361, 0.0, %v2236
        %v2238 = vrot.slane %v1937, 4
        %v2239 = vsel %vm1361, %v2238, %v1921
        %v2241 = vunpack.c.l.s4 1934713408
        %v2242 = vunpack.c.0.s8 %v2241
        %v2243 = vperm.slane %v2239, %v2242
        %v2244 = vrot.slane %v2243, 4
        %v2245 = vsel %vm1361, 0.0, %v2244
        %v2246 = vrot.slane %v1969, 4
        %v2247 = vsel %vm1361, %v2246, %v1953
        %v2249 = vunpack.c.l.s4 1934713408
        %v2250 = vunpack.c.0.s8 %v2249
        %v2251 = vperm.slane %v2247, %v2250
        %v2252 = vrot.slane %v2251, 4
        %v2253 = vsel %vm1361, 0.0, %v2252
        %v2254 = vrot.slane %v2001, 4
        %v2255 = vsel %vm1361, %v2254, %v1985
        %v2257 = vunpack.c.l.s4 1934713408
        %v2258 = vunpack.c.0.s8 %v2257
        %v2259 = vperm.slane %v2255, %v2258
        %v2260 = vrot.slane %v2259, 4
        %v2261 = vsel %vm1361, 0.0, %v2260
        %v2262 = vrot.slane %v1907, 4
        %v2263 = vsel %vm1361, %v2262, %v1891
        %v2265 = vunpack.c.l.s4 1934713408
        %v2266 = vunpack.c.0.s8 %v2265
        %v2267 = vperm.slane %v2263, %v2266
        %v2268 = vrot.slane %v2267, 4
        %v2269 = vsel %vm1361, 0.0, %v2268
        %v2270 = vrot.slane %v1939, 4
        %v2271 = vsel %vm1361, %v2270, %v1923
        %v2273 = vunpack.c.l.s4 1934713408
        %v2274 = vunpack.c.0.s8 %v2273
        %v2275 = vperm.slane %v2271, %v2274
        %v2276 = vrot.slane %v2275, 4
        %v2277 = vsel %vm1361, 0.0, %v2276
        %v2278 = vrot.slane %v1971, 4
        %v2279 = vsel %vm1361, %v2278, %v1955
        %v2281 = vunpack.c.l.s4 1934713408
        %v2282 = vunpack.c.0.s8 %v2281
        %v2283 = vperm.slane %v2279, %v2282
        %v2284 = vrot.slane %v2283, 4
        %v2285 = vsel %vm1361, 0.0, %v2284
        %v2286 = vrot.slane %v2003, 4
        %v2287 = vsel %vm1361, %v2286, %v1987
        %v2289 = vunpack.c.l.s4 1934713408
        %v2290 = vunpack.c.0.s8 %v2289
        %v2291 = vperm.slane %v2287, %v2290
        %v2292 = vrot.slane %v2291, 4
        %v2293 = vsel %vm1361, 0.0, %v2292
        %v2294 = vrot.slane %v1909, 4
        %v2295 = vsel %vm1361, %v2294, %v1893
        %v2297 = vunpack.c.l.s4 1934713408
        %v2298 = vunpack.c.0.s8 %v2297
        %v2299 = vperm.slane %v2295, %v2298
        %v2300 = vrot.slane %v2299, 4
        %v2301 = vsel %vm1361, 0.0, %v2300
        %v2302 = vrot.slane %v1941, 4
        %v2303 = vsel %vm1361, %v2302, %v1925
        %v2305 = vunpack.c.l.s4 1934713408
        %v2306 = vunpack.c.0.s8 %v2305
        %v2307 = vperm.slane %v2303, %v2306
        %v2308 = vrot.slane %v2307, 4
        %v2309 = vsel %vm1361, 0.0, %v2308
        %v2310 = vrot.slane %v1973, 4
        %v2311 = vsel %vm1361, %v2310, %v1957
        %v2313 = vunpack.c.l.s4 1934713408
        %v2314 = vunpack.c.0.s8 %v2313
        %v2315 = vperm.slane %v2311, %v2314
        %v2316 = vrot.slane %v2315, 4
        %v2317 = vsel %vm1361, 0.0, %v2316
        %v2318 = vrot.slane %v2005, 4
        %v2319 = vsel %vm1361, %v2318, %v1989
        %v2321 = vunpack.c.l.s4 1934713408
        %v2322 = vunpack.c.0.s8 %v2321
        %v2323 = vperm.slane %v2319, %v2322
        %v2324 = vrot.slane %v2323, 4
        %v2325 = vsel %vm1361, 0.0, %v2324
        %2330 = vst [vmem:[#allocation1] ss:$4 sm:$0xff] %v2075
        %s2331 = scalar_lea.vmem [#allocation1], 1
        %2332 = vst [vmem:[%s2331] ss:$4 sm:$0xff] %v2083
        %s2333 = scalar_lea.vmem [#allocation1], 2
        %2334 = vst [vmem:[%s2333] ss:$4 sm:$0xff] %v2091
        %s2335 = scalar_lea.vmem [#allocation1], 3
        %2336 = vst [vmem:[%s2335] ss:$4 sm:$0xff] %v2099
        %v2337 = vld.sshfl [vmem:[#allocation1] sm:$0xff pattern:$0x73625140]
        %2343 = vst [vmem:[#allocation1] ss:$4 sm:$0xff] %v2077
        %s2344 = scalar_lea.vmem [#allocation1], 1
        %2345 = vst [vmem:[%s2344] ss:$4 sm:$0xff] %v2085
        %s2346 = scalar_lea.vmem [#allocation1], 2
        %2347 = vst [vmem:[%s2346] ss:$4 sm:$0xff] %v2093
        %s2348 = scalar_lea.vmem [#allocation1], 3
        %2349 = vst [vmem:[%s2348] ss:$4 sm:$0xff] %v2101
        %v2350 = vld.sshfl [vmem:[#allocation1] sm:$0xff pattern:$0x73625140]
        %2351 = vrot.lane.b32.xlu0 %v2350, 2
        %v2352 = vpop.permute.xlu0 %2351
        %2358 = vst [vmem:[#allocation1] ss:$4 sm:$0xff] %v2107
        %s2359 = scalar_lea.vmem [#allocation1], 1
        %2360 = vst [vmem:[%s2359] ss:$4 sm:$0xff] %v2115
        %s2361 = scalar_lea.vmem [#allocation1], 2
        %2362 = vst [vmem:[%s2361] ss:$4 sm:$0xff] %v2123
        %s2363 = scalar_lea.vmem [#allocation1], 3
        %2364 = vst [vmem:[%s2363] ss:$4 sm:$0xff] %v2131
        %v2365 = vld.sshfl [vmem:[#allocation1] sm:$0xff pattern:$0x73625140]
        %2366 = vrot.lane.b32.xlu0 %v2365, 4
        %v2367 = vpop.permute.xlu0 %2366
        %2373 = vst [vmem:[#allocation1] ss:$4 sm:$0xff] %v2109
        %s2374 = scalar_lea.vmem [#allocation1], 1
        %2375 = vst [vmem:[%s2374] ss:$4 sm:$0xff] %v2117
        %s2376 = scalar_lea.vmem [#allocation1], 2
        %2377 = vst [vmem:[%s2376] ss:$4 sm:$0xff] %v2125
        %s2378 = scalar_lea.vmem [#allocation1], 3
        %2379 = vst [vmem:[%s2378] ss:$4 sm:$0xff] %v2133
        %v2380 = vld.sshfl [vmem:[#allocation1] sm:$0xff pattern:$0x73625140]
        %2381 = vrot.lane.b32.xlu0 %v2380, 6
        %v2382 = vpop.permute.xlu0 %2381
        %2388 = vst [vmem:[#allocation1] ss:$4 sm:$0xff] %v2139
        %s2389 = scalar_lea.vmem [#allocation1], 1
        %2390 = vst [vmem:[%s2389] ss:$4 sm:$0xff] %v2147
        %s2391 = scalar_lea.vmem [#allocation1], 2
        %2392 = vst [vmem:[%s2391] ss:$4 sm:$0xff] %v2155
        %s2393 = scalar_lea.vmem [#allocation1], 3
        %2394 = vst [vmem:[%s2393] ss:$4 sm:$0xff] %v2163
        %v2395 = vld.sshfl [vmem:[#allocation1] sm:$0xff pattern:$0x73625140]
        %2396 = vrot.lane.b32.xlu0 %v2395, 8
        %v2397 = vpop.permute.xlu0 %2396
        %2403 = vst [vmem:[#allocation1] ss:$4 sm:$0xff] %v2141
        %s2404 = scalar_lea.vmem [#allocation1], 1
        %2405 = vst [vmem:[%s2404] ss:$4 sm:$0xff] %v2149
        %s2406 = scalar_lea.vmem [#allocation1], 2
        %2407 = vst [vmem:[%s2406] ss:$4 sm:$0xff] %v2157
        %s2408 = scalar_lea.vmem [#allocation1], 3
        %2409 = vst [vmem:[%s2408] ss:$4 sm:$0xff] %v2165
        %v2410 = vld.sshfl [vmem:[#allocation1] sm:$0xff pattern:$0x73625140]
        %2411 = vrot.lane.b32.xlu0 %v2410, 10
        %v2412 = vpop.permute.xlu0 %2411
        %2418 = vst [vmem:[#allocation1] ss:$4 sm:$0xff] %v2171
        %s2419 = scalar_lea.vmem [#allocation1], 1
        %2420 = vst [vmem:[%s2419] ss:$4 sm:$0xff] %v2179
        %s2421 = scalar_lea.vmem [#allocation1], 2
        %2422 = vst [vmem:[%s2421] ss:$4 sm:$0xff] %v2187
        %s2423 = scalar_lea.vmem [#allocation1], 3
        %2424 = vst [vmem:[%s2423] ss:$4 sm:$0xff] %v2195
        %v2425 = vld.sshfl [vmem:[#allocation1] sm:$0xff pattern:$0x73625140]
        %2426 = vrot.lane.b32.xlu0 %v2425, 12
        %v2427 = vpop.permute.xlu0 %2426
        %2433 = vst [vmem:[#allocation1] ss:$4 sm:$0xff] %v2173
        %s2434 = scalar_lea.vmem [#allocation1], 1
        %2435 = vst [vmem:[%s2434] ss:$4 sm:$0xff] %v2181
        %s2436 = scalar_lea.vmem [#allocation1], 2
        %2437 = vst [vmem:[%s2436] ss:$4 sm:$0xff] %v2189
        %s2438 = scalar_lea.vmem [#allocation1], 3
        %2439 = vst [vmem:[%s2438] ss:$4 sm:$0xff] %v2197
        %v2440 = vld.sshfl [vmem:[#allocation1] sm:$0xff pattern:$0x73625140]
        %2441 = vrot.lane.b32.xlu0 %v2440, 14
        %v2442 = vpop.permute.xlu0 %2441
        %2448 = vst [vmem:[#allocation1] ss:$4 sm:$0xff] %v2203
        %s2449 = scalar_lea.vmem [#allocation1], 1
        %2450 = vst [vmem:[%s2449] ss:$4 sm:$0xff] %v2211
        %s2451 = scalar_lea.vmem [#allocation1], 2
        %2452 = vst [vmem:[%s2451] ss:$4 sm:$0xff] %v2219
        %s2453 = scalar_lea.vmem [#allocation1], 3
        %2454 = vst [vmem:[%s2453] ss:$4 sm:$0xff] %v2227
        %v2455 = vld.sshfl [vmem:[#allocation1] sm:$0xff pattern:$0x73625140]
        %2456 = vrot.lane.b32.xlu0 %v2455, 16
        %v2457 = vpop.permute.xlu0 %2456
        %2463 = vst [vmem:[#allocation1] ss:$4 sm:$0xff] %v2205
        %s2464 = scalar_lea.vmem [#allocation1], 1
        %2465 = vst [vmem:[%s2464] ss:$4 sm:$0xff] %v2213
        %s2466 = scalar_lea.vmem [#allocation1], 2
        %2467 = vst [vmem:[%s2466] ss:$4 sm:$0xff] %v2221
        %s2468 = scalar_lea.vmem [#allocation1], 3
        %2469 = vst [vmem:[%s2468] ss:$4 sm:$0xff] %v2229
        %v2470 = vld.sshfl [vmem:[#allocation1] sm:$0xff pattern:$0x73625140]
        %2471 = vrot.lane.b32.xlu0 %v2470, 18
        %v2472 = vpop.permute.xlu0 %2471
        %2478 = vst [vmem:[#allocation1] ss:$4 sm:$0xff] %v2235
        %s2479 = scalar_lea.vmem [#allocation1], 1
        %2480 = vst [vmem:[%s2479] ss:$4 sm:$0xff] %v2243
        %s2481 = scalar_lea.vmem [#allocation1], 2
        %2482 = vst [vmem:[%s2481] ss:$4 sm:$0xff] %v2251
        %s2483 = scalar_lea.vmem [#allocation1], 3
        %2484 = vst [vmem:[%s2483] ss:$4 sm:$0xff] %v2259
        %v2485 = vld.sshfl [vmem:[#allocation1] sm:$0xff pattern:$0x73625140]
        %2486 = vrot.lane.b32.xlu0 %v2485, 20
        %v2487 = vpop.permute.xlu0 %2486
        %2493 = vst [vmem:[#allocation1] ss:$4 sm:$0xff] %v2237
        %s2494 = scalar_lea.vmem [#allocation1], 1
        %2495 = vst [vmem:[%s2494] ss:$4 sm:$0xff] %v2245
        %s2496 = scalar_lea.vmem [#allocation1], 2
        %2497 = vst [vmem:[%s2496] ss:$4 sm:$0xff] %v2253
        %s2498 = scalar_lea.vmem [#allocation1], 3
        %2499 = vst [vmem:[%s2498] ss:$4 sm:$0xff] %v2261
        %v2500 = vld.sshfl [vmem:[#allocation1] sm:$0xff pattern:$0x73625140]
        %2501 = vrot.lane.b32.xlu0 %v2500, 22
        %v2502 = vpop.permute.xlu0 %2501
        %2508 = vst [vmem:[#allocation1] ss:$4 sm:$0xff] %v2267
        %s2509 = scalar_lea.vmem [#allocation1], 1
        %2510 = vst [vmem:[%s2509] ss:$4 sm:$0xff] %v2275
        %s2511 = scalar_lea.vmem [#allocation1], 2
        %2512 = vst [vmem:[%s2511] ss:$4 sm:$0xff] %v2283
        %s2513 = scalar_lea.vmem [#allocation1], 3
        %2514 = vst [vmem:[%s2513] ss:$4 sm:$0xff] %v2291
        %v2515 = vld.sshfl [vmem:[#allocation1] sm:$0xff pattern:$0x73625140]
        %2516 = vrot.lane.b32.xlu0 %v2515, 24
        %v2517 = vpop.permute.xlu0 %2516
        %2523 = vst [vmem:[#allocation1] ss:$4 sm:$0xff] %v2269
        %s2524 = scalar_lea.vmem [#allocation1], 1
        %2525 = vst [vmem:[%s2524] ss:$4 sm:$0xff] %v2277
        %s2526 = scalar_lea.vmem [#allocation1], 2
        %2527 = vst [vmem:[%s2526] ss:$4 sm:$0xff] %v2285
        %s2528 = scalar_lea.vmem [#allocation1], 3
        %2529 = vst [vmem:[%s2528] ss:$4 sm:$0xff] %v2293
        %v2530 = vld.sshfl [vmem:[#allocation1] sm:$0xff pattern:$0x73625140]
        %2531 = vrot.lane.b32.xlu0 %v2530, 26
        %v2532 = vpop.permute.xlu0 %2531
        %2538 = vst [vmem:[#allocation1] ss:$4 sm:$0xff] %v2299
        %s2539 = scalar_lea.vmem [#allocation1], 1
        %2540 = vst [vmem:[%s2539] ss:$4 sm:$0xff] %v2307
        %s2541 = scalar_lea.vmem [#allocation1], 2
        %2542 = vst [vmem:[%s2541] ss:$4 sm:$0xff] %v2315
        %s2543 = scalar_lea.vmem [#allocation1], 3
        %2544 = vst [vmem:[%s2543] ss:$4 sm:$0xff] %v2323
        %v2545 = vld.sshfl [vmem:[#allocation1] sm:$0xff pattern:$0x73625140]
        %2546 = vrot.lane.b32.xlu0 %v2545, 28
        %v2547 = vpop.permute.xlu0 %2546
        %2553 = vst [vmem:[#allocation1] ss:$4 sm:$0xff] %v2301
        %s2554 = scalar_lea.vmem [#allocation1], 1
        %2555 = vst [vmem:[%s2554] ss:$4 sm:$0xff] %v2309
        %s2556 = scalar_lea.vmem [#allocation1], 2
        %2557 = vst [vmem:[%s2556] ss:$4 sm:$0xff] %v2317
        %s2558 = scalar_lea.vmem [#allocation1], 3
        %2559 = vst [vmem:[%s2558] ss:$4 sm:$0xff] %v2325
        %v2560 = vld.sshfl [vmem:[#allocation1] sm:$0xff pattern:$0x73625140]
        %2561 = vrot.lane.b32.xlu0 %v2560, 30
        %v2562 = vpop.permute.xlu0 %2561
        %v2564 = vsel %vm1855, %v2337, %v2352
        %v2565 = vsel %vm899, %v2564, %v2367
        %v2566 = vsel %vm1858, %v2565, %v2382
        %v2567 = vsel %vm918, %v2566, %v2397
        %v2568 = vsel %vm1861, %v2567, %v2412
        %v2569 = vsel %vm937, %v2568, %v2427
        %v2570 = vsel %vm1864, %v2569, %v2442
        %v2571 = vsel %vm956, %v2570, %v2457
        %v2572 = vsel %vm1867, %v2571, %v2472
        %v2573 = vsel %vm975, %v2572, %v2487
        %v2574 = vsel %vm1870, %v2573, %v2502
        %v2575 = vsel %vm994, %v2574, %v2517
        %v2576 = vsel %vm1873, %v2575, %v2532
        %v2577 = vsel %vm1013, %v2576, %v2547
        %v2578 = vsel %vm1876, %v2577, %v2562
        %2580 = vrot.lane.b32.xlu0 %v2578, 32
        %v2581 = vpop.permute.xlu0 %2580
        %v2583 = vsel %vm1032, %v1877, %v2581
        %vm2584 = vcmask 523264
        %2585 = vst.msk [vmem:[%s215] sm:$0xff] %vm2584, %v2583
        %2586 = vrot.lane.b32.xlu0 %v1228, 124
        %v2587 = vpop.permute.xlu0 %2586
        %2588 = vrot.lane.b32.xlu0 %v1264, 124
        %v2589 = vpop.permute.xlu0 %2588
        %2590 = vrot.lane.b32.xlu0 %v1265, 124
        %v2591 = vpop.permute.xlu0 %2590
        %2592 = vrot.lane.b32.xlu0 %v1266, 124
        %v2593 = vpop.permute.xlu0 %2592
        %2594 = vrot.lane.b32.xlu0 %v1229, 124
        %v2595 = vpop.permute.xlu0 %2594
        %2596 = vrot.lane.b32.xlu0 %v1267, 124
        %v2597 = vpop.permute.xlu0 %2596
        %2598 = vrot.lane.b32.xlu0 %v1268, 124
        %v2599 = vpop.permute.xlu0 %2598
        %2600 = vrot.lane.b32.xlu0 %v1269, 124
        %v2601 = vpop.permute.xlu0 %2600
        %2602 = vrot.lane.b32.xlu0 %v1270, 124
        %v2603 = vpop.permute.xlu0 %2602
        %2604 = vrot.lane.b32.xlu0 %v1271, 124
        %v2605 = vpop.permute.xlu0 %2604
        %2606 = vrot.lane.b32.xlu0 %v1272, 124
        %v2607 = vpop.permute.xlu0 %2606
        %2608 = vrot.lane.b32.xlu0 %v1231, 124
        %v2609 = vpop.permute.xlu0 %2608
        %2610 = vrot.lane.b32.xlu0 %v1273, 124
        %v2611 = vpop.permute.xlu0 %2610
        %2612 = vrot.lane.b32.xlu0 %v1274, 124
        %v2613 = vpop.permute.xlu0 %2612
        %2614 = vrot.lane.b32.xlu0 %v1275, 124
        %v2615 = vpop.permute.xlu0 %2614
        %2616 = vrot.lane.b32.xlu0 %v1232, 124
        %v2617 = vpop.permute.xlu0 %2616
        %2618 = vrot.lane.b32.xlu0 %v1276, 124
        %v2619 = vpop.permute.xlu0 %2618
        %2620 = vrot.lane.b32.xlu0 %v1277, 124
        %v2621 = vpop.permute.xlu0 %2620
        %2622 = vrot.lane.b32.xlu0 %v1233, 124
        %v2623 = vpop.permute.xlu0 %2622
        %2624 = vrot.lane.b32.xlu0 %v1278, 124
        %v2625 = vpop.permute.xlu0 %2624
        %2626 = vrot.lane.b32.xlu0 %v1279, 124
        %v2627 = vpop.permute.xlu0 %2626
        %2628 = vrot.lane.b32.xlu0 %v1280, 124
        %v2629 = vpop.permute.xlu0 %2628
        %2630 = vrot.lane.b32.xlu0 %v1234, 124
        %v2631 = vpop.permute.xlu0 %2630
        %2632 = vrot.lane.b32.xlu0 %v1281, 124
        %v2633 = vpop.permute.xlu0 %2632
        %2634 = vrot.lane.b32.xlu0 %v1282, 124
        %v2635 = vpop.permute.xlu0 %2634
        %2636 = vrot.lane.b32.xlu0 %v1235, 124
        %v2637 = vpop.permute.xlu0 %2636
        %2638 = vrot.lane.b32.xlu0 %v1283, 124
        %v2639 = vpop.permute.xlu0 %2638
        %2640 = vrot.lane.b32.xlu0 %v1284, 124
        %v2641 = vpop.permute.xlu0 %2640
        %2642 = vrot.lane.b32.xlu0 %v1285, 124
        %v2643 = vpop.permute.xlu0 %2642
        %2644 = vrot.lane.b32.xlu0 %v1236, 124
        %v2645 = vpop.permute.xlu0 %2644
        %2646 = vrot.lane.b32.xlu0 %v1286, 124
        %v2647 = vpop.permute.xlu0 %2646
        %2648 = vrot.lane.b32.xlu0 %v1287, 124
        %v2649 = vpop.permute.xlu0 %2648
        %2650 = vrot.lane.b32.xlu0 %v1237, 124
        %v2651 = vpop.permute.xlu0 %2650
        %2652 = vrot.lane.b32.xlu0 %v1288, 124
        %v2653 = vpop.permute.xlu0 %2652
        %2654 = vrot.lane.b32.xlu0 %v1289, 124
        %v2655 = vpop.permute.xlu0 %2654
        %2656 = vrot.lane.b32.xlu0 %v1290, 124
        %v2657 = vpop.permute.xlu0 %2656
        %2658 = vrot.lane.b32.xlu0 %v1238, 124
        %v2659 = vpop.permute.xlu0 %2658
        %2660 = vrot.lane.b32.xlu0 %v1291, 124
        %v2661 = vpop.permute.xlu0 %2660
        %2662 = vrot.lane.b32.xlu0 %v1292, 124
        %v2663 = vpop.permute.xlu0 %2662
        %2664 = vrot.lane.b32.xlu0 %v1293, 124
        %v2665 = vpop.permute.xlu0 %2664
        %2666 = vrot.lane.b32.xlu0 %v1294, 124
        %v2667 = vpop.permute.xlu0 %2666
        %2668 = vrot.lane.b32.xlu0 %v1295, 124
        %v2669 = vpop.permute.xlu0 %2668
        %2670 = vrot.lane.b32.xlu0 %v1296, 124
        %v2671 = vpop.permute.xlu0 %2670
        %2672 = vrot.lane.b32.xlu0 %v1240, 124
        %v2673 = vpop.permute.xlu0 %2672
        %2674 = vrot.lane.b32.xlu0 %v1297, 124
        %v2675 = vpop.permute.xlu0 %2674
        %2676 = vrot.lane.b32.xlu0 %v1298, 124
        %v2677 = vpop.permute.xlu0 %2676
        %2678 = vrot.lane.b32.xlu0 %v1299, 124
        %v2679 = vpop.permute.xlu0 %2678
        %2680 = vrot.lane.b32.xlu0 %v1241, 124
        %v2681 = vpop.permute.xlu0 %2680
        %2682 = vrot.lane.b32.xlu0 %v1300, 124
        %v2683 = vpop.permute.xlu0 %2682
        %2684 = vrot.lane.b32.xlu0 %v1301, 124
        %v2685 = vpop.permute.xlu0 %2684
        %2686 = vrot.lane.b32.xlu0 %v1242, 124
        %v2687 = vpop.permute.xlu0 %2686
        %2688 = vrot.lane.b32.xlu0 %v1302, 124
        %v2689 = vpop.permute.xlu0 %2688
        %2690 = vrot.lane.b32.xlu0 %v1303, 124
        %v2691 = vpop.permute.xlu0 %2690
        %2692 = vrot.lane.b32.xlu0 %v1304, 124
        %v2693 = vpop.permute.xlu0 %2692
        %2694 = vrot.lane.b32.xlu0 %v1243, 124
        %v2695 = vpop.permute.xlu0 %2694
        %2696 = vrot.lane.b32.xlu0 %v1305, 124
        %v2697 = vpop.permute.xlu0 %2696
        %2698 = vrot.lane.b32.xlu0 %v1306, 124
        %v2699 = vpop.permute.xlu0 %2698
        %2700 = vrot.lane.b32.xlu0 %v1244, 124
        %v2701 = vpop.permute.xlu0 %2700
        %2702 = vrot.lane.b32.xlu0 %v1307, 124
        %v2703 = vpop.permute.xlu0 %2702
        %2704 = vrot.lane.b32.xlu0 %v1308, 124
        %v2705 = vpop.permute.xlu0 %2704
        %2706 = vrot.lane.b32.xlu0 %v1309, 124
        %v2707 = vpop.permute.xlu0 %2706
        %2708 = vrot.lane.b32.xlu0 %v1245, 124
        %v2709 = vpop.permute.xlu0 %2708
        %2710 = vrot.lane.b32.xlu0 %v1310, 124
        %v2711 = vpop.permute.xlu0 %2710
        %2712 = vrot.lane.b32.xlu0 %v1311, 124
        %v2713 = vpop.permute.xlu0 %2712
        %v2778 = vrot.slane %v2603, 4
        %v2779 = vsel %vm1361, %v2778, %v2587
        %v2781 = vunpack.c.l.s4 1934713408
        %v2782 = vunpack.c.0.s8 %v2781
        %v2783 = vperm.slane %v2779, %v2782
        %v2784 = vrot.slane %v2783, 4
        %v2785 = vsel %vm1361, 0.0, %v2784
        %v2786 = vrot.slane %v2635, 4
        %v2787 = vsel %vm1361, %v2786, %v2619
        %v2789 = vunpack.c.l.s4 1934713408
        %v2790 = vunpack.c.0.s8 %v2789
        %v2791 = vperm.slane %v2787, %v2790
        %v2792 = vrot.slane %v2791, 4
        %v2793 = vsel %vm1361, 0.0, %v2792
        %v2794 = vrot.slane %v2667, 4
        %v2795 = vsel %vm1361, %v2794, %v2651
        %v2797 = vunpack.c.l.s4 1934713408
        %v2798 = vunpack.c.0.s8 %v2797
        %v2799 = vperm.slane %v2795, %v2798
        %v2800 = vrot.slane %v2799, 4
        %v2801 = vsel %vm1361, 0.0, %v2800
        %v2802 = vrot.slane %v2699, 4
        %v2803 = vsel %vm1361, %v2802, %v2683
        %v2805 = vunpack.c.l.s4 1934713408
        %v2806 = vunpack.c.0.s8 %v2805
        %v2807 = vperm.slane %v2803, %v2806
        %v2808 = vrot.slane %v2807, 4
        %v2809 = vsel %vm1361, 0.0, %v2808
        %v2810 = vrot.slane %v2605, 4
        %v2811 = vsel %vm1361, %v2810, %v2589
        %v2813 = vunpack.c.l.s4 1934713408
        %v2814 = vunpack.c.0.s8 %v2813
        %v2815 = vperm.slane %v2811, %v2814
        %v2816 = vrot.slane %v2815, 4
        %v2817 = vsel %vm1361, 0.0, %v2816
        %v2818 = vrot.slane %v2637, 4
        %v2819 = vsel %vm1361, %v2818, %v2621
        %v2821 = vunpack.c.l.s4 1934713408
        %v2822 = vunpack.c.0.s8 %v2821
        %v2823 = vperm.slane %v2819, %v2822
        %v2824 = vrot.slane %v2823, 4
        %v2825 = vsel %vm1361, 0.0, %v2824
        %v2826 = vrot.slane %v2669, 4
        %v2827 = vsel %vm1361, %v2826, %v2653
        %v2829 = vunpack.c.l.s4 1934713408
        %v2830 = vunpack.c.0.s8 %v2829
        %v2831 = vperm.slane %v2827, %v2830
        %v2832 = vrot.slane %v2831, 4
        %v2833 = vsel %vm1361, 0.0, %v2832
        %v2834 = vrot.slane %v2701, 4
        %v2835 = vsel %vm1361, %v2834, %v2685
        %v2837 = vunpack.c.l.s4 1934713408
        %v2838 = vunpack.c.0.s8 %v2837
        %v2839 = vperm.slane %v2835, %v2838
        %v2840 = vrot.slane %v2839, 4
        %v2841 = vsel %vm1361, 0.0, %v2840
        %v2842 = vrot.slane %v2607, 4
        %v2843 = vsel %vm1361, %v2842, %v2591
        %v2845 = vunpack.c.l.s4 1934713408
        %v2846 = vunpack.c.0.s8 %v2845
        %v2847 = vperm.slane %v2843, %v2846
        %v2848 = vrot.slane %v2847, 4
        %v2849 = vsel %vm1361, 0.0, %v2848
        %v2850 = vrot.slane %v2639, 4
        %v2851 = vsel %vm1361, %v2850, %v2623
        %v2853 = vunpack.c.l.s4 1934713408
        %v2854 = vunpack.c.0.s8 %v2853
        %v2855 = vperm.slane %v2851, %v2854
        %v2856 = vrot.slane %v2855, 4
        %v2857 = vsel %vm1361, 0.0, %v2856
        %v2858 = vrot.slane %v2671, 4
        %v2859 = vsel %vm1361, %v2858, %v2655
        %v2861 = vunpack.c.l.s4 1934713408
        %v2862 = vunpack.c.0.s8 %v2861
        %v2863 = vperm.slane %v2859, %v2862
        %v2864 = vrot.slane %v2863, 4
        %v2865 = vsel %vm1361, 0.0, %v2864
        %v2866 = vrot.slane %v2703, 4
        %v2867 = vsel %vm1361, %v2866, %v2687
        %v2869 = vunpack.c.l.s4 1934713408
        %v2870 = vunpack.c.0.s8 %v2869
        %v2871 = vperm.slane %v2867, %v2870
        %v2872 = vrot.slane %v2871, 4
        %v2873 = vsel %vm1361, 0.0, %v2872
        %v2874 = vrot.slane %v2609, 4
        %v2875 = vsel %vm1361, %v2874, %v2593
        %v2877 = vunpack.c.l.s4 1934713408
        %v2878 = vunpack.c.0.s8 %v2877
        %v2879 = vperm.slane %v2875, %v2878
        %v2880 = vrot.slane %v2879, 4
        %v2881 = vsel %vm1361, 0.0, %v2880
        %v2882 = vrot.slane %v2641, 4
        %v2883 = vsel %vm1361, %v2882, %v2625
        %v2885 = vunpack.c.l.s4 1934713408
        %v2886 = vunpack.c.0.s8 %v2885
        %v2887 = vperm.slane %v2883, %v2886
        %v2888 = vrot.slane %v2887, 4
        %v2889 = vsel %vm1361, 0.0, %v2888
        %v2890 = vrot.slane %v2673, 4
        %v2891 = vsel %vm1361, %v2890, %v2657
        %v2893 = vunpack.c.l.s4 1934713408
        %v2894 = vunpack.c.0.s8 %v2893
        %v2895 = vperm.slane %v2891, %v2894
        %v2896 = vrot.slane %v2895, 4
        %v2897 = vsel %vm1361, 0.0, %v2896
        %v2898 = vrot.slane %v2705, 4
        %v2899 = vsel %vm1361, %v2898, %v2689
        %v2901 = vunpack.c.l.s4 1934713408
        %v2902 = vunpack.c.0.s8 %v2901
        %v2903 = vperm.slane %v2899, %v2902
        %v2904 = vrot.slane %v2903, 4
        %v2905 = vsel %vm1361, 0.0, %v2904
        %v2906 = vrot.slane %v2611, 4
        %v2907 = vsel %vm1361, %v2906, %v2595
        %v2909 = vunpack.c.l.s4 1934713408
        %v2910 = vunpack.c.0.s8 %v2909
        %v2911 = vperm.slane %v2907, %v2910
        %v2912 = vrot.slane %v2911, 4
        %v2913 = vsel %vm1361, 0.0, %v2912
        %v2914 = vrot.slane %v2643, 4
        %v2915 = vsel %vm1361, %v2914, %v2627
        %v2917 = vunpack.c.l.s4 1934713408
        %v2918 = vunpack.c.0.s8 %v2917
        %v2919 = vperm.slane %v2915, %v2918
        %v2920 = vrot.slane %v2919, 4
        %v2921 = vsel %vm1361, 0.0, %v2920
        %v2922 = vrot.slane %v2675, 4
        %v2923 = vsel %vm1361, %v2922, %v2659
        %v2925 = vunpack.c.l.s4 1934713408
        %v2926 = vunpack.c.0.s8 %v2925
        %v2927 = vperm.slane %v2923, %v2926
        %v2928 = vrot.slane %v2927, 4
        %v2929 = vsel %vm1361, 0.0, %v2928
        %v2930 = vrot.slane %v2707, 4
        %v2931 = vsel %vm1361, %v2930, %v2691
        %v2933 = vunpack.c.l.s4 1934713408
        %v2934 = vunpack.c.0.s8 %v2933
        %v2935 = vperm.slane %v2931, %v2934
        %v2936 = vrot.slane %v2935, 4
        %v2937 = vsel %vm1361, 0.0, %v2936
        %v2938 = vrot.slane %v2613, 4
        %v2939 = vsel %vm1361, %v2938, %v2597
        %v2941 = vunpack.c.l.s4 1934713408
        %v2942 = vunpack.c.0.s8 %v2941
        %v2943 = vperm.slane %v2939, %v2942
        %v2944 = vrot.slane %v2943, 4
        %v2945 = vsel %vm1361, 0.0, %v2944
        %v2946 = vrot.slane %v2645, 4
        %v2947 = vsel %vm1361, %v2946, %v2629
        %v2949 = vunpack.c.l.s4 1934713408
        %v2950 = vunpack.c.0.s8 %v2949
        %v2951 = vperm.slane %v2947, %v2950
        %v2952 = vrot.slane %v2951, 4
        %v2953 = vsel %vm1361, 0.0, %v2952
        %v2954 = vrot.slane %v2677, 4
        %v2955 = vsel %vm1361, %v2954, %v2661
        %v2957 = vunpack.c.l.s4 1934713408
        %v2958 = vunpack.c.0.s8 %v2957
        %v2959 = vperm.slane %v2955, %v2958
        %v2960 = vrot.slane %v2959, 4
        %v2961 = vsel %vm1361, 0.0, %v2960
        %v2962 = vrot.slane %v2709, 4
        %v2963 = vsel %vm1361, %v2962, %v2693
        %v2965 = vunpack.c.l.s4 1934713408
        %v2966 = vunpack.c.0.s8 %v2965
        %v2967 = vperm.slane %v2963, %v2966
        %v2968 = vrot.slane %v2967, 4
        %v2969 = vsel %vm1361, 0.0, %v2968
        %v2970 = vrot.slane %v2615, 4
        %v2971 = vsel %vm1361, %v2970, %v2599
        %v2973 = vunpack.c.l.s4 1934713408
        %v2974 = vunpack.c.0.s8 %v2973
        %v2975 = vperm.slane %v2971, %v2974
        %v2976 = vrot.slane %v2975, 4
        %v2977 = vsel %vm1361, 0.0, %v2976
        %v2978 = vrot.slane %v2647, 4
        %v2979 = vsel %vm1361, %v2978, %v2631
        %v2981 = vunpack.c.l.s4 1934713408
        %v2982 = vunpack.c.0.s8 %v2981
        %v2983 = vperm.slane %v2979, %v2982
        %v2984 = vrot.slane %v2983, 4
        %v2985 = vsel %vm1361, 0.0, %v2984
        %v2986 = vrot.slane %v2679, 4
        %v2987 = vsel %vm1361, %v2986, %v2663
        %v2989 = vunpack.c.l.s4 1934713408
        %v2990 = vunpack.c.0.s8 %v2989
        %v2991 = vperm.slane %v2987, %v2990
        %v2992 = vrot.slane %v2991, 4
        %v2993 = vsel %vm1361, 0.0, %v2992
        %v2994 = vrot.slane %v2711, 4
        %v2995 = vsel %vm1361, %v2994, %v2695
        %v2997 = vunpack.c.l.s4 1934713408
        %v2998 = vunpack.c.0.s8 %v2997
        %v2999 = vperm.slane %v2995, %v2998
        %v3000 = vrot.slane %v2999, 4
        %v3001 = vsel %vm1361, 0.0, %v3000
        %v3002 = vrot.slane %v2617, 4
        %v3003 = vsel %vm1361, %v3002, %v2601
        %v3005 = vunpack.c.l.s4 1934713408
        %v3006 = vunpack.c.0.s8 %v3005
        %v3007 = vperm.slane %v3003, %v3006
        %v3008 = vrot.slane %v3007, 4
        %v3009 = vsel %vm1361, 0.0, %v3008
        %v3010 = vrot.slane %v2649, 4
        %v3011 = vsel %vm1361, %v3010, %v2633
        %v3013 = vunpack.c.l.s4 1934713408
        %v3014 = vunpack.c.0.s8 %v3013
        %v3015 = vperm.slane %v3011, %v3014
        %v3016 = vrot.slane %v3015, 4
        %v3017 = vsel %vm1361, 0.0, %v3016
        %v3018 = vrot.slane %v2681, 4
        %v3019 = vsel %vm1361, %v3018, %v2665
        %v3021 = vunpack.c.l.s4 1934713408
        %v3022 = vunpack.c.0.s8 %v3021
        %v3023 = vperm.slane %v3019, %v3022
        %v3024 = vrot.slane %v3023, 4
        %v3025 = vsel %vm1361, 0.0, %v3024
        %v3026 = vrot.slane %v2713, 4
        %v3027 = vsel %vm1361, %v3026, %v2697
        %v3029 = vunpack.c.l.s4 1934713408
        %v3030 = vunpack.c.0.s8 %v3029
        %v3031 = vperm.slane %v3027, %v3030
        %v3032 = vrot.slane %v3031, 4
        %v3033 = vsel %vm1361, 0.0, %v3032
        %3038 = vst [vmem:[#allocation1] ss:$4 sm:$0xff] %v2783
        %s3039 = scalar_lea.vmem [#allocation1], 1
        %3040 = vst [vmem:[%s3039] ss:$4 sm:$0xff] %v2791
        %s3041 = scalar_lea.vmem [#allocation1], 2
        %3042 = vst [vmem:[%s3041] ss:$4 sm:$0xff] %v2799
        %s3043 = scalar_lea.vmem [#allocation1], 3
        %3044 = vst [vmem:[%s3043] ss:$4 sm:$0xff] %v2807
        %v3045 = vld.sshfl [vmem:[#allocation1] sm:$0xff pattern:$0x73625140]
        %3051 = vst [vmem:[#allocation1] ss:$4 sm:$0xff] %v2785
        %s3052 = scalar_lea.vmem [#allocation1], 1
        %3053 = vst [vmem:[%s3052] ss:$4 sm:$0xff] %v2793
        %s3054 = scalar_lea.vmem [#allocation1], 2
        %3055 = vst [vmem:[%s3054] ss:$4 sm:$0xff] %v2801
        %s3056 = scalar_lea.vmem [#allocation1], 3
        %3057 = vst [vmem:[%s3056] ss:$4 sm:$0xff] %v2809
        %v3058 = vld.sshfl [vmem:[#allocation1] sm:$0xff pattern:$0x73625140]
        %3059 = vrot.lane.b32.xlu0 %v3058, 2
        %v3060 = vpop.permute.xlu0 %3059
        %3066 = vst [vmem:[#allocation1] ss:$4 sm:$0xff] %v2815
        %s3067 = scalar_lea.vmem [#allocation1], 1
        %3068 = vst [vmem:[%s3067] ss:$4 sm:$0xff] %v2823
        %s3069 = scalar_lea.vmem [#allocation1], 2
        %3070 = vst [vmem:[%s3069] ss:$4 sm:$0xff] %v2831
        %s3071 = scalar_lea.vmem [#allocation1], 3
        %3072 = vst [vmem:[%s3071] ss:$4 sm:$0xff] %v2839
        %v3073 = vld.sshfl [vmem:[#allocation1] sm:$0xff pattern:$0x73625140]
        %3074 = vrot.lane.b32.xlu0 %v3073, 4
        %v3075 = vpop.permute.xlu0 %3074
        %3081 = vst [vmem:[#allocation1] ss:$4 sm:$0xff] %v2817
        %s3082 = scalar_lea.vmem [#allocation1], 1
        %3083 = vst [vmem:[%s3082] ss:$4 sm:$0xff] %v2825
        %s3084 = scalar_lea.vmem [#allocation1], 2
        %3085 = vst [vmem:[%s3084] ss:$4 sm:$0xff] %v2833
        %s3086 = scalar_lea.vmem [#allocation1], 3
        %3087 = vst [vmem:[%s3086] ss:$4 sm:$0xff] %v2841
        %v3088 = vld.sshfl [vmem:[#allocation1] sm:$0xff pattern:$0x73625140]
        %3089 = vrot.lane.b32.xlu0 %v3088, 6
        %v3090 = vpop.permute.xlu0 %3089
        %3096 = vst [vmem:[#allocation1] ss:$4 sm:$0xff] %v2847
        %s3097 = scalar_lea.vmem [#allocation1], 1
        %3098 = vst [vmem:[%s3097] ss:$4 sm:$0xff] %v2855
        %s3099 = scalar_lea.vmem [#allocation1], 2
        %3100 = vst [vmem:[%s3099] ss:$4 sm:$0xff] %v2863
        %s3101 = scalar_lea.vmem [#allocation1], 3
        %3102 = vst [vmem:[%s3101] ss:$4 sm:$0xff] %v2871
        %v3103 = vld.sshfl [vmem:[#allocation1] sm:$0xff pattern:$0x73625140]
        %3104 = vrot.lane.b32.xlu0 %v3103, 8
        %v3105 = vpop.permute.xlu0 %3104
        %3111 = vst [vmem:[#allocation1] ss:$4 sm:$0xff] %v2849
        %s3112 = scalar_lea.vmem [#allocation1], 1
        %3113 = vst [vmem:[%s3112] ss:$4 sm:$0xff] %v2857
        %s3114 = scalar_lea.vmem [#allocation1], 2
        %3115 = vst [vmem:[%s3114] ss:$4 sm:$0xff] %v2865
        %s3116 = scalar_lea.vmem [#allocation1], 3
        %3117 = vst [vmem:[%s3116] ss:$4 sm:$0xff] %v2873
        %v3118 = vld.sshfl [vmem:[#allocation1] sm:$0xff pattern:$0x73625140]
        %3119 = vrot.lane.b32.xlu0 %v3118, 10
        %v3120 = vpop.permute.xlu0 %3119
        %3126 = vst [vmem:[#allocation1] ss:$4 sm:$0xff] %v2879
        %s3127 = scalar_lea.vmem [#allocation1], 1
        %3128 = vst [vmem:[%s3127] ss:$4 sm:$0xff] %v2887
        %s3129 = scalar_lea.vmem [#allocation1], 2
        %3130 = vst [vmem:[%s3129] ss:$4 sm:$0xff] %v2895
        %s3131 = scalar_lea.vmem [#allocation1], 3
        %3132 = vst [vmem:[%s3131] ss:$4 sm:$0xff] %v2903
        %v3133 = vld.sshfl [vmem:[#allocation1] sm:$0xff pattern:$0x73625140]
        %3134 = vrot.lane.b32.xlu0 %v3133, 12
        %v3135 = vpop.permute.xlu0 %3134
        %3141 = vst [vmem:[#allocation1] ss:$4 sm:$0xff] %v2881
        %s3142 = scalar_lea.vmem [#allocation1], 1
        %3143 = vst [vmem:[%s3142] ss:$4 sm:$0xff] %v2889
        %s3144 = scalar_lea.vmem [#allocation1], 2
        %3145 = vst [vmem:[%s3144] ss:$4 sm:$0xff] %v2897
        %s3146 = scalar_lea.vmem [#allocation1], 3
        %3147 = vst [vmem:[%s3146] ss:$4 sm:$0xff] %v2905
        %v3148 = vld.sshfl [vmem:[#allocation1] sm:$0xff pattern:$0x73625140]
        %3149 = vrot.lane.b32.xlu0 %v3148, 14
        %v3150 = vpop.permute.xlu0 %3149
        %3156 = vst [vmem:[#allocation1] ss:$4 sm:$0xff] %v2911
        %s3157 = scalar_lea.vmem [#allocation1], 1
        %3158 = vst [vmem:[%s3157] ss:$4 sm:$0xff] %v2919
        %s3159 = scalar_lea.vmem [#allocation1], 2
        %3160 = vst [vmem:[%s3159] ss:$4 sm:$0xff] %v2927
        %s3161 = scalar_lea.vmem [#allocation1], 3
        %3162 = vst [vmem:[%s3161] ss:$4 sm:$0xff] %v2935
        %v3163 = vld.sshfl [vmem:[#allocation1] sm:$0xff pattern:$0x73625140]
        %3164 = vrot.lane.b32.xlu0 %v3163, 16
        %v3165 = vpop.permute.xlu0 %3164
        %3171 = vst [vmem:[#allocation1] ss:$4 sm:$0xff] %v2913
        %s3172 = scalar_lea.vmem [#allocation1], 1
        %3173 = vst [vmem:[%s3172] ss:$4 sm:$0xff] %v2921
        %s3174 = scalar_lea.vmem [#allocation1], 2
        %3175 = vst [vmem:[%s3174] ss:$4 sm:$0xff] %v2929
        %s3176 = scalar_lea.vmem [#allocation1], 3
        %3177 = vst [vmem:[%s3176] ss:$4 sm:$0xff] %v2937
        %v3178 = vld.sshfl [vmem:[#allocation1] sm:$0xff pattern:$0x73625140]
        %3179 = vrot.lane.b32.xlu0 %v3178, 18
        %v3180 = vpop.permute.xlu0 %3179
        %3186 = vst [vmem:[#allocation1] ss:$4 sm:$0xff] %v2943
        %s3187 = scalar_lea.vmem [#allocation1], 1
        %3188 = vst [vmem:[%s3187] ss:$4 sm:$0xff] %v2951
        %s3189 = scalar_lea.vmem [#allocation1], 2
        %3190 = vst [vmem:[%s3189] ss:$4 sm:$0xff] %v2959
        %s3191 = scalar_lea.vmem [#allocation1], 3
        %3192 = vst [vmem:[%s3191] ss:$4 sm:$0xff] %v2967
        %v3193 = vld.sshfl [vmem:[#allocation1] sm:$0xff pattern:$0x73625140]
        %3194 = vrot.lane.b32.xlu0 %v3193, 20
        %v3195 = vpop.permute.xlu0 %3194
        %3201 = vst [vmem:[#allocation1] ss:$4 sm:$0xff] %v2945
        %s3202 = scalar_lea.vmem [#allocation1], 1
        %3203 = vst [vmem:[%s3202] ss:$4 sm:$0xff] %v2953
        %s3204 = scalar_lea.vmem [#allocation1], 2
        %3205 = vst [vmem:[%s3204] ss:$4 sm:$0xff] %v2961
        %s3206 = scalar_lea.vmem [#allocation1], 3
        %3207 = vst [vmem:[%s3206] ss:$4 sm:$0xff] %v2969
        %v3208 = vld.sshfl [vmem:[#allocation1] sm:$0xff pattern:$0x73625140]
        %3209 = vrot.lane.b32.xlu0 %v3208, 22
        %v3210 = vpop.permute.xlu0 %3209
        %3216 = vst [vmem:[#allocation1] ss:$4 sm:$0xff] %v2975
        %s3217 = scalar_lea.vmem [#allocation1], 1
        %3218 = vst [vmem:[%s3217] ss:$4 sm:$0xff] %v2983
        %s3219 = scalar_lea.vmem [#allocation1], 2
        %3220 = vst [vmem:[%s3219] ss:$4 sm:$0xff] %v2991
        %s3221 = scalar_lea.vmem [#allocation1], 3
        %3222 = vst [vmem:[%s3221] ss:$4 sm:$0xff] %v2999
        %v3223 = vld.sshfl [vmem:[#allocation1] sm:$0xff pattern:$0x73625140]
        %3224 = vrot.lane.b32.xlu0 %v3223, 24
        %v3225 = vpop.permute.xlu0 %3224
        %3231 = vst [vmem:[#allocation1] ss:$4 sm:$0xff] %v2977
        %s3232 = scalar_lea.vmem [#allocation1], 1
        %3233 = vst [vmem:[%s3232] ss:$4 sm:$0xff] %v2985
        %s3234 = scalar_lea.vmem [#allocation1], 2
        %3235 = vst [vmem:[%s3234] ss:$4 sm:$0xff] %v2993
        %s3236 = scalar_lea.vmem [#allocation1], 3
        %3237 = vst [vmem:[%s3236] ss:$4 sm:$0xff] %v3001
        %v3238 = vld.sshfl [vmem:[#allocation1] sm:$0xff pattern:$0x73625140]
        %3239 = vrot.lane.b32.xlu0 %v3238, 26
        %v3240 = vpop.permute.xlu0 %3239
        %3246 = vst [vmem:[#allocation1] ss:$4 sm:$0xff] %v3007
        %s3247 = scalar_lea.vmem [#allocation1], 1
        %3248 = vst [vmem:[%s3247] ss:$4 sm:$0xff] %v3015
        %s3249 = scalar_lea.vmem [#allocation1], 2
        %3250 = vst [vmem:[%s3249] ss:$4 sm:$0xff] %v3023
        %s3251 = scalar_lea.vmem [#allocation1], 3
        %3252 = vst [vmem:[%s3251] ss:$4 sm:$0xff] %v3031
        %v3253 = vld.sshfl [vmem:[#allocation1] sm:$0xff pattern:$0x73625140]
        %3254 = vrot.lane.b32.xlu0 %v3253, 28
        %v3255 = vpop.permute.xlu0 %3254
        %3261 = vst [vmem:[#allocation1] ss:$4 sm:$0xff] %v3009
        %s3262 = scalar_lea.vmem [#allocation1], 1
        %3263 = vst [vmem:[%s3262] ss:$4 sm:$0xff] %v3017
        %s3264 = scalar_lea.vmem [#allocation1], 2
        %3265 = vst [vmem:[%s3264] ss:$4 sm:$0xff] %v3025
        %s3266 = scalar_lea.vmem [#allocation1], 3
        %3267 = vst [vmem:[%s3266] ss:$4 sm:$0xff] %v3033
        %v3268 = vld.sshfl [vmem:[#allocation1] sm:$0xff pattern:$0x73625140]
        %3269 = vrot.lane.b32.xlu0 %v3268, 30
        %v3270 = vpop.permute.xlu0 %3269
        %v3272 = vsel %vm1855, %v3045, %v3060
        %v3273 = vsel %vm899, %v3272, %v3075
        %v3274 = vsel %vm1858, %v3273, %v3090
        %v3275 = vsel %vm918, %v3274, %v3105
        %v3276 = vsel %vm1861, %v3275, %v3120
        %v3277 = vsel %vm937, %v3276, %v3135
        %v3278 = vsel %vm1864, %v3277, %v3150
        %v3279 = vsel %vm956, %v3278, %v3165
        %v3280 = vsel %vm1867, %v3279, %v3180
        %v3281 = vsel %vm975, %v3280, %v3195
        %v3282 = vsel %vm1870, %v3281, %v3210
        %v3283 = vsel %vm994, %v3282, %v3225
        %v3284 = vsel %vm1873, %v3283, %v3240
        %v3285 = vsel %vm1013, %v3284, %v3255
        %v3286 = vsel %vm1876, %v3285, %v3270
        %3287 = vrot.lane.b32.xlu0 %v1228, 122
        %v3288 = vpop.permute.xlu0 %3287
        %3289 = vrot.lane.b32.xlu0 %v1264, 122
        %v3290 = vpop.permute.xlu0 %3289
        %3291 = vrot.lane.b32.xlu0 %v1265, 122
        %v3292 = vpop.permute.xlu0 %3291
        %3293 = vrot.lane.b32.xlu0 %v1266, 122
        %v3294 = vpop.permute.xlu0 %3293
        %3295 = vrot.lane.b32.xlu0 %v1229, 122
        %v3296 = vpop.permute.xlu0 %3295
        %3297 = vrot.lane.b32.xlu0 %v1267, 122
        %v3298 = vpop.permute.xlu0 %3297
        %3299 = vrot.lane.b32.xlu0 %v1268, 122
        %v3300 = vpop.permute.xlu0 %3299
        %3301 = vrot.lane.b32.xlu0 %v1269, 122
        %v3302 = vpop.permute.xlu0 %3301
        %3303 = vrot.lane.b32.xlu0 %v1270, 122
        %v3304 = vpop.permute.xlu0 %3303
        %3305 = vrot.lane.b32.xlu0 %v1271, 122
        %v3306 = vpop.permute.xlu0 %3305
        %3307 = vrot.lane.b32.xlu0 %v1272, 122
        %v3308 = vpop.permute.xlu0 %3307
        %3309 = vrot.lane.b32.xlu0 %v1231, 122
        %v3310 = vpop.permute.xlu0 %3309
        %3311 = vrot.lane.b32.xlu0 %v1273, 122
        %v3312 = vpop.permute.xlu0 %3311
        %3313 = vrot.lane.b32.xlu0 %v1274, 122
        %v3314 = vpop.permute.xlu0 %3313
        %3315 = vrot.lane.b32.xlu0 %v1275, 122
        %v3316 = vpop.permute.xlu0 %3315
        %3317 = vrot.lane.b32.xlu0 %v1232, 122
        %v3318 = vpop.permute.xlu0 %3317
        %3319 = vrot.lane.b32.xlu0 %v1276, 122
        %v3320 = vpop.permute.xlu0 %3319
        %3321 = vrot.lane.b32.xlu0 %v1277, 122
        %v3322 = vpop.permute.xlu0 %3321
        %3323 = vrot.lane.b32.xlu0 %v1233, 122
        %v3324 = vpop.permute.xlu0 %3323
        %3325 = vrot.lane.b32.xlu0 %v1278, 122
        %v3326 = vpop.permute.xlu0 %3325
        %3327 = vrot.lane.b32.xlu0 %v1279, 122
        %v3328 = vpop.permute.xlu0 %3327
        %3329 = vrot.lane.b32.xlu0 %v1280, 122
        %v3330 = vpop.permute.xlu0 %3329
        %3331 = vrot.lane.b32.xlu0 %v1234, 122
        %v3332 = vpop.permute.xlu0 %3331
        %3333 = vrot.lane.b32.xlu0 %v1281, 122
        %v3334 = vpop.permute.xlu0 %3333
        %3335 = vrot.lane.b32.xlu0 %v1282, 122
        %v3336 = vpop.permute.xlu0 %3335
        %3337 = vrot.lane.b32.xlu0 %v1235, 122
        %v3338 = vpop.permute.xlu0 %3337
        %3339 = vrot.lane.b32.xlu0 %v1283, 122
        %v3340 = vpop.permute.xlu0 %3339
        %3341 = vrot.lane.b32.xlu0 %v1284, 122
        %v3342 = vpop.permute.xlu0 %3341
        %3343 = vrot.lane.b32.xlu0 %v1285, 122
        %v3344 = vpop.permute.xlu0 %3343
        %3345 = vrot.lane.b32.xlu0 %v1236, 122
        %v3346 = vpop.permute.xlu0 %3345
        %3347 = vrot.lane.b32.xlu0 %v1286, 122
        %v3348 = vpop.permute.xlu0 %3347
        %3349 = vrot.lane.b32.xlu0 %v1287, 122
        %v3350 = vpop.permute.xlu0 %3349
        %3351 = vrot.lane.b32.xlu0 %v1237, 122
        %v3352 = vpop.permute.xlu0 %3351
        %3353 = vrot.lane.b32.xlu0 %v1288, 122
        %v3354 = vpop.permute.xlu0 %3353
        %3355 = vrot.lane.b32.xlu0 %v1289, 122
        %v3356 = vpop.permute.xlu0 %3355
        %3357 = vrot.lane.b32.xlu0 %v1290, 122
        %v3358 = vpop.permute.xlu0 %3357
        %3359 = vrot.lane.b32.xlu0 %v1238, 122
        %v3360 = vpop.permute.xlu0 %3359
        %3361 = vrot.lane.b32.xlu0 %v1291, 122
        %v3362 = vpop.permute.xlu0 %3361
        %3363 = vrot.lane.b32.xlu0 %v1292, 122
        %v3364 = vpop.permute.xlu0 %3363
        %3365 = vrot.lane.b32.xlu0 %v1293, 122
        %v3366 = vpop.permute.xlu0 %3365
        %3367 = vrot.lane.b32.xlu0 %v1294, 122
        %v3368 = vpop.permute.xlu0 %3367
        %3369 = vrot.lane.b32.xlu0 %v1295, 122
        %v3370 = vpop.permute.xlu0 %3369
        %3371 = vrot.lane.b32.xlu0 %v1296, 122
        %v3372 = vpop.permute.xlu0 %3371
        %3373 = vrot.lane.b32.xlu0 %v1240, 122
        %v3374 = vpop.permute.xlu0 %3373
        %3375 = vrot.lane.b32.xlu0 %v1297, 122
        %v3376 = vpop.permute.xlu0 %3375
        %3377 = vrot.lane.b32.xlu0 %v1298, 122
        %v3378 = vpop.permute.xlu0 %3377
        %3379 = vrot.lane.b32.xlu0 %v1299, 122
        %v3380 = vpop.permute.xlu0 %3379
        %3381 = vrot.lane.b32.xlu0 %v1241, 122
        %v3382 = vpop.permute.xlu0 %3381
        %3383 = vrot.lane.b32.xlu0 %v1300, 122
        %v3384 = vpop.permute.xlu0 %3383
        %3385 = vrot.lane.b32.xlu0 %v1301, 122
        %v3386 = vpop.permute.xlu0 %3385
        %3387 = vrot.lane.b32.xlu0 %v1242, 122
        %v3388 = vpop.permute.xlu0 %3387
        %3389 = vrot.lane.b32.xlu0 %v1302, 122
        %v3390 = vpop.permute.xlu0 %3389
        %3391 = vrot.lane.b32.xlu0 %v1303, 122
        %v3392 = vpop.permute.xlu0 %3391
        %3393 = vrot.lane.b32.xlu0 %v1304, 122
        %v3394 = vpop.permute.xlu0 %3393
        %3395 = vrot.lane.b32.xlu0 %v1243, 122
        %v3396 = vpop.permute.xlu0 %3395
        %3397 = vrot.lane.b32.xlu0 %v1305, 122
        %v3398 = vpop.permute.xlu0 %3397
        %3399 = vrot.lane.b32.xlu0 %v1306, 122
        %v3400 = vpop.permute.xlu0 %3399
        %3401 = vrot.lane.b32.xlu0 %v1244, 122
        %v3402 = vpop.permute.xlu0 %3401
        %3403 = vrot.lane.b32.xlu0 %v1307, 122
        %v3404 = vpop.permute.xlu0 %3403
        %3405 = vrot.lane.b32.xlu0 %v1308, 122
        %v3406 = vpop.permute.xlu0 %3405
        %3407 = vrot.lane.b32.xlu0 %v1309, 122
        %v3408 = vpop.permute.xlu0 %3407
        %3409 = vrot.lane.b32.xlu0 %v1245, 122
        %v3410 = vpop.permute.xlu0 %3409
        %3411 = vrot.lane.b32.xlu0 %v1310, 122
        %v3412 = vpop.permute.xlu0 %3411
        %3413 = vrot.lane.b32.xlu0 %v1311, 122
        %v3414 = vpop.permute.xlu0 %3413
        %v3479 = vrot.slane %v3304, 4
        %v3480 = vsel %vm1361, %v3479, %v3288
        %v3482 = vunpack.c.l.s4 1934713408
        %v3483 = vunpack.c.0.s8 %v3482
        %v3484 = vperm.slane %v3480, %v3483
        %v3485 = vrot.slane %v3484, 4
        %v3486 = vsel %vm1361, 0.0, %v3485
        %v3487 = vrot.slane %v3336, 4
        %v3488 = vsel %vm1361, %v3487, %v3320
        %v3490 = vunpack.c.l.s4 1934713408
        %v3491 = vunpack.c.0.s8 %v3490
        %v3492 = vperm.slane %v3488, %v3491
        %v3493 = vrot.slane %v3492, 4
        %v3494 = vsel %vm1361, 0.0, %v3493
        %v3495 = vrot.slane %v3368, 4
        %v3496 = vsel %vm1361, %v3495, %v3352
        %v3498 = vunpack.c.l.s4 1934713408
        %v3499 = vunpack.c.0.s8 %v3498
        %v3500 = vperm.slane %v3496, %v3499
        %v3501 = vrot.slane %v3500, 4
        %v3502 = vsel %vm1361, 0.0, %v3501
        %v3503 = vrot.slane %v3400, 4
        %v3504 = vsel %vm1361, %v3503, %v3384
        %v3506 = vunpack.c.l.s4 1934713408
        %v3507 = vunpack.c.0.s8 %v3506
        %v3508 = vperm.slane %v3504, %v3507
        %v3509 = vrot.slane %v3508, 4
        %v3510 = vsel %vm1361, 0.0, %v3509
        %v3511 = vrot.slane %v3306, 4
        %v3512 = vsel %vm1361, %v3511, %v3290
        %v3514 = vunpack.c.l.s4 1934713408
        %v3515 = vunpack.c.0.s8 %v3514
        %v3516 = vperm.slane %v3512, %v3515
        %v3517 = vrot.slane %v3516, 4
        %v3518 = vsel %vm1361, 0.0, %v3517
        %v3519 = vrot.slane %v3338, 4
        %v3520 = vsel %vm1361, %v3519, %v3322
        %v3522 = vunpack.c.l.s4 1934713408
        %v3523 = vunpack.c.0.s8 %v3522
        %v3524 = vperm.slane %v3520, %v3523
        %v3525 = vrot.slane %v3524, 4
        %v3526 = vsel %vm1361, 0.0, %v3525
        %v3527 = vrot.slane %v3370, 4
        %v3528 = vsel %vm1361, %v3527, %v3354
        %v3530 = vunpack.c.l.s4 1934713408
        %v3531 = vunpack.c.0.s8 %v3530
        %v3532 = vperm.slane %v3528, %v3531
        %v3533 = vrot.slane %v3532, 4
        %v3534 = vsel %vm1361, 0.0, %v3533
        %v3535 = vrot.slane %v3402, 4
        %v3536 = vsel %vm1361, %v3535, %v3386
        %v3538 = vunpack.c.l.s4 1934713408
        %v3539 = vunpack.c.0.s8 %v3538
        %v3540 = vperm.slane %v3536, %v3539
        %v3541 = vrot.slane %v3540, 4
        %v3542 = vsel %vm1361, 0.0, %v3541
        %v3543 = vrot.slane %v3308, 4
        %v3544 = vsel %vm1361, %v3543, %v3292
        %v3546 = vunpack.c.l.s4 1934713408
        %v3547 = vunpack.c.0.s8 %v3546
        %v3548 = vperm.slane %v3544, %v3547
        %v3549 = vrot.slane %v3548, 4
        %v3550 = vsel %vm1361, 0.0, %v3549
        %v3551 = vrot.slane %v3340, 4
        %v3552 = vsel %vm1361, %v3551, %v3324
        %v3554 = vunpack.c.l.s4 1934713408
        %v3555 = vunpack.c.0.s8 %v3554
        %v3556 = vperm.slane %v3552, %v3555
        %v3557 = vrot.slane %v3556, 4
        %v3558 = vsel %vm1361, 0.0, %v3557
        %v3559 = vrot.slane %v3372, 4
        %v3560 = vsel %vm1361, %v3559, %v3356
        %v3562 = vunpack.c.l.s4 1934713408
        %v3563 = vunpack.c.0.s8 %v3562
        %v3564 = vperm.slane %v3560, %v3563
        %v3565 = vrot.slane %v3564, 4
        %v3566 = vsel %vm1361, 0.0, %v3565
        %v3567 = vrot.slane %v3404, 4
        %v3568 = vsel %vm1361, %v3567, %v3388
        %v3570 = vunpack.c.l.s4 1934713408
        %v3571 = vunpack.c.0.s8 %v3570
        %v3572 = vperm.slane %v3568, %v3571
        %v3573 = vrot.slane %v3572, 4
        %v3574 = vsel %vm1361, 0.0, %v3573
        %v3575 = vrot.slane %v3310, 4
        %v3576 = vsel %vm1361, %v3575, %v3294
        %v3578 = vunpack.c.l.s4 1934713408
        %v3579 = vunpack.c.0.s8 %v3578
        %v3580 = vperm.slane %v3576, %v3579
        %v3581 = vrot.slane %v3580, 4
        %v3582 = vsel %vm1361, 0.0, %v3581
        %v3583 = vrot.slane %v3342, 4
        %v3584 = vsel %vm1361, %v3583, %v3326
        %v3586 = vunpack.c.l.s4 1934713408
        %v3587 = vunpack.c.0.s8 %v3586
        %v3588 = vperm.slane %v3584, %v3587
        %v3589 = vrot.slane %v3588, 4
        %v3590 = vsel %vm1361, 0.0, %v3589
        %v3591 = vrot.slane %v3374, 4
        %v3592 = vsel %vm1361, %v3591, %v3358
        %v3594 = vunpack.c.l.s4 1934713408
        %v3595 = vunpack.c.0.s8 %v3594
        %v3596 = vperm.slane %v3592, %v3595
        %v3597 = vrot.slane %v3596, 4
        %v3598 = vsel %vm1361, 0.0, %v3597
        %v3599 = vrot.slane %v3406, 4
        %v3600 = vsel %vm1361, %v3599, %v3390
        %v3602 = vunpack.c.l.s4 1934713408
        %v3603 = vunpack.c.0.s8 %v3602
        %v3604 = vperm.slane %v3600, %v3603
        %v3605 = vrot.slane %v3604, 4
        %v3606 = vsel %vm1361, 0.0, %v3605
        %v3607 = vrot.slane %v3312, 4
        %v3608 = vsel %vm1361, %v3607, %v3296
        %v3610 = vunpack.c.l.s4 1934713408
        %v3611 = vunpack.c.0.s8 %v3610
        %v3612 = vperm.slane %v3608, %v3611
        %v3613 = vrot.slane %v3612, 4
        %v3614 = vsel %vm1361, 0.0, %v3613
        %v3615 = vrot.slane %v3344, 4
        %v3616 = vsel %vm1361, %v3615, %v3328
        %v3618 = vunpack.c.l.s4 1934713408
        %v3619 = vunpack.c.0.s8 %v3618
        %v3620 = vperm.slane %v3616, %v3619
        %v3621 = vrot.slane %v3620, 4
        %v3622 = vsel %vm1361, 0.0, %v3621
        %v3623 = vrot.slane %v3376, 4
        %v3624 = vsel %vm1361, %v3623, %v3360
        %v3626 = vunpack.c.l.s4 1934713408
        %v3627 = vunpack.c.0.s8 %v3626
        %v3628 = vperm.slane %v3624, %v3627
        %v3629 = vrot.slane %v3628, 4
        %v3630 = vsel %vm1361, 0.0, %v3629
        %v3631 = vrot.slane %v3408, 4
        %v3632 = vsel %vm1361, %v3631, %v3392
        %v3634 = vunpack.c.l.s4 1934713408
        %v3635 = vunpack.c.0.s8 %v3634
        %v3636 = vperm.slane %v3632, %v3635
        %v3637 = vrot.slane %v3636, 4
        %v3638 = vsel %vm1361, 0.0, %v3637
        %v3639 = vrot.slane %v3314, 4
        %v3640 = vsel %vm1361, %v3639, %v3298
        %v3642 = vunpack.c.l.s4 1934713408
        %v3643 = vunpack.c.0.s8 %v3642
        %v3644 = vperm.slane %v3640, %v3643
        %v3645 = vrot.slane %v3644, 4
        %v3646 = vsel %vm1361, 0.0, %v3645
        %v3647 = vrot.slane %v3346, 4
        %v3648 = vsel %vm1361, %v3647, %v3330
        %v3650 = vunpack.c.l.s4 1934713408
        %v3651 = vunpack.c.0.s8 %v3650
        %v3652 = vperm.slane %v3648, %v3651
        %v3653 = vrot.slane %v3652, 4
        %v3654 = vsel %vm1361, 0.0, %v3653
        %v3655 = vrot.slane %v3378, 4
        %v3656 = vsel %vm1361, %v3655, %v3362
        %v3658 = vunpack.c.l.s4 1934713408
        %v3659 = vunpack.c.0.s8 %v3658
        %v3660 = vperm.slane %v3656, %v3659
        %v3661 = vrot.slane %v3660, 4
        %v3662 = vsel %vm1361, 0.0, %v3661
        %v3663 = vrot.slane %v3410, 4
        %v3664 = vsel %vm1361, %v3663, %v3394
        %v3666 = vunpack.c.l.s4 1934713408
        %v3667 = vunpack.c.0.s8 %v3666
        %v3668 = vperm.slane %v3664, %v3667
        %v3669 = vrot.slane %v3668, 4
        %v3670 = vsel %vm1361, 0.0, %v3669
        %v3671 = vrot.slane %v3316, 4
        %v3672 = vsel %vm1361, %v3671, %v3300
        %v3674 = vunpack.c.l.s4 1934713408
        %v3675 = vunpack.c.0.s8 %v3674
        %v3676 = vperm.slane %v3672, %v3675
        %v3677 = vrot.slane %v3676, 4
        %v3678 = vsel %vm1361, 0.0, %v3677
        %v3679 = vrot.slane %v3348, 4
        %v3680 = vsel %vm1361, %v3679, %v3332
        %v3682 = vunpack.c.l.s4 1934713408
        %v3683 = vunpack.c.0.s8 %v3682
        %v3684 = vperm.slane %v3680, %v3683
        %v3685 = vrot.slane %v3684, 4
        %v3686 = vsel %vm1361, 0.0, %v3685
        %v3687 = vrot.slane %v3380, 4
        %v3688 = vsel %vm1361, %v3687, %v3364
        %v3690 = vunpack.c.l.s4 1934713408
        %v3691 = vunpack.c.0.s8 %v3690
        %v3692 = vperm.slane %v3688, %v3691
        %v3693 = vrot.slane %v3692, 4
        %v3694 = vsel %vm1361, 0.0, %v3693
        %v3695 = vrot.slane %v3412, 4
        %v3696 = vsel %vm1361, %v3695, %v3396
        %v3698 = vunpack.c.l.s4 1934713408
        %v3699 = vunpack.c.0.s8 %v3698
        %v3700 = vperm.slane %v3696, %v3699
        %v3701 = vrot.slane %v3700, 4
        %v3702 = vsel %vm1361, 0.0, %v3701
        %v3703 = vrot.slane %v3318, 4
        %v3704 = vsel %vm1361, %v3703, %v3302
        %v3706 = vunpack.c.l.s4 1934713408
        %v3707 = vunpack.c.0.s8 %v3706
        %v3708 = vperm.slane %v3704, %v3707
        %v3709 = vrot.slane %v3708, 4
        %v3710 = vsel %vm1361, 0.0, %v3709
        %v3711 = vrot.slane %v3350, 4
        %v3712 = vsel %vm1361, %v3711, %v3334
        %v3714 = vunpack.c.l.s4 1934713408
        %v3715 = vunpack.c.0.s8 %v3714
        %v3716 = vperm.slane %v3712, %v3715
        %v3717 = vrot.slane %v3716, 4
        %v3718 = vsel %vm1361, 0.0, %v3717
        %v3719 = vrot.slane %v3382, 4
        %v3720 = vsel %vm1361, %v3719, %v3366
        %v3722 = vunpack.c.l.s4 1934713408
        %v3723 = vunpack.c.0.s8 %v3722
        %v3724 = vperm.slane %v3720, %v3723
        %v3725 = vrot.slane %v3724, 4
        %v3726 = vsel %vm1361, 0.0, %v3725
        %v3727 = vrot.slane %v3414, 4
        %v3728 = vsel %vm1361, %v3727, %v3398
        %v3730 = vunpack.c.l.s4 1934713408
        %v3731 = vunpack.c.0.s8 %v3730
        %v3732 = vperm.slane %v3728, %v3731
        %v3733 = vrot.slane %v3732, 4
        %v3734 = vsel %vm1361, 0.0, %v3733
        %3739 = vst [vmem:[#allocation1] ss:$4 sm:$0xff] %v3484
        %s3740 = scalar_lea.vmem [#allocation1], 1
        %3741 = vst [vmem:[%s3740] ss:$4 sm:$0xff] %v3492
        %s3742 = scalar_lea.vmem [#allocation1], 2
        %3743 = vst [vmem:[%s3742] ss:$4 sm:$0xff] %v3500
        %s3744 = scalar_lea.vmem [#allocation1], 3
        %3745 = vst [vmem:[%s3744] ss:$4 sm:$0xff] %v3508
        %v3746 = vld.sshfl [vmem:[#allocation1] sm:$0xff pattern:$0x73625140]
        %3752 = vst [vmem:[#allocation1] ss:$4 sm:$0xff] %v3486
        %s3753 = scalar_lea.vmem [#allocation1], 1
        %3754 = vst [vmem:[%s3753] ss:$4 sm:$0xff] %v3494
        %s3755 = scalar_lea.vmem [#allocation1], 2
        %3756 = vst [vmem:[%s3755] ss:$4 sm:$0xff] %v3502
        %s3757 = scalar_lea.vmem [#allocation1], 3
        %3758 = vst [vmem:[%s3757] ss:$4 sm:$0xff] %v3510
        %v3759 = vld.sshfl [vmem:[#allocation1] sm:$0xff pattern:$0x73625140]
        %3760 = vrot.lane.b32.xlu0 %v3759, 2
        %v3761 = vpop.permute.xlu0 %3760
        %3767 = vst [vmem:[#allocation1] ss:$4 sm:$0xff] %v3516
        %s3768 = scalar_lea.vmem [#allocation1], 1
        %3769 = vst [vmem:[%s3768] ss:$4 sm:$0xff] %v3524
        %s3770 = scalar_lea.vmem [#allocation1], 2
        %3771 = vst [vmem:[%s3770] ss:$4 sm:$0xff] %v3532
        %s3772 = scalar_lea.vmem [#allocation1], 3
        %3773 = vst [vmem:[%s3772] ss:$4 sm:$0xff] %v3540
        %v3774 = vld.sshfl [vmem:[#allocation1] sm:$0xff pattern:$0x73625140]
        %3775 = vrot.lane.b32.xlu0 %v3774, 4
        %v3776 = vpop.permute.xlu0 %3775
        %3782 = vst [vmem:[#allocation1] ss:$4 sm:$0xff] %v3518
        %s3783 = scalar_lea.vmem [#allocation1], 1
        %3784 = vst [vmem:[%s3783] ss:$4 sm:$0xff] %v3526
        %s3785 = scalar_lea.vmem [#allocation1], 2
        %3786 = vst [vmem:[%s3785] ss:$4 sm:$0xff] %v3534
        %s3787 = scalar_lea.vmem [#allocation1], 3
        %3788 = vst [vmem:[%s3787] ss:$4 sm:$0xff] %v3542
        %v3789 = vld.sshfl [vmem:[#allocation1] sm:$0xff pattern:$0x73625140]
        %3790 = vrot.lane.b32.xlu0 %v3789, 6
        %v3791 = vpop.permute.xlu0 %3790
        %3797 = vst [vmem:[#allocation1] ss:$4 sm:$0xff] %v3548
        %s3798 = scalar_lea.vmem [#allocation1], 1
        %3799 = vst [vmem:[%s3798] ss:$4 sm:$0xff] %v3556
        %s3800 = scalar_lea.vmem [#allocation1], 2
        %3801 = vst [vmem:[%s3800] ss:$4 sm:$0xff] %v3564
        %s3802 = scalar_lea.vmem [#allocation1], 3
        %3803 = vst [vmem:[%s3802] ss:$4 sm:$0xff] %v3572
        %v3804 = vld.sshfl [vmem:[#allocation1] sm:$0xff pattern:$0x73625140]
        %3805 = vrot.lane.b32.xlu0 %v3804, 8
        %v3806 = vpop.permute.xlu0 %3805
        %3812 = vst [vmem:[#allocation1] ss:$4 sm:$0xff] %v3550
        %s3813 = scalar_lea.vmem [#allocation1], 1
        %3814 = vst [vmem:[%s3813] ss:$4 sm:$0xff] %v3558
        %s3815 = scalar_lea.vmem [#allocation1], 2
        %3816 = vst [vmem:[%s3815] ss:$4 sm:$0xff] %v3566
        %s3817 = scalar_lea.vmem [#allocation1], 3
        %3818 = vst [vmem:[%s3817] ss:$4 sm:$0xff] %v3574
        %v3819 = vld.sshfl [vmem:[#allocation1] sm:$0xff pattern:$0x73625140]
        %3820 = vrot.lane.b32.xlu0 %v3819, 10
        %v3821 = vpop.permute.xlu0 %3820
        %3827 = vst [vmem:[#allocation1] ss:$4 sm:$0xff] %v3580
        %s3828 = scalar_lea.vmem [#allocation1], 1
        %3829 = vst [vmem:[%s3828] ss:$4 sm:$0xff] %v3588
        %s3830 = scalar_lea.vmem [#allocation1], 2
        %3831 = vst [vmem:[%s3830] ss:$4 sm:$0xff] %v3596
        %s3832 = scalar_lea.vmem [#allocation1], 3
        %3833 = vst [vmem:[%s3832] ss:$4 sm:$0xff] %v3604
        %v3834 = vld.sshfl [vmem:[#allocation1] sm:$0xff pattern:$0x73625140]
        %3835 = vrot.lane.b32.xlu0 %v3834, 12
        %v3836 = vpop.permute.xlu0 %3835
        %3842 = vst [vmem:[#allocation1] ss:$4 sm:$0xff] %v3582
        %s3843 = scalar_lea.vmem [#allocation1], 1
        %3844 = vst [vmem:[%s3843] ss:$4 sm:$0xff] %v3590
        %s3845 = scalar_lea.vmem [#allocation1], 2
        %3846 = vst [vmem:[%s3845] ss:$4 sm:$0xff] %v3598
        %s3847 = scalar_lea.vmem [#allocation1], 3
        %3848 = vst [vmem:[%s3847] ss:$4 sm:$0xff] %v3606
        %v3849 = vld.sshfl [vmem:[#allocation1] sm:$0xff pattern:$0x73625140]
        %3850 = vrot.lane.b32.xlu0 %v3849, 14
        %v3851 = vpop.permute.xlu0 %3850
        %3857 = vst [vmem:[#allocation1] ss:$4 sm:$0xff] %v3612
        %s3858 = scalar_lea.vmem [#allocation1], 1
        %3859 = vst [vmem:[%s3858] ss:$4 sm:$0xff] %v3620
        %s3860 = scalar_lea.vmem [#allocation1], 2
        %3861 = vst [vmem:[%s3860] ss:$4 sm:$0xff] %v3628
        %s3862 = scalar_lea.vmem [#allocation1], 3
        %3863 = vst [vmem:[%s3862] ss:$4 sm:$0xff] %v3636
        %v3864 = vld.sshfl [vmem:[#allocation1] sm:$0xff pattern:$0x73625140]
        %3865 = vrot.lane.b32.xlu0 %v3864, 16
        %v3866 = vpop.permute.xlu0 %3865
        %3872 = vst [vmem:[#allocation1] ss:$4 sm:$0xff] %v3614
        %s3873 = scalar_lea.vmem [#allocation1], 1
        %3874 = vst [vmem:[%s3873] ss:$4 sm:$0xff] %v3622
        %s3875 = scalar_lea.vmem [#allocation1], 2
        %3876 = vst [vmem:[%s3875] ss:$4 sm:$0xff] %v3630
        %s3877 = scalar_lea.vmem [#allocation1], 3
        %3878 = vst [vmem:[%s3877] ss:$4 sm:$0xff] %v3638
        %v3879 = vld.sshfl [vmem:[#allocation1] sm:$0xff pattern:$0x73625140]
        %3880 = vrot.lane.b32.xlu0 %v3879, 18
        %v3881 = vpop.permute.xlu0 %3880
        %3887 = vst [vmem:[#allocation1] ss:$4 sm:$0xff] %v3644
        %s3888 = scalar_lea.vmem [#allocation1], 1
        %3889 = vst [vmem:[%s3888] ss:$4 sm:$0xff] %v3652
        %s3890 = scalar_lea.vmem [#allocation1], 2
        %3891 = vst [vmem:[%s3890] ss:$4 sm:$0xff] %v3660
        %s3892 = scalar_lea.vmem [#allocation1], 3
        %3893 = vst [vmem:[%s3892] ss:$4 sm:$0xff] %v3668
        %v3894 = vld.sshfl [vmem:[#allocation1] sm:$0xff pattern:$0x73625140]
        %3895 = vrot.lane.b32.xlu0 %v3894, 20
        %v3896 = vpop.permute.xlu0 %3895
        %3902 = vst [vmem:[#allocation1] ss:$4 sm:$0xff] %v3646
        %s3903 = scalar_lea.vmem [#allocation1], 1
        %3904 = vst [vmem:[%s3903] ss:$4 sm:$0xff] %v3654
        %s3905 = scalar_lea.vmem [#allocation1], 2
        %3906 = vst [vmem:[%s3905] ss:$4 sm:$0xff] %v3662
        %s3907 = scalar_lea.vmem [#allocation1], 3
        %3908 = vst [vmem:[%s3907] ss:$4 sm:$0xff] %v3670
        %v3909 = vld.sshfl [vmem:[#allocation1] sm:$0xff pattern:$0x73625140]
        %3910 = vrot.lane.b32.xlu0 %v3909, 22
        %v3911 = vpop.permute.xlu0 %3910
        %3917 = vst [vmem:[#allocation1] ss:$4 sm:$0xff] %v3676
        %s3918 = scalar_lea.vmem [#allocation1], 1
        %3919 = vst [vmem:[%s3918] ss:$4 sm:$0xff] %v3684
        %s3920 = scalar_lea.vmem [#allocation1], 2
        %3921 = vst [vmem:[%s3920] ss:$4 sm:$0xff] %v3692
        %s3922 = scalar_lea.vmem [#allocation1], 3
        %3923 = vst [vmem:[%s3922] ss:$4 sm:$0xff] %v3700
        %v3924 = vld.sshfl [vmem:[#allocation1] sm:$0xff pattern:$0x73625140]
        %3925 = vrot.lane.b32.xlu0 %v3924, 24
        %v3926 = vpop.permute.xlu0 %3925
        %3932 = vst [vmem:[#allocation1] ss:$4 sm:$0xff] %v3678
        %s3933 = scalar_lea.vmem [#allocation1], 1
        %3934 = vst [vmem:[%s3933] ss:$4 sm:$0xff] %v3686
        %s3935 = scalar_lea.vmem [#allocation1], 2
        %3936 = vst [vmem:[%s3935] ss:$4 sm:$0xff] %v3694
        %s3937 = scalar_lea.vmem [#allocation1], 3
        %3938 = vst [vmem:[%s3937] ss:$4 sm:$0xff] %v3702
        %v3939 = vld.sshfl [vmem:[#allocation1] sm:$0xff pattern:$0x73625140]
        %3940 = vrot.lane.b32.xlu0 %v3939, 26
        %v3941 = vpop.permute.xlu0 %3940
        %3947 = vst [vmem:[#allocation1] ss:$4 sm:$0xff] %v3708
        %s3948 = scalar_lea.vmem [#allocation1], 1
        %3949 = vst [vmem:[%s3948] ss:$4 sm:$0xff] %v3716
        %s3950 = scalar_lea.vmem [#allocation1], 2
        %3951 = vst [vmem:[%s3950] ss:$4 sm:$0xff] %v3724
        %s3952 = scalar_lea.vmem [#allocation1], 3
        %3953 = vst [vmem:[%s3952] ss:$4 sm:$0xff] %v3732
        %v3954 = vld.sshfl [vmem:[#allocation1] sm:$0xff pattern:$0x73625140]
        %3955 = vrot.lane.b32.xlu0 %v3954, 28
        %v3956 = vpop.permute.xlu0 %3955
        %3962 = vst [vmem:[#allocation1] ss:$4 sm:$0xff] %v3710
        %s3963 = scalar_lea.vmem [#allocation1], 1
        %3964 = vst [vmem:[%s3963] ss:$4 sm:$0xff] %v3718
        %s3965 = scalar_lea.vmem [#allocation1], 2
        %3966 = vst [vmem:[%s3965] ss:$4 sm:$0xff] %v3726
        %s3967 = scalar_lea.vmem [#allocation1], 3
        %3968 = vst [vmem:[%s3967] ss:$4 sm:$0xff] %v3734
        %v3969 = vld.sshfl [vmem:[#allocation1] sm:$0xff pattern:$0x73625140]
        %3970 = vrot.lane.b32.xlu0 %v3969, 30
        %v3971 = vpop.permute.xlu0 %3970
        %v3973 = vsel %vm1855, %v3746, %v3761
        %v3974 = vsel %vm899, %v3973, %v3776
        %v3975 = vsel %vm1858, %v3974, %v3791
        %v3976 = vsel %vm918, %v3975, %v3806
        %v3977 = vsel %vm1861, %v3976, %v3821
        %v3978 = vsel %vm937, %v3977, %v3836
        %v3979 = vsel %vm1864, %v3978, %v3851
        %v3980 = vsel %vm956, %v3979, %v3866
        %v3981 = vsel %vm1867, %v3980, %v3881
        %v3982 = vsel %vm975, %v3981, %v3896
        %v3983 = vsel %vm1870, %v3982, %v3911
        %v3984 = vsel %vm994, %v3983, %v3926
        %v3985 = vsel %vm1873, %v3984, %v3941
        %v3986 = vsel %vm1013, %v3985, %v3956
        %v3987 = vsel %vm1876, %v3986, %v3971
        %3989 = vrot.lane.b32.xlu0 %v3987, 32
        %v3990 = vpop.permute.xlu0 %3989
        %v3992 = vsel %vm1032, %v3286, %v3990
        %s3993 = scalar_lea.vmem %s215, 8 [#allocation3]
        %3994 = vst.msk [vmem:[%s3993] sm:$0xff] %vm2584, %v3992
        %3995 = vrot.lane.b32.xlu0 %v1228, 120
        %v3996 = vpop.permute.xlu0 %3995
        %3997 = vrot.lane.b32.xlu0 %v1264, 120
        %v3998 = vpop.permute.xlu0 %3997
        %3999 = vrot.lane.b32.xlu0 %v1265, 120
        %v4000 = vpop.permute.xlu0 %3999
        %4001 = vrot.lane.b32.xlu0 %v1266, 120
        %v4002 = vpop.permute.xlu0 %4001
        %4003 = vrot.lane.b32.xlu0 %v1229, 120
        %v4004 = vpop.permute.xlu0 %4003
        %4005 = vrot.lane.b32.xlu0 %v1267, 120
        %v4006 = vpop.permute.xlu0 %4005
        %4007 = vrot.lane.b32.xlu0 %v1268, 120
        %v4008 = vpop.permute.xlu0 %4007
        %4009 = vrot.lane.b32.xlu0 %v1269, 120
        %v4010 = vpop.permute.xlu0 %4009
        %4011 = vrot.lane.b32.xlu0 %v1270, 120
        %v4012 = vpop.permute.xlu0 %4011
        %4013 = vrot.lane.b32.xlu0 %v1271, 120
        %v4014 = vpop.permute.xlu0 %4013
        %4015 = vrot.lane.b32.xlu0 %v1272, 120
        %v4016 = vpop.permute.xlu0 %4015
        %4017 = vrot.lane.b32.xlu0 %v1231, 120
        %v4018 = vpop.permute.xlu0 %4017
        %4019 = vrot.lane.b32.xlu0 %v1273, 120
        %v4020 = vpop.permute.xlu0 %4019
        %4021 = vrot.lane.b32.xlu0 %v1274, 120
        %v4022 = vpop.permute.xlu0 %4021
        %4023 = vrot.lane.b32.xlu0 %v1275, 120
        %v4024 = vpop.permute.xlu0 %4023
        %4025 = vrot.lane.b32.xlu0 %v1232, 120
        %v4026 = vpop.permute.xlu0 %4025
        %4027 = vrot.lane.b32.xlu0 %v1276, 120
        %v4028 = vpop.permute.xlu0 %4027
        %4029 = vrot.lane.b32.xlu0 %v1277, 120
        %v4030 = vpop.permute.xlu0 %4029
        %4031 = vrot.lane.b32.xlu0 %v1233, 120
        %v4032 = vpop.permute.xlu0 %4031
        %4033 = vrot.lane.b32.xlu0 %v1278, 120
        %v4034 = vpop.permute.xlu0 %4033
        %4035 = vrot.lane.b32.xlu0 %v1279, 120
        %v4036 = vpop.permute.xlu0 %4035
        %4037 = vrot.lane.b32.xlu0 %v1280, 120
        %v4038 = vpop.permute.xlu0 %4037
        %4039 = vrot.lane.b32.xlu0 %v1234, 120
        %v4040 = vpop.permute.xlu0 %4039
        %4041 = vrot.lane.b32.xlu0 %v1281, 120
        %v4042 = vpop.permute.xlu0 %4041
        %4043 = vrot.lane.b32.xlu0 %v1282, 120
        %v4044 = vpop.permute.xlu0 %4043
        %4045 = vrot.lane.b32.xlu0 %v1235, 120
        %v4046 = vpop.permute.xlu0 %4045
        %4047 = vrot.lane.b32.xlu0 %v1283, 120
        %v4048 = vpop.permute.xlu0 %4047
        %4049 = vrot.lane.b32.xlu0 %v1284, 120
        %v4050 = vpop.permute.xlu0 %4049
        %4051 = vrot.lane.b32.xlu0 %v1285, 120
        %v4052 = vpop.permute.xlu0 %4051
        %4053 = vrot.lane.b32.xlu0 %v1236, 120
        %v4054 = vpop.permute.xlu0 %4053
        %4055 = vrot.lane.b32.xlu0 %v1286, 120
        %v4056 = vpop.permute.xlu0 %4055
        %4057 = vrot.lane.b32.xlu0 %v1287, 120
        %v4058 = vpop.permute.xlu0 %4057
        %4059 = vrot.lane.b32.xlu0 %v1237, 120
        %v4060 = vpop.permute.xlu0 %4059
        %4061 = vrot.lane.b32.xlu0 %v1288, 120
        %v4062 = vpop.permute.xlu0 %4061
        %4063 = vrot.lane.b32.xlu0 %v1289, 120
        %v4064 = vpop.permute.xlu0 %4063
        %4065 = vrot.lane.b32.xlu0 %v1290, 120
        %v4066 = vpop.permute.xlu0 %4065
        %4067 = vrot.lane.b32.xlu0 %v1238, 120
        %v4068 = vpop.permute.xlu0 %4067
        %4069 = vrot.lane.b32.xlu0 %v1291, 120
        %v4070 = vpop.permute.xlu0 %4069
        %4071 = vrot.lane.b32.xlu0 %v1292, 120
        %v4072 = vpop.permute.xlu0 %4071
        %4073 = vrot.lane.b32.xlu0 %v1293, 120
        %v4074 = vpop.permute.xlu0 %4073
        %4075 = vrot.lane.b32.xlu0 %v1294, 120
        %v4076 = vpop.permute.xlu0 %4075
        %4077 = vrot.lane.b32.xlu0 %v1295, 120
        %v4078 = vpop.permute.xlu0 %4077
        %4079 = vrot.lane.b32.xlu0 %v1296, 120
        %v4080 = vpop.permute.xlu0 %4079
        %4081 = vrot.lane.b32.xlu0 %v1240, 120
        %v4082 = vpop.permute.xlu0 %4081
        %4083 = vrot.lane.b32.xlu0 %v1297, 120
        %v4084 = vpop.permute.xlu0 %4083
        %4085 = vrot.lane.b32.xlu0 %v1298, 120
        %v4086 = vpop.permute.xlu0 %4085
        %4087 = vrot.lane.b32.xlu0 %v1299, 120
        %v4088 = vpop.permute.xlu0 %4087
        %4089 = vrot.lane.b32.xlu0 %v1241, 120
        %v4090 = vpop.permute.xlu0 %4089
        %4091 = vrot.lane.b32.xlu0 %v1300, 120
        %v4092 = vpop.permute.xlu0 %4091
        %4093 = vrot.lane.b32.xlu0 %v1301, 120
        %v4094 = vpop.permute.xlu0 %4093
        %4095 = vrot.lane.b32.xlu0 %v1242, 120
        %v4096 = vpop.permute.xlu0 %4095
        %4097 = vrot.lane.b32.xlu0 %v1302, 120
        %v4098 = vpop.permute.xlu0 %4097
        %4099 = vrot.lane.b32.xlu0 %v1303, 120
        %v4100 = vpop.permute.xlu0 %4099
        %4101 = vrot.lane.b32.xlu0 %v1304, 120
        %v4102 = vpop.permute.xlu0 %4101
        %4103 = vrot.lane.b32.xlu0 %v1243, 120
        %v4104 = vpop.permute.xlu0 %4103
        %4105 = vrot.lane.b32.xlu0 %v1305, 120
        %v4106 = vpop.permute.xlu0 %4105
        %4107 = vrot.lane.b32.xlu0 %v1306, 120
        %v4108 = vpop.permute.xlu0 %4107
        %4109 = vrot.lane.b32.xlu0 %v1244, 120
        %v4110 = vpop.permute.xlu0 %4109
        %4111 = vrot.lane.b32.xlu0 %v1307, 120
        %v4112 = vpop.permute.xlu0 %4111
        %4113 = vrot.lane.b32.xlu0 %v1308, 120
        %v4114 = vpop.permute.xlu0 %4113
        %4115 = vrot.lane.b32.xlu0 %v1309, 120
        %v4116 = vpop.permute.xlu0 %4115
        %4117 = vrot.lane.b32.xlu0 %v1245, 120
        %v4118 = vpop.permute.xlu0 %4117
        %4119 = vrot.lane.b32.xlu0 %v1310, 120
        %v4120 = vpop.permute.xlu0 %4119
        %4121 = vrot.lane.b32.xlu0 %v1311, 120
        %v4122 = vpop.permute.xlu0 %4121
        %v4187 = vrot.slane %v4012, 4
        %v4188 = vsel %vm1361, %v4187, %v3996
        %v4190 = vunpack.c.l.s4 1934713408
        %v4191 = vunpack.c.0.s8 %v4190
        %v4192 = vperm.slane %v4188, %v4191
        %v4193 = vrot.slane %v4192, 4
        %v4194 = vsel %vm1361, 0.0, %v4193
        %v4195 = vrot.slane %v4044, 4
        %v4196 = vsel %vm1361, %v4195, %v4028
        %v4198 = vunpack.c.l.s4 1934713408
        %v4199 = vunpack.c.0.s8 %v4198
        %v4200 = vperm.slane %v4196, %v4199
        %v4201 = vrot.slane %v4200, 4
        %v4202 = vsel %vm1361, 0.0, %v4201
        %v4203 = vrot.slane %v4076, 4
        %v4204 = vsel %vm1361, %v4203, %v4060
        %v4206 = vunpack.c.l.s4 1934713408
        %v4207 = vunpack.c.0.s8 %v4206
        %v4208 = vperm.slane %v4204, %v4207
        %v4209 = vrot.slane %v4208, 4
        %v4210 = vsel %vm1361, 0.0, %v4209
        %v4211 = vrot.slane %v4108, 4
        %v4212 = vsel %vm1361, %v4211, %v4092
        %v4214 = vunpack.c.l.s4 1934713408
        %v4215 = vunpack.c.0.s8 %v4214
        %v4216 = vperm.slane %v4212, %v4215
        %v4217 = vrot.slane %v4216, 4
        %v4218 = vsel %vm1361, 0.0, %v4217
        %v4219 = vrot.slane %v4014, 4
        %v4220 = vsel %vm1361, %v4219, %v3998
        %v4222 = vunpack.c.l.s4 1934713408
        %v4223 = vunpack.c.0.s8 %v4222
        %v4224 = vperm.slane %v4220, %v4223
        %v4225 = vrot.slane %v4224, 4
        %v4226 = vsel %vm1361, 0.0, %v4225
        %v4227 = vrot.slane %v4046, 4
        %v4228 = vsel %vm1361, %v4227, %v4030
        %v4230 = vunpack.c.l.s4 1934713408
        %v4231 = vunpack.c.0.s8 %v4230
        %v4232 = vperm.slane %v4228, %v4231
        %v4233 = vrot.slane %v4232, 4
        %v4234 = vsel %vm1361, 0.0, %v4233
        %v4235 = vrot.slane %v4078, 4
        %v4236 = vsel %vm1361, %v4235, %v4062
        %v4238 = vunpack.c.l.s4 1934713408
        %v4239 = vunpack.c.0.s8 %v4238
        %v4240 = vperm.slane %v4236, %v4239
        %v4241 = vrot.slane %v4240, 4
        %v4242 = vsel %vm1361, 0.0, %v4241
        %v4243 = vrot.slane %v4110, 4
        %v4244 = vsel %vm1361, %v4243, %v4094
        %v4246 = vunpack.c.l.s4 1934713408
        %v4247 = vunpack.c.0.s8 %v4246
        %v4248 = vperm.slane %v4244, %v4247
        %v4249 = vrot.slane %v4248, 4
        %v4250 = vsel %vm1361, 0.0, %v4249
        %v4251 = vrot.slane %v4016, 4
        %v4252 = vsel %vm1361, %v4251, %v4000
        %v4254 = vunpack.c.l.s4 1934713408
        %v4255 = vunpack.c.0.s8 %v4254
        %v4256 = vperm.slane %v4252, %v4255
        %v4257 = vrot.slane %v4256, 4
        %v4258 = vsel %vm1361, 0.0, %v4257
        %v4259 = vrot.slane %v4048, 4
        %v4260 = vsel %vm1361, %v4259, %v4032
        %v4262 = vunpack.c.l.s4 1934713408
        %v4263 = vunpack.c.0.s8 %v4262
        %v4264 = vperm.slane %v4260, %v4263
        %v4265 = vrot.slane %v4264, 4
        %v4266 = vsel %vm1361, 0.0, %v4265
        %v4267 = vrot.slane %v4080, 4
        %v4268 = vsel %vm1361, %v4267, %v4064
        %v4270 = vunpack.c.l.s4 1934713408
        %v4271 = vunpack.c.0.s8 %v4270
        %v4272 = vperm.slane %v4268, %v4271
        %v4273 = vrot.slane %v4272, 4
        %v4274 = vsel %vm1361, 0.0, %v4273
        %v4275 = vrot.slane %v4112, 4
        %v4276 = vsel %vm1361, %v4275, %v4096
        %v4278 = vunpack.c.l.s4 1934713408
        %v4279 = vunpack.c.0.s8 %v4278
        %v4280 = vperm.slane %v4276, %v4279
        %v4281 = vrot.slane %v4280, 4
        %v4282 = vsel %vm1361, 0.0, %v4281
        %v4283 = vrot.slane %v4018, 4
        %v4284 = vsel %vm1361, %v4283, %v4002
        %v4286 = vunpack.c.l.s4 1934713408
        %v4287 = vunpack.c.0.s8 %v4286
        %v4288 = vperm.slane %v4284, %v4287
        %v4289 = vrot.slane %v4288, 4
        %v4290 = vsel %vm1361, 0.0, %v4289
        %v4291 = vrot.slane %v4050, 4
        %v4292 = vsel %vm1361, %v4291, %v4034
        %v4294 = vunpack.c.l.s4 1934713408
        %v4295 = vunpack.c.0.s8 %v4294
        %v4296 = vperm.slane %v4292, %v4295
        %v4297 = vrot.slane %v4296, 4
        %v4298 = vsel %vm1361, 0.0, %v4297
        %v4299 = vrot.slane %v4082, 4
        %v4300 = vsel %vm1361, %v4299, %v4066
        %v4302 = vunpack.c.l.s4 1934713408
        %v4303 = vunpack.c.0.s8 %v4302
        %v4304 = vperm.slane %v4300, %v4303
        %v4305 = vrot.slane %v4304, 4
        %v4306 = vsel %vm1361, 0.0, %v4305
        %v4307 = vrot.slane %v4114, 4
        %v4308 = vsel %vm1361, %v4307, %v4098
        %v4310 = vunpack.c.l.s4 1934713408
        %v4311 = vunpack.c.0.s8 %v4310
        %v4312 = vperm.slane %v4308, %v4311
        %v4313 = vrot.slane %v4312, 4
        %v4314 = vsel %vm1361, 0.0, %v4313
        %v4315 = vrot.slane %v4020, 4
        %v4316 = vsel %vm1361, %v4315, %v4004
        %v4318 = vunpack.c.l.s4 1934713408
        %v4319 = vunpack.c.0.s8 %v4318
        %v4320 = vperm.slane %v4316, %v4319
        %v4321 = vrot.slane %v4320, 4
        %v4322 = vsel %vm1361, 0.0, %v4321
        %v4323 = vrot.slane %v4052, 4
        %v4324 = vsel %vm1361, %v4323, %v4036
        %v4326 = vunpack.c.l.s4 1934713408
        %v4327 = vunpack.c.0.s8 %v4326
        %v4328 = vperm.slane %v4324, %v4327
        %v4329 = vrot.slane %v4328, 4
        %v4330 = vsel %vm1361, 0.0, %v4329
        %v4331 = vrot.slane %v4084, 4
        %v4332 = vsel %vm1361, %v4331, %v4068
        %v4334 = vunpack.c.l.s4 1934713408
        %v4335 = vunpack.c.0.s8 %v4334
        %v4336 = vperm.slane %v4332, %v4335
        %v4337 = vrot.slane %v4336, 4
        %v4338 = vsel %vm1361, 0.0, %v4337
        %v4339 = vrot.slane %v4116, 4
        %v4340 = vsel %vm1361, %v4339, %v4100
        %v4342 = vunpack.c.l.s4 1934713408
        %v4343 = vunpack.c.0.s8 %v4342
        %v4344 = vperm.slane %v4340, %v4343
        %v4345 = vrot.slane %v4344, 4
        %v4346 = vsel %vm1361, 0.0, %v4345
        %v4347 = vrot.slane %v4022, 4
        %v4348 = vsel %vm1361, %v4347, %v4006
        %v4350 = vunpack.c.l.s4 1934713408
        %v4351 = vunpack.c.0.s8 %v4350
        %v4352 = vperm.slane %v4348, %v4351
        %v4353 = vrot.slane %v4352, 4
        %v4354 = vsel %vm1361, 0.0, %v4353
        %v4355 = vrot.slane %v4054, 4
        %v4356 = vsel %vm1361, %v4355, %v4038
        %v4358 = vunpack.c.l.s4 1934713408
        %v4359 = vunpack.c.0.s8 %v4358
        %v4360 = vperm.slane %v4356, %v4359
        %v4361 = vrot.slane %v4360, 4
        %v4362 = vsel %vm1361, 0.0, %v4361
        %v4363 = vrot.slane %v4086, 4
        %v4364 = vsel %vm1361, %v4363, %v4070
        %v4366 = vunpack.c.l.s4 1934713408
        %v4367 = vunpack.c.0.s8 %v4366
        %v4368 = vperm.slane %v4364, %v4367
        %v4369 = vrot.slane %v4368, 4
        %v4370 = vsel %vm1361, 0.0, %v4369
        %v4371 = vrot.slane %v4118, 4
        %v4372 = vsel %vm1361, %v4371, %v4102
        %v4374 = vunpack.c.l.s4 1934713408
        %v4375 = vunpack.c.0.s8 %v4374
        %v4376 = vperm.slane %v4372, %v4375
        %v4377 = vrot.slane %v4376, 4
        %v4378 = vsel %vm1361, 0.0, %v4377
        %v4379 = vrot.slane %v4024, 4
        %v4380 = vsel %vm1361, %v4379, %v4008
        %v4382 = vunpack.c.l.s4 1934713408
        %v4383 = vunpack.c.0.s8 %v4382
        %v4384 = vperm.slane %v4380, %v4383
        %v4385 = vrot.slane %v4384, 4
        %v4386 = vsel %vm1361, 0.0, %v4385
        %v4387 = vrot.slane %v4056, 4
        %v4388 = vsel %vm1361, %v4387, %v4040
        %v4390 = vunpack.c.l.s4 1934713408
        %v4391 = vunpack.c.0.s8 %v4390
        %v4392 = vperm.slane %v4388, %v4391
        %v4393 = vrot.slane %v4392, 4
        %v4394 = vsel %vm1361, 0.0, %v4393
        %v4395 = vrot.slane %v4088, 4
        %v4396 = vsel %vm1361, %v4395, %v4072
        %v4398 = vunpack.c.l.s4 1934713408
        %v4399 = vunpack.c.0.s8 %v4398
        %v4400 = vperm.slane %v4396, %v4399
        %v4401 = vrot.slane %v4400, 4
        %v4402 = vsel %vm1361, 0.0, %v4401
        %v4403 = vrot.slane %v4120, 4
        %v4404 = vsel %vm1361, %v4403, %v4104
        %v4406 = vunpack.c.l.s4 1934713408
        %v4407 = vunpack.c.0.s8 %v4406
        %v4408 = vperm.slane %v4404, %v4407
        %v4409 = vrot.slane %v4408, 4
        %v4410 = vsel %vm1361, 0.0, %v4409
        %v4411 = vrot.slane %v4026, 4
        %v4412 = vsel %vm1361, %v4411, %v4010
        %v4414 = vunpack.c.l.s4 1934713408
        %v4415 = vunpack.c.0.s8 %v4414
        %v4416 = vperm.slane %v4412, %v4415
        %v4417 = vrot.slane %v4416, 4
        %v4418 = vsel %vm1361, 0.0, %v4417
        %v4419 = vrot.slane %v4058, 4
        %v4420 = vsel %vm1361, %v4419, %v4042
        %v4422 = vunpack.c.l.s4 1934713408
        %v4423 = vunpack.c.0.s8 %v4422
        %v4424 = vperm.slane %v4420, %v4423
        %v4425 = vrot.slane %v4424, 4
        %v4426 = vsel %vm1361, 0.0, %v4425
        %v4427 = vrot.slane %v4090, 4
        %v4428 = vsel %vm1361, %v4427, %v4074
        %v4430 = vunpack.c.l.s4 1934713408
        %v4431 = vunpack.c.0.s8 %v4430
        %v4432 = vperm.slane %v4428, %v4431
        %v4433 = vrot.slane %v4432, 4
        %v4434 = vsel %vm1361, 0.0, %v4433
        %v4435 = vrot.slane %v4122, 4
        %v4436 = vsel %vm1361, %v4435, %v4106
        %v4438 = vunpack.c.l.s4 1934713408
        %v4439 = vunpack.c.0.s8 %v4438
        %v4440 = vperm.slane %v4436, %v4439
        %v4441 = vrot.slane %v4440, 4
        %v4442 = vsel %vm1361, 0.0, %v4441
        %4447 = vst [vmem:[#allocation1] ss:$4 sm:$0xff] %v4192
        %s4448 = scalar_lea.vmem [#allocation1], 1
        %4449 = vst [vmem:[%s4448] ss:$4 sm:$0xff] %v4200
        %s4450 = scalar_lea.vmem [#allocation1], 2
        %4451 = vst [vmem:[%s4450] ss:$4 sm:$0xff] %v4208
        %s4452 = scalar_lea.vmem [#allocation1], 3
        %4453 = vst [vmem:[%s4452] ss:$4 sm:$0xff] %v4216
        %v4454 = vld.sshfl [vmem:[#allocation1] sm:$0xff pattern:$0x73625140]
        %4460 = vst [vmem:[#allocation1] ss:$4 sm:$0xff] %v4194
        %s4461 = scalar_lea.vmem [#allocation1], 1
        %4462 = vst [vmem:[%s4461] ss:$4 sm:$0xff] %v4202
        %s4463 = scalar_lea.vmem [#allocation1], 2
        %4464 = vst [vmem:[%s4463] ss:$4 sm:$0xff] %v4210
        %s4465 = scalar_lea.vmem [#allocation1], 3
        %4466 = vst [vmem:[%s4465] ss:$4 sm:$0xff] %v4218
        %v4467 = vld.sshfl [vmem:[#allocation1] sm:$0xff pattern:$0x73625140]
        %4468 = vrot.lane.b32.xlu0 %v4467, 2
        %v4469 = vpop.permute.xlu0 %4468
        %4475 = vst [vmem:[#allocation1] ss:$4 sm:$0xff] %v4224
        %s4476 = scalar_lea.vmem [#allocation1], 1
        %4477 = vst [vmem:[%s4476] ss:$4 sm:$0xff] %v4232
        %s4478 = scalar_lea.vmem [#allocation1], 2
        %4479 = vst [vmem:[%s4478] ss:$4 sm:$0xff] %v4240
        %s4480 = scalar_lea.vmem [#allocation1], 3
        %4481 = vst [vmem:[%s4480] ss:$4 sm:$0xff] %v4248
        %v4482 = vld.sshfl [vmem:[#allocation1] sm:$0xff pattern:$0x73625140]
        %4483 = vrot.lane.b32.xlu0 %v4482, 4
        %v4484 = vpop.permute.xlu0 %4483
        %4490 = vst [vmem:[#allocation1] ss:$4 sm:$0xff] %v4226
        %s4491 = scalar_lea.vmem [#allocation1], 1
        %4492 = vst [vmem:[%s4491] ss:$4 sm:$0xff] %v4234
        %s4493 = scalar_lea.vmem [#allocation1], 2
        %4494 = vst [vmem:[%s4493] ss:$4 sm:$0xff] %v4242
        %s4495 = scalar_lea.vmem [#allocation1], 3
        %4496 = vst [vmem:[%s4495] ss:$4 sm:$0xff] %v4250
        %v4497 = vld.sshfl [vmem:[#allocation1] sm:$0xff pattern:$0x73625140]
        %4498 = vrot.lane.b32.xlu0 %v4497, 6
        %v4499 = vpop.permute.xlu0 %4498
        %4505 = vst [vmem:[#allocation1] ss:$4 sm:$0xff] %v4256
        %s4506 = scalar_lea.vmem [#allocation1], 1
        %4507 = vst [vmem:[%s4506] ss:$4 sm:$0xff] %v4264
        %s4508 = scalar_lea.vmem [#allocation1], 2
        %4509 = vst [vmem:[%s4508] ss:$4 sm:$0xff] %v4272
        %s4510 = scalar_lea.vmem [#allocation1], 3
        %4511 = vst [vmem:[%s4510] ss:$4 sm:$0xff] %v4280
        %v4512 = vld.sshfl [vmem:[#allocation1] sm:$0xff pattern:$0x73625140]
        %4513 = vrot.lane.b32.xlu0 %v4512, 8
        %v4514 = vpop.permute.xlu0 %4513
        %4520 = vst [vmem:[#allocation1] ss:$4 sm:$0xff] %v4258
        %s4521 = scalar_lea.vmem [#allocation1], 1
        %4522 = vst [vmem:[%s4521] ss:$4 sm:$0xff] %v4266
        %s4523 = scalar_lea.vmem [#allocation1], 2
        %4524 = vst [vmem:[%s4523] ss:$4 sm:$0xff] %v4274
        %s4525 = scalar_lea.vmem [#allocation1], 3
        %4526 = vst [vmem:[%s4525] ss:$4 sm:$0xff] %v4282
        %v4527 = vld.sshfl [vmem:[#allocation1] sm:$0xff pattern:$0x73625140]
        %4528 = vrot.lane.b32.xlu0 %v4527, 10
        %v4529 = vpop.permute.xlu0 %4528
        %4535 = vst [vmem:[#allocation1] ss:$4 sm:$0xff] %v4288
        %s4536 = scalar_lea.vmem [#allocation1], 1
        %4537 = vst [vmem:[%s4536] ss:$4 sm:$0xff] %v4296
        %s4538 = scalar_lea.vmem [#allocation1], 2
        %4539 = vst [vmem:[%s4538] ss:$4 sm:$0xff] %v4304
        %s4540 = scalar_lea.vmem [#allocation1], 3
        %4541 = vst [vmem:[%s4540] ss:$4 sm:$0xff] %v4312
        %v4542 = vld.sshfl [vmem:[#allocation1] sm:$0xff pattern:$0x73625140]
        %4543 = vrot.lane.b32.xlu0 %v4542, 12
        %v4544 = vpop.permute.xlu0 %4543
        %4550 = vst [vmem:[#allocation1] ss:$4 sm:$0xff] %v4290
        %s4551 = scalar_lea.vmem [#allocation1], 1
        %4552 = vst [vmem:[%s4551] ss:$4 sm:$0xff] %v4298
        %s4553 = scalar_lea.vmem [#allocation1], 2
        %4554 = vst [vmem:[%s4553] ss:$4 sm:$0xff] %v4306
        %s4555 = scalar_lea.vmem [#allocation1], 3
        %4556 = vst [vmem:[%s4555] ss:$4 sm:$0xff] %v4314
        %v4557 = vld.sshfl [vmem:[#allocation1] sm:$0xff pattern:$0x73625140]
        %4558 = vrot.lane.b32.xlu0 %v4557, 14
        %v4559 = vpop.permute.xlu0 %4558
        %4565 = vst [vmem:[#allocation1] ss:$4 sm:$0xff] %v4320
        %s4566 = scalar_lea.vmem [#allocation1], 1
        %4567 = vst [vmem:[%s4566] ss:$4 sm:$0xff] %v4328
        %s4568 = scalar_lea.vmem [#allocation1], 2
        %4569 = vst [vmem:[%s4568] ss:$4 sm:$0xff] %v4336
        %s4570 = scalar_lea.vmem [#allocation1], 3
        %4571 = vst [vmem:[%s4570] ss:$4 sm:$0xff] %v4344
        %v4572 = vld.sshfl [vmem:[#allocation1] sm:$0xff pattern:$0x73625140]
        %4573 = vrot.lane.b32.xlu0 %v4572, 16
        %v4574 = vpop.permute.xlu0 %4573
        %4580 = vst [vmem:[#allocation1] ss:$4 sm:$0xff] %v4322
        %s4581 = scalar_lea.vmem [#allocation1], 1
        %4582 = vst [vmem:[%s4581] ss:$4 sm:$0xff] %v4330
        %s4583 = scalar_lea.vmem [#allocation1], 2
        %4584 = vst [vmem:[%s4583] ss:$4 sm:$0xff] %v4338
        %s4585 = scalar_lea.vmem [#allocation1], 3
        %4586 = vst [vmem:[%s4585] ss:$4 sm:$0xff] %v4346
        %v4587 = vld.sshfl [vmem:[#allocation1] sm:$0xff pattern:$0x73625140]
        %4588 = vrot.lane.b32.xlu0 %v4587, 18
        %v4589 = vpop.permute.xlu0 %4588
        %4595 = vst [vmem:[#allocation1] ss:$4 sm:$0xff] %v4352
        %s4596 = scalar_lea.vmem [#allocation1], 1
        %4597 = vst [vmem:[%s4596] ss:$4 sm:$0xff] %v4360
        %s4598 = scalar_lea.vmem [#allocation1], 2
        %4599 = vst [vmem:[%s4598] ss:$4 sm:$0xff] %v4368
        %s4600 = scalar_lea.vmem [#allocation1], 3
        %4601 = vst [vmem:[%s4600] ss:$4 sm:$0xff] %v4376
        %v4602 = vld.sshfl [vmem:[#allocation1] sm:$0xff pattern:$0x73625140]
        %4603 = vrot.lane.b32.xlu0 %v4602, 20
        %v4604 = vpop.permute.xlu0 %4603
        %4610 = vst [vmem:[#allocation1] ss:$4 sm:$0xff] %v4354
        %s4611 = scalar_lea.vmem [#allocation1], 1
        %4612 = vst [vmem:[%s4611] ss:$4 sm:$0xff] %v4362
        %s4613 = scalar_lea.vmem [#allocation1], 2
        %4614 = vst [vmem:[%s4613] ss:$4 sm:$0xff] %v4370
        %s4615 = scalar_lea.vmem [#allocation1], 3
        %4616 = vst [vmem:[%s4615] ss:$4 sm:$0xff] %v4378
        %v4617 = vld.sshfl [vmem:[#allocation1] sm:$0xff pattern:$0x73625140]
        %4618 = vrot.lane.b32.xlu0 %v4617, 22
        %v4619 = vpop.permute.xlu0 %4618
        %4625 = vst [vmem:[#allocation1] ss:$4 sm:$0xff] %v4384
        %s4626 = scalar_lea.vmem [#allocation1], 1
        %4627 = vst [vmem:[%s4626] ss:$4 sm:$0xff] %v4392
        %s4628 = scalar_lea.vmem [#allocation1], 2
        %4629 = vst [vmem:[%s4628] ss:$4 sm:$0xff] %v4400
        %s4630 = scalar_lea.vmem [#allocation1], 3
        %4631 = vst [vmem:[%s4630] ss:$4 sm:$0xff] %v4408
        %v4632 = vld.sshfl [vmem:[#allocation1] sm:$0xff pattern:$0x73625140]
        %4633 = vrot.lane.b32.xlu0 %v4632, 24
        %v4634 = vpop.permute.xlu0 %4633
        %4640 = vst [vmem:[#allocation1] ss:$4 sm:$0xff] %v4386
        %s4641 = scalar_lea.vmem [#allocation1], 1
        %4642 = vst [vmem:[%s4641] ss:$4 sm:$0xff] %v4394
        %s4643 = scalar_lea.vmem [#allocation1], 2
        %4644 = vst [vmem:[%s4643] ss:$4 sm:$0xff] %v4402
        %s4645 = scalar_lea.vmem [#allocation1], 3
        %4646 = vst [vmem:[%s4645] ss:$4 sm:$0xff] %v4410
        %v4647 = vld.sshfl [vmem:[#allocation1] sm:$0xff pattern:$0x73625140]
        %4648 = vrot.lane.b32.xlu0 %v4647, 26
        %v4649 = vpop.permute.xlu0 %4648
        %4655 = vst [vmem:[#allocation1] ss:$4 sm:$0xff] %v4416
        %s4656 = scalar_lea.vmem [#allocation1], 1
        %4657 = vst [vmem:[%s4656] ss:$4 sm:$0xff] %v4424
        %s4658 = scalar_lea.vmem [#allocation1], 2
        %4659 = vst [vmem:[%s4658] ss:$4 sm:$0xff] %v4432
        %s4660 = scalar_lea.vmem [#allocation1], 3
        %4661 = vst [vmem:[%s4660] ss:$4 sm:$0xff] %v4440
        %v4662 = vld.sshfl [vmem:[#allocation1] sm:$0xff pattern:$0x73625140]
        %4663 = vrot.lane.b32.xlu0 %v4662, 28
        %v4664 = vpop.permute.xlu0 %4663
        %4670 = vst [vmem:[#allocation1] ss:$4 sm:$0xff] %v4418
        %s4671 = scalar_lea.vmem [#allocation1], 1
        %4672 = vst [vmem:[%s4671] ss:$4 sm:$0xff] %v4426
        %s4673 = scalar_lea.vmem [#allocation1], 2
        %4674 = vst [vmem:[%s4673] ss:$4 sm:$0xff] %v4434
        %s4675 = scalar_lea.vmem [#allocation1], 3
        %4676 = vst [vmem:[%s4675] ss:$4 sm:$0xff] %v4442
        %v4677 = vld.sshfl [vmem:[#allocation1] sm:$0xff pattern:$0x73625140]
        %4678 = vrot.lane.b32.xlu0 %v4677, 30
        %v4679 = vpop.permute.xlu0 %4678
        %v4681 = vsel %vm1855, %v4454, %v4469
        %v4682 = vsel %vm899, %v4681, %v4484
        %v4683 = vsel %vm1858, %v4682, %v4499
        %v4684 = vsel %vm918, %v4683, %v4514
        %v4685 = vsel %vm1861, %v4684, %v4529
        %v4686 = vsel %vm937, %v4685, %v4544
        %v4687 = vsel %vm1864, %v4686, %v4559
        %v4688 = vsel %vm956, %v4687, %v4574
        %v4689 = vsel %vm1867, %v4688, %v4589
        %v4690 = vsel %vm975, %v4689, %v4604
        %v4691 = vsel %vm1870, %v4690, %v4619
        %v4692 = vsel %vm994, %v4691, %v4634
        %v4693 = vsel %vm1873, %v4692, %v4649
        %v4694 = vsel %vm1013, %v4693, %v4664
        %v4695 = vsel %vm1876, %v4694, %v4679
        %4696 = vrot.lane.b32.xlu0 %v1228, 118
        %v4697 = vpop.permute.xlu0 %4696
        %4698 = vrot.lane.b32.xlu0 %v1264, 118
        %v4699 = vpop.permute.xlu0 %4698
        %4700 = vrot.lane.b32.xlu0 %v1265, 118
        %v4701 = vpop.permute.xlu0 %4700
        %4702 = vrot.lane.b32.xlu0 %v1266, 118
        %v4703 = vpop.permute.xlu0 %4702
        %4704 = vrot.lane.b32.xlu0 %v1229, 118
        %v4705 = vpop.permute.xlu0 %4704
        %4706 = vrot.lane.b32.xlu0 %v1267, 118
        %v4707 = vpop.permute.xlu0 %4706
        %4708 = vrot.lane.b32.xlu0 %v1268, 118
        %v4709 = vpop.permute.xlu0 %4708
        %4710 = vrot.lane.b32.xlu0 %v1269, 118
        %v4711 = vpop.permute.xlu0 %4710
        %4712 = vrot.lane.b32.xlu0 %v1270, 118
        %v4713 = vpop.permute.xlu0 %4712
        %4714 = vrot.lane.b32.xlu0 %v1271, 118
        %v4715 = vpop.permute.xlu0 %4714
        %4716 = vrot.lane.b32.xlu0 %v1272, 118
        %v4717 = vpop.permute.xlu0 %4716
        %4718 = vrot.lane.b32.xlu0 %v1231, 118
        %v4719 = vpop.permute.xlu0 %4718
        %4720 = vrot.lane.b32.xlu0 %v1273, 118
        %v4721 = vpop.permute.xlu0 %4720
        %4722 = vrot.lane.b32.xlu0 %v1274, 118
        %v4723 = vpop.permute.xlu0 %4722
        %4724 = vrot.lane.b32.xlu0 %v1275, 118
        %v4725 = vpop.permute.xlu0 %4724
        %4726 = vrot.lane.b32.xlu0 %v1232, 118
        %v4727 = vpop.permute.xlu0 %4726
        %4728 = vrot.lane.b32.xlu0 %v1276, 118
        %v4729 = vpop.permute.xlu0 %4728
        %4730 = vrot.lane.b32.xlu0 %v1277, 118
        %v4731 = vpop.permute.xlu0 %4730
        %4732 = vrot.lane.b32.xlu0 %v1233, 118
        %v4733 = vpop.permute.xlu0 %4732
        %4734 = vrot.lane.b32.xlu0 %v1278, 118
        %v4735 = vpop.permute.xlu0 %4734
        %4736 = vrot.lane.b32.xlu0 %v1279, 118
        %v4737 = vpop.permute.xlu0 %4736
        %4738 = vrot.lane.b32.xlu0 %v1280, 118
        %v4739 = vpop.permute.xlu0 %4738
        %4740 = vrot.lane.b32.xlu0 %v1234, 118
        %v4741 = vpop.permute.xlu0 %4740
        %4742 = vrot.lane.b32.xlu0 %v1281, 118
        %v4743 = vpop.permute.xlu0 %4742
        %4744 = vrot.lane.b32.xlu0 %v1282, 118
        %v4745 = vpop.permute.xlu0 %4744
        %4746 = vrot.lane.b32.xlu0 %v1235, 118
        %v4747 = vpop.permute.xlu0 %4746
        %4748 = vrot.lane.b32.xlu0 %v1283, 118
        %v4749 = vpop.permute.xlu0 %4748
        %4750 = vrot.lane.b32.xlu0 %v1284, 118
        %v4751 = vpop.permute.xlu0 %4750
        %4752 = vrot.lane.b32.xlu0 %v1285, 118
        %v4753 = vpop.permute.xlu0 %4752
        %4754 = vrot.lane.b32.xlu0 %v1236, 118
        %v4755 = vpop.permute.xlu0 %4754
        %4756 = vrot.lane.b32.xlu0 %v1286, 118
        %v4757 = vpop.permute.xlu0 %4756
        %4758 = vrot.lane.b32.xlu0 %v1287, 118
        %v4759 = vpop.permute.xlu0 %4758
        %4760 = vrot.lane.b32.xlu0 %v1237, 118
        %v4761 = vpop.permute.xlu0 %4760
        %4762 = vrot.lane.b32.xlu0 %v1288, 118
        %v4763 = vpop.permute.xlu0 %4762
        %4764 = vrot.lane.b32.xlu0 %v1289, 118
        %v4765 = vpop.permute.xlu0 %4764
        %4766 = vrot.lane.b32.xlu0 %v1290, 118
        %v4767 = vpop.permute.xlu0 %4766
        %4768 = vrot.lane.b32.xlu0 %v1238, 118
        %v4769 = vpop.permute.xlu0 %4768
        %4770 = vrot.lane.b32.xlu0 %v1291, 118
        %v4771 = vpop.permute.xlu0 %4770
        %4772 = vrot.lane.b32.xlu0 %v1292, 118
        %v4773 = vpop.permute.xlu0 %4772
        %4774 = vrot.lane.b32.xlu0 %v1293, 118
        %v4775 = vpop.permute.xlu0 %4774
        %4776 = vrot.lane.b32.xlu0 %v1294, 118
        %v4777 = vpop.permute.xlu0 %4776
        %4778 = vrot.lane.b32.xlu0 %v1295, 118
        %v4779 = vpop.permute.xlu0 %4778
        %4780 = vrot.lane.b32.xlu0 %v1296, 118
        %v4781 = vpop.permute.xlu0 %4780
        %4782 = vrot.lane.b32.xlu0 %v1240, 118
        %v4783 = vpop.permute.xlu0 %4782
        %4784 = vrot.lane.b32.xlu0 %v1297, 118
        %v4785 = vpop.permute.xlu0 %4784
        %4786 = vrot.lane.b32.xlu0 %v1298, 118
        %v4787 = vpop.permute.xlu0 %4786
        %4788 = vrot.lane.b32.xlu0 %v1299, 118
        %v4789 = vpop.permute.xlu0 %4788
        %4790 = vrot.lane.b32.xlu0 %v1241, 118
        %v4791 = vpop.permute.xlu0 %4790
        %4792 = vrot.lane.b32.xlu0 %v1300, 118
        %v4793 = vpop.permute.xlu0 %4792
        %4794 = vrot.lane.b32.xlu0 %v1301, 118
        %v4795 = vpop.permute.xlu0 %4794
        %4796 = vrot.lane.b32.xlu0 %v1242, 118
        %v4797 = vpop.permute.xlu0 %4796
        %4798 = vrot.lane.b32.xlu0 %v1302, 118
        %v4799 = vpop.permute.xlu0 %4798
        %4800 = vrot.lane.b32.xlu0 %v1303, 118
        %v4801 = vpop.permute.xlu0 %4800
        %4802 = vrot.lane.b32.xlu0 %v1304, 118
        %v4803 = vpop.permute.xlu0 %4802
        %4804 = vrot.lane.b32.xlu0 %v1243, 118
        %v4805 = vpop.permute.xlu0 %4804
        %4806 = vrot.lane.b32.xlu0 %v1305, 118
        %v4807 = vpop.permute.xlu0 %4806
        %4808 = vrot.lane.b32.xlu0 %v1306, 118
        %v4809 = vpop.permute.xlu0 %4808
        %4810 = vrot.lane.b32.xlu0 %v1244, 118
        %v4811 = vpop.permute.xlu0 %4810
        %4812 = vrot.lane.b32.xlu0 %v1307, 118
        %v4813 = vpop.permute.xlu0 %4812
        %4814 = vrot.lane.b32.xlu0 %v1308, 118
        %v4815 = vpop.permute.xlu0 %4814
        %4816 = vrot.lane.b32.xlu0 %v1309, 118
        %v4817 = vpop.permute.xlu0 %4816
        %4818 = vrot.lane.b32.xlu0 %v1245, 118
        %v4819 = vpop.permute.xlu0 %4818
        %4820 = vrot.lane.b32.xlu0 %v1310, 118
        %v4821 = vpop.permute.xlu0 %4820
        %4822 = vrot.lane.b32.xlu0 %v1311, 118
        %v4823 = vpop.permute.xlu0 %4822
        %v4888 = vrot.slane %v4713, 4
        %v4889 = vsel %vm1361, %v4888, %v4697
        %v4891 = vunpack.c.l.s4 1934713408
        %v4892 = vunpack.c.0.s8 %v4891
        %v4893 = vperm.slane %v4889, %v4892
        %v4894 = vrot.slane %v4893, 4
        %v4895 = vsel %vm1361, 0.0, %v4894
        %v4896 = vrot.slane %v4745, 4
        %v4897 = vsel %vm1361, %v4896, %v4729
        %v4899 = vunpack.c.l.s4 1934713408
        %v4900 = vunpack.c.0.s8 %v4899
        %v4901 = vperm.slane %v4897, %v4900
        %v4902 = vrot.slane %v4901, 4
        %v4903 = vsel %vm1361, 0.0, %v4902
        %v4904 = vrot.slane %v4777, 4
        %v4905 = vsel %vm1361, %v4904, %v4761
        %v4907 = vunpack.c.l.s4 1934713408
        %v4908 = vunpack.c.0.s8 %v4907
        %v4909 = vperm.slane %v4905, %v4908
        %v4910 = vrot.slane %v4909, 4
        %v4911 = vsel %vm1361, 0.0, %v4910
        %v4912 = vrot.slane %v4809, 4
        %v4913 = vsel %vm1361, %v4912, %v4793
        %v4915 = vunpack.c.l.s4 1934713408
        %v4916 = vunpack.c.0.s8 %v4915
        %v4917 = vperm.slane %v4913, %v4916
        %v4918 = vrot.slane %v4917, 4
        %v4919 = vsel %vm1361, 0.0, %v4918
        %v4920 = vrot.slane %v4715, 4
        %v4921 = vsel %vm1361, %v4920, %v4699
        %v4923 = vunpack.c.l.s4 1934713408
        %v4924 = vunpack.c.0.s8 %v4923
        %v4925 = vperm.slane %v4921, %v4924
        %v4926 = vrot.slane %v4925, 4
        %v4927 = vsel %vm1361, 0.0, %v4926
        %v4928 = vrot.slane %v4747, 4
        %v4929 = vsel %vm1361, %v4928, %v4731
        %v4931 = vunpack.c.l.s4 1934713408
        %v4932 = vunpack.c.0.s8 %v4931
        %v4933 = vperm.slane %v4929, %v4932
        %v4934 = vrot.slane %v4933, 4
        %v4935 = vsel %vm1361, 0.0, %v4934
        %v4936 = vrot.slane %v4779, 4
        %v4937 = vsel %vm1361, %v4936, %v4763
        %v4939 = vunpack.c.l.s4 1934713408
        %v4940 = vunpack.c.0.s8 %v4939
        %v4941 = vperm.slane %v4937, %v4940
        %v4942 = vrot.slane %v4941, 4
        %v4943 = vsel %vm1361, 0.0, %v4942
        %v4944 = vrot.slane %v4811, 4
        %v4945 = vsel %vm1361, %v4944, %v4795
        %v4947 = vunpack.c.l.s4 1934713408
        %v4948 = vunpack.c.0.s8 %v4947
        %v4949 = vperm.slane %v4945, %v4948
        %v4950 = vrot.slane %v4949, 4
        %v4951 = vsel %vm1361, 0.0, %v4950
        %v4952 = vrot.slane %v4717, 4
        %v4953 = vsel %vm1361, %v4952, %v4701
        %v4955 = vunpack.c.l.s4 1934713408
        %v4956 = vunpack.c.0.s8 %v4955
        %v4957 = vperm.slane %v4953, %v4956
        %v4958 = vrot.slane %v4957, 4
        %v4959 = vsel %vm1361, 0.0, %v4958
        %v4960 = vrot.slane %v4749, 4
        %v4961 = vsel %vm1361, %v4960, %v4733
        %v4963 = vunpack.c.l.s4 1934713408
        %v4964 = vunpack.c.0.s8 %v4963
        %v4965 = vperm.slane %v4961, %v4964
        %v4966 = vrot.slane %v4965, 4
        %v4967 = vsel %vm1361, 0.0, %v4966
        %v4968 = vrot.slane %v4781, 4
        %v4969 = vsel %vm1361, %v4968, %v4765
        %v4971 = vunpack.c.l.s4 1934713408
        %v4972 = vunpack.c.0.s8 %v4971
        %v4973 = vperm.slane %v4969, %v4972
        %v4974 = vrot.slane %v4973, 4
        %v4975 = vsel %vm1361, 0.0, %v4974
        %v4976 = vrot.slane %v4813, 4
        %v4977 = vsel %vm1361, %v4976, %v4797
        %v4979 = vunpack.c.l.s4 1934713408
        %v4980 = vunpack.c.0.s8 %v4979
        %v4981 = vperm.slane %v4977, %v4980
        %v4982 = vrot.slane %v4981, 4
        %v4983 = vsel %vm1361, 0.0, %v4982
        %v4984 = vrot.slane %v4719, 4
        %v4985 = vsel %vm1361, %v4984, %v4703
        %v4987 = vunpack.c.l.s4 1934713408
        %v4988 = vunpack.c.0.s8 %v4987
        %v4989 = vperm.slane %v4985, %v4988
        %v4990 = vrot.slane %v4989, 4
        %v4991 = vsel %vm1361, 0.0, %v4990
        %v4992 = vrot.slane %v4751, 4
        %v4993 = vsel %vm1361, %v4992, %v4735
        %v4995 = vunpack.c.l.s4 1934713408
        %v4996 = vunpack.c.0.s8 %v4995
        %v4997 = vperm.slane %v4993, %v4996
        %v4998 = vrot.slane %v4997, 4
        %v4999 = vsel %vm1361, 0.0, %v4998
        %v5000 = vrot.slane %v4783, 4
        %v5001 = vsel %vm1361, %v5000, %v4767
        %v5003 = vunpack.c.l.s4 1934713408
        %v5004 = vunpack.c.0.s8 %v5003
        %v5005 = vperm.slane %v5001, %v5004
        %v5006 = vrot.slane %v5005, 4
        %v5007 = vsel %vm1361, 0.0, %v5006
        %v5008 = vrot.slane %v4815, 4
        %v5009 = vsel %vm1361, %v5008, %v4799
        %v5011 = vunpack.c.l.s4 1934713408
        %v5012 = vunpack.c.0.s8 %v5011
        %v5013 = vperm.slane %v5009, %v5012
        %v5014 = vrot.slane %v5013, 4
        %v5015 = vsel %vm1361, 0.0, %v5014
        %v5016 = vrot.slane %v4721, 4
        %v5017 = vsel %vm1361, %v5016, %v4705
        %v5019 = vunpack.c.l.s4 1934713408
        %v5020 = vunpack.c.0.s8 %v5019
        %v5021 = vperm.slane %v5017, %v5020
        %v5022 = vrot.slane %v5021, 4
        %v5023 = vsel %vm1361, 0.0, %v5022
        %v5024 = vrot.slane %v4753, 4
        %v5025 = vsel %vm1361, %v5024, %v4737
        %v5027 = vunpack.c.l.s4 1934713408
        %v5028 = vunpack.c.0.s8 %v5027
        %v5029 = vperm.slane %v5025, %v5028
        %v5030 = vrot.slane %v5029, 4
        %v5031 = vsel %vm1361, 0.0, %v5030
        %v5032 = vrot.slane %v4785, 4
        %v5033 = vsel %vm1361, %v5032, %v4769
        %v5035 = vunpack.c.l.s4 1934713408
        %v5036 = vunpack.c.0.s8 %v5035
        %v5037 = vperm.slane %v5033, %v5036
        %v5038 = vrot.slane %v5037, 4
        %v5039 = vsel %vm1361, 0.0, %v5038
        %v5040 = vrot.slane %v4817, 4
        %v5041 = vsel %vm1361, %v5040, %v4801
        %v5043 = vunpack.c.l.s4 1934713408
        %v5044 = vunpack.c.0.s8 %v5043
        %v5045 = vperm.slane %v5041, %v5044
        %v5046 = vrot.slane %v5045, 4
        %v5047 = vsel %vm1361, 0.0, %v5046
        %v5048 = vrot.slane %v4723, 4
        %v5049 = vsel %vm1361, %v5048, %v4707
        %v5051 = vunpack.c.l.s4 1934713408
        %v5052 = vunpack.c.0.s8 %v5051
        %v5053 = vperm.slane %v5049, %v5052
        %v5054 = vrot.slane %v5053, 4
        %v5055 = vsel %vm1361, 0.0, %v5054
        %v5056 = vrot.slane %v4755, 4
        %v5057 = vsel %vm1361, %v5056, %v4739
        %v5059 = vunpack.c.l.s4 1934713408
        %v5060 = vunpack.c.0.s8 %v5059
        %v5061 = vperm.slane %v5057, %v5060
        %v5062 = vrot.slane %v5061, 4
        %v5063 = vsel %vm1361, 0.0, %v5062
        %v5064 = vrot.slane %v4787, 4
        %v5065 = vsel %vm1361, %v5064, %v4771
        %v5067 = vunpack.c.l.s4 1934713408
        %v5068 = vunpack.c.0.s8 %v5067
        %v5069 = vperm.slane %v5065, %v5068
        %v5070 = vrot.slane %v5069, 4
        %v5071 = vsel %vm1361, 0.0, %v5070
        %v5072 = vrot.slane %v4819, 4
        %v5073 = vsel %vm1361, %v5072, %v4803
        %v5075 = vunpack.c.l.s4 1934713408
        %v5076 = vunpack.c.0.s8 %v5075
        %v5077 = vperm.slane %v5073, %v5076
        %v5078 = vrot.slane %v5077, 4
        %v5079 = vsel %vm1361, 0.0, %v5078
        %v5080 = vrot.slane %v4725, 4
        %v5081 = vsel %vm1361, %v5080, %v4709
        %v5083 = vunpack.c.l.s4 1934713408
        %v5084 = vunpack.c.0.s8 %v5083
        %v5085 = vperm.slane %v5081, %v5084
        %v5086 = vrot.slane %v5085, 4
        %v5087 = vsel %vm1361, 0.0, %v5086
        %v5088 = vrot.slane %v4757, 4
        %v5089 = vsel %vm1361, %v5088, %v4741
        %v5091 = vunpack.c.l.s4 1934713408
        %v5092 = vunpack.c.0.s8 %v5091
        %v5093 = vperm.slane %v5089, %v5092
        %v5094 = vrot.slane %v5093, 4
        %v5095 = vsel %vm1361, 0.0, %v5094
        %v5096 = vrot.slane %v4789, 4
        %v5097 = vsel %vm1361, %v5096, %v4773
        %v5099 = vunpack.c.l.s4 1934713408
        %v5100 = vunpack.c.0.s8 %v5099
        %v5101 = vperm.slane %v5097, %v5100
        %v5102 = vrot.slane %v5101, 4
        %v5103 = vsel %vm1361, 0.0, %v5102
        %v5104 = vrot.slane %v4821, 4
        %v5105 = vsel %vm1361, %v5104, %v4805
        %v5107 = vunpack.c.l.s4 1934713408
        %v5108 = vunpack.c.0.s8 %v5107
        %v5109 = vperm.slane %v5105, %v5108
        %v5110 = vrot.slane %v5109, 4
        %v5111 = vsel %vm1361, 0.0, %v5110
        %v5112 = vrot.slane %v4727, 4
        %v5113 = vsel %vm1361, %v5112, %v4711
        %v5115 = vunpack.c.l.s4 1934713408
        %v5116 = vunpack.c.0.s8 %v5115
        %v5117 = vperm.slane %v5113, %v5116
        %v5118 = vrot.slane %v5117, 4
        %v5119 = vsel %vm1361, 0.0, %v5118
        %v5120 = vrot.slane %v4759, 4
        %v5121 = vsel %vm1361, %v5120, %v4743
        %v5123 = vunpack.c.l.s4 1934713408
        %v5124 = vunpack.c.0.s8 %v5123
        %v5125 = vperm.slane %v5121, %v5124
        %v5126 = vrot.slane %v5125, 4
        %v5127 = vsel %vm1361, 0.0, %v5126
        %v5128 = vrot.slane %v4791, 4
        %v5129 = vsel %vm1361, %v5128, %v4775
        %v5131 = vunpack.c.l.s4 1934713408
        %v5132 = vunpack.c.0.s8 %v5131
        %v5133 = vperm.slane %v5129, %v5132
        %v5134 = vrot.slane %v5133, 4
        %v5135 = vsel %vm1361, 0.0, %v5134
        %v5136 = vrot.slane %v4823, 4
        %v5137 = vsel %vm1361, %v5136, %v4807
        %v5139 = vunpack.c.l.s4 1934713408
        %v5140 = vunpack.c.0.s8 %v5139
        %v5141 = vperm.slane %v5137, %v5140
        %v5142 = vrot.slane %v5141, 4
        %v5143 = vsel %vm1361, 0.0, %v5142
        %5148 = vst [vmem:[#allocation1] ss:$4 sm:$0xff] %v4893
        %s5149 = scalar_lea.vmem [#allocation1], 1
        %5150 = vst [vmem:[%s5149] ss:$4 sm:$0xff] %v4901
        %s5151 = scalar_lea.vmem [#allocation1], 2
        %5152 = vst [vmem:[%s5151] ss:$4 sm:$0xff] %v4909
        %s5153 = scalar_lea.vmem [#allocation1], 3
        %5154 = vst [vmem:[%s5153] ss:$4 sm:$0xff] %v4917
        %v5155 = vld.sshfl [vmem:[#allocation1] sm:$0xff pattern:$0x73625140]
        %5161 = vst [vmem:[#allocation1] ss:$4 sm:$0xff] %v4895
        %s5162 = scalar_lea.vmem [#allocation1], 1
        %5163 = vst [vmem:[%s5162] ss:$4 sm:$0xff] %v4903
        %s5164 = scalar_lea.vmem [#allocation1], 2
        %5165 = vst [vmem:[%s5164] ss:$4 sm:$0xff] %v4911
        %s5166 = scalar_lea.vmem [#allocation1], 3
        %5167 = vst [vmem:[%s5166] ss:$4 sm:$0xff] %v4919
        %v5168 = vld.sshfl [vmem:[#allocation1] sm:$0xff pattern:$0x73625140]
        %5169 = vrot.lane.b32.xlu0 %v5168, 2
        %v5170 = vpop.permute.xlu0 %5169
        %5176 = vst [vmem:[#allocation1] ss:$4 sm:$0xff] %v4925
        %s5177 = scalar_lea.vmem [#allocation1], 1
        %5178 = vst [vmem:[%s5177] ss:$4 sm:$0xff] %v4933
        %s5179 = scalar_lea.vmem [#allocation1], 2
        %5180 = vst [vmem:[%s5179] ss:$4 sm:$0xff] %v4941
        %s5181 = scalar_lea.vmem [#allocation1], 3
        %5182 = vst [vmem:[%s5181] ss:$4 sm:$0xff] %v4949
        %v5183 = vld.sshfl [vmem:[#allocation1] sm:$0xff pattern:$0x73625140]
        %5184 = vrot.lane.b32.xlu0 %v5183, 4
        %v5185 = vpop.permute.xlu0 %5184
        %5191 = vst [vmem:[#allocation1] ss:$4 sm:$0xff] %v4927
        %s5192 = scalar_lea.vmem [#allocation1], 1
        %5193 = vst [vmem:[%s5192] ss:$4 sm:$0xff] %v4935
        %s5194 = scalar_lea.vmem [#allocation1], 2
        %5195 = vst [vmem:[%s5194] ss:$4 sm:$0xff] %v4943
        %s5196 = scalar_lea.vmem [#allocation1], 3
        %5197 = vst [vmem:[%s5196] ss:$4 sm:$0xff] %v4951
        %v5198 = vld.sshfl [vmem:[#allocation1] sm:$0xff pattern:$0x73625140]
        %5199 = vrot.lane.b32.xlu0 %v5198, 6
        %v5200 = vpop.permute.xlu0 %5199
        %5206 = vst [vmem:[#allocation1] ss:$4 sm:$0xff] %v4957
        %s5207 = scalar_lea.vmem [#allocation1], 1
        %5208 = vst [vmem:[%s5207] ss:$4 sm:$0xff] %v4965
        %s5209 = scalar_lea.vmem [#allocation1], 2
        %5210 = vst [vmem:[%s5209] ss:$4 sm:$0xff] %v4973
        %s5211 = scalar_lea.vmem [#allocation1], 3
        %5212 = vst [vmem:[%s5211] ss:$4 sm:$0xff] %v4981
        %v5213 = vld.sshfl [vmem:[#allocation1] sm:$0xff pattern:$0x73625140]
        %5214 = vrot.lane.b32.xlu0 %v5213, 8
        %v5215 = vpop.permute.xlu0 %5214
        %5221 = vst [vmem:[#allocation1] ss:$4 sm:$0xff] %v4959
        %s5222 = scalar_lea.vmem [#allocation1], 1
        %5223 = vst [vmem:[%s5222] ss:$4 sm:$0xff] %v4967
        %s5224 = scalar_lea.vmem [#allocation1], 2
        %5225 = vst [vmem:[%s5224] ss:$4 sm:$0xff] %v4975
        %s5226 = scalar_lea.vmem [#allocation1], 3
        %5227 = vst [vmem:[%s5226] ss:$4 sm:$0xff] %v4983
        %v5228 = vld.sshfl [vmem:[#allocation1] sm:$0xff pattern:$0x73625140]
        %5229 = vrot.lane.b32.xlu0 %v5228, 10
        %v5230 = vpop.permute.xlu0 %5229
        %5236 = vst [vmem:[#allocation1] ss:$4 sm:$0xff] %v4989
        %s5237 = scalar_lea.vmem [#allocation1], 1
        %5238 = vst [vmem:[%s5237] ss:$4 sm:$0xff] %v4997
        %s5239 = scalar_lea.vmem [#allocation1], 2
        %5240 = vst [vmem:[%s5239] ss:$4 sm:$0xff] %v5005
        %s5241 = scalar_lea.vmem [#allocation1], 3
        %5242 = vst [vmem:[%s5241] ss:$4 sm:$0xff] %v5013
        %v5243 = vld.sshfl [vmem:[#allocation1] sm:$0xff pattern:$0x73625140]
        %5244 = vrot.lane.b32.xlu0 %v5243, 12
        %v5245 = vpop.permute.xlu0 %5244
        %5251 = vst [vmem:[#allocation1] ss:$4 sm:$0xff] %v4991
        %s5252 = scalar_lea.vmem [#allocation1], 1
        %5253 = vst [vmem:[%s5252] ss:$4 sm:$0xff] %v4999
        %s5254 = scalar_lea.vmem [#allocation1], 2
        %5255 = vst [vmem:[%s5254] ss:$4 sm:$0xff] %v5007
        %s5256 = scalar_lea.vmem [#allocation1], 3
        %5257 = vst [vmem:[%s5256] ss:$4 sm:$0xff] %v5015
        %v5258 = vld.sshfl [vmem:[#allocation1] sm:$0xff pattern:$0x73625140]
        %5259 = vrot.lane.b32.xlu0 %v5258, 14
        %v5260 = vpop.permute.xlu0 %5259
        %5266 = vst [vmem:[#allocation1] ss:$4 sm:$0xff] %v5021
        %s5267 = scalar_lea.vmem [#allocation1], 1
        %5268 = vst [vmem:[%s5267] ss:$4 sm:$0xff] %v5029
        %s5269 = scalar_lea.vmem [#allocation1], 2
        %5270 = vst [vmem:[%s5269] ss:$4 sm:$0xff] %v5037
        %s5271 = scalar_lea.vmem [#allocation1], 3
        %5272 = vst [vmem:[%s5271] ss:$4 sm:$0xff] %v5045
        %v5273 = vld.sshfl [vmem:[#allocation1] sm:$0xff pattern:$0x73625140]
        %5274 = vrot.lane.b32.xlu0 %v5273, 16
        %v5275 = vpop.permute.xlu0 %5274
        %5281 = vst [vmem:[#allocation1] ss:$4 sm:$0xff] %v5023
        %s5282 = scalar_lea.vmem [#allocation1], 1
        %5283 = vst [vmem:[%s5282] ss:$4 sm:$0xff] %v5031
        %s5284 = scalar_lea.vmem [#allocation1], 2
        %5285 = vst [vmem:[%s5284] ss:$4 sm:$0xff] %v5039
        %s5286 = scalar_lea.vmem [#allocation1], 3
        %5287 = vst [vmem:[%s5286] ss:$4 sm:$0xff] %v5047
        %v5288 = vld.sshfl [vmem:[#allocation1] sm:$0xff pattern:$0x73625140]
        %5289 = vrot.lane.b32.xlu0 %v5288, 18
        %v5290 = vpop.permute.xlu0 %5289
        %5296 = vst [vmem:[#allocation1] ss:$4 sm:$0xff] %v5053
        %s5297 = scalar_lea.vmem [#allocation1], 1
        %5298 = vst [vmem:[%s5297] ss:$4 sm:$0xff] %v5061
        %s5299 = scalar_lea.vmem [#allocation1], 2
        %5300 = vst [vmem:[%s5299] ss:$4 sm:$0xff] %v5069
        %s5301 = scalar_lea.vmem [#allocation1], 3
        %5302 = vst [vmem:[%s5301] ss:$4 sm:$0xff] %v5077
        %v5303 = vld.sshfl [vmem:[#allocation1] sm:$0xff pattern:$0x73625140]
        %5304 = vrot.lane.b32.xlu0 %v5303, 20
        %v5305 = vpop.permute.xlu0 %5304
        %5311 = vst [vmem:[#allocation1] ss:$4 sm:$0xff] %v5055
        %s5312 = scalar_lea.vmem [#allocation1], 1
        %5313 = vst [vmem:[%s5312] ss:$4 sm:$0xff] %v5063
        %s5314 = scalar_lea.vmem [#allocation1], 2
        %5315 = vst [vmem:[%s5314] ss:$4 sm:$0xff] %v5071
        %s5316 = scalar_lea.vmem [#allocation1], 3
        %5317 = vst [vmem:[%s5316] ss:$4 sm:$0xff] %v5079
        %v5318 = vld.sshfl [vmem:[#allocation1] sm:$0xff pattern:$0x73625140]
        %5319 = vrot.lane.b32.xlu0 %v5318, 22
        %v5320 = vpop.permute.xlu0 %5319
        %5326 = vst [vmem:[#allocation1] ss:$4 sm:$0xff] %v5085
        %s5327 = scalar_lea.vmem [#allocation1], 1
        %5328 = vst [vmem:[%s5327] ss:$4 sm:$0xff] %v5093
        %s5329 = scalar_lea.vmem [#allocation1], 2
        %5330 = vst [vmem:[%s5329] ss:$4 sm:$0xff] %v5101
        %s5331 = scalar_lea.vmem [#allocation1], 3
        %5332 = vst [vmem:[%s5331] ss:$4 sm:$0xff] %v5109
        %v5333 = vld.sshfl [vmem:[#allocation1] sm:$0xff pattern:$0x73625140]
        %5334 = vrot.lane.b32.xlu0 %v5333, 24
        %v5335 = vpop.permute.xlu0 %5334
        %5341 = vst [vmem:[#allocation1] ss:$4 sm:$0xff] %v5087
        %s5342 = scalar_lea.vmem [#allocation1], 1
        %5343 = vst [vmem:[%s5342] ss:$4 sm:$0xff] %v5095
        %s5344 = scalar_lea.vmem [#allocation1], 2
        %5345 = vst [vmem:[%s5344] ss:$4 sm:$0xff] %v5103
        %s5346 = scalar_lea.vmem [#allocation1], 3
        %5347 = vst [vmem:[%s5346] ss:$4 sm:$0xff] %v5111
        %v5348 = vld.sshfl [vmem:[#allocation1] sm:$0xff pattern:$0x73625140]
        %5349 = vrot.lane.b32.xlu0 %v5348, 26
        %v5350 = vpop.permute.xlu0 %5349
        %5356 = vst [vmem:[#allocation1] ss:$4 sm:$0xff] %v5117
        %s5357 = scalar_lea.vmem [#allocation1], 1
        %5358 = vst [vmem:[%s5357] ss:$4 sm:$0xff] %v5125
        %s5359 = scalar_lea.vmem [#allocation1], 2
        %5360 = vst [vmem:[%s5359] ss:$4 sm:$0xff] %v5133
        %s5361 = scalar_lea.vmem [#allocation1], 3
        %5362 = vst [vmem:[%s5361] ss:$4 sm:$0xff] %v5141
        %v5363 = vld.sshfl [vmem:[#allocation1] sm:$0xff pattern:$0x73625140]
        %5364 = vrot.lane.b32.xlu0 %v5363, 28
        %v5365 = vpop.permute.xlu0 %5364
        %5371 = vst [vmem:[#allocation1] ss:$4 sm:$0xff] %v5119
        %s5372 = scalar_lea.vmem [#allocation1], 1
        %5373 = vst [vmem:[%s5372] ss:$4 sm:$0xff] %v5127
        %s5374 = scalar_lea.vmem [#allocation1], 2
        %5375 = vst [vmem:[%s5374] ss:$4 sm:$0xff] %v5135
        %s5376 = scalar_lea.vmem [#allocation1], 3
        %5377 = vst [vmem:[%s5376] ss:$4 sm:$0xff] %v5143
        %v5378 = vld.sshfl [vmem:[#allocation1] sm:$0xff pattern:$0x73625140]
        %5379 = vrot.lane.b32.xlu0 %v5378, 30
        %v5380 = vpop.permute.xlu0 %5379
        %v5382 = vsel %vm1855, %v5155, %v5170
        %v5383 = vsel %vm899, %v5382, %v5185
        %v5384 = vsel %vm1858, %v5383, %v5200
        %v5385 = vsel %vm918, %v5384, %v5215
        %v5386 = vsel %vm1861, %v5385, %v5230
        %v5387 = vsel %vm937, %v5386, %v5245
        %v5388 = vsel %vm1864, %v5387, %v5260
        %v5389 = vsel %vm956, %v5388, %v5275
        %v5390 = vsel %vm1867, %v5389, %v5290
        %v5391 = vsel %vm975, %v5390, %v5305
        %v5392 = vsel %vm1870, %v5391, %v5320
        %v5393 = vsel %vm994, %v5392, %v5335
        %v5394 = vsel %vm1873, %v5393, %v5350
        %v5395 = vsel %vm1013, %v5394, %v5365
        %v5396 = vsel %vm1876, %v5395, %v5380
        %5398 = vrot.lane.b32.xlu0 %v5396, 32
        %v5399 = vpop.permute.xlu0 %5398
        %v5401 = vsel %vm1032, %v4695, %v5399
        %s5402 = scalar_lea.vmem %s215, 16 [#allocation3]
        %5403 = vst.msk [vmem:[%s5402] sm:$0xff] %vm2584, %v5401
        %5404 = vrot.lane.b32.xlu0 %v1228, 116
        %v5405 = vpop.permute.xlu0 %5404
        %5406 = vrot.lane.b32.xlu0 %v1264, 116
        %v5407 = vpop.permute.xlu0 %5406
        %5408 = vrot.lane.b32.xlu0 %v1265, 116
        %v5409 = vpop.permute.xlu0 %5408
        %5410 = vrot.lane.b32.xlu0 %v1266, 116
        %v5411 = vpop.permute.xlu0 %5410
        %5412 = vrot.lane.b32.xlu0 %v1229, 116
        %v5413 = vpop.permute.xlu0 %5412
        %5414 = vrot.lane.b32.xlu0 %v1267, 116
        %v5415 = vpop.permute.xlu0 %5414
        %5416 = vrot.lane.b32.xlu0 %v1268, 116
        %v5417 = vpop.permute.xlu0 %5416
        %5418 = vrot.lane.b32.xlu0 %v1269, 116
        %v5419 = vpop.permute.xlu0 %5418
        %5420 = vrot.lane.b32.xlu0 %v1270, 116
        %v5421 = vpop.permute.xlu0 %5420
        %5422 = vrot.lane.b32.xlu0 %v1271, 116
        %v5423 = vpop.permute.xlu0 %5422
        %5424 = vrot.lane.b32.xlu0 %v1272, 116
        %v5425 = vpop.permute.xlu0 %5424
        %5426 = vrot.lane.b32.xlu0 %v1231, 116
        %v5427 = vpop.permute.xlu0 %5426
        %5428 = vrot.lane.b32.xlu0 %v1273, 116
        %v5429 = vpop.permute.xlu0 %5428
        %5430 = vrot.lane.b32.xlu0 %v1274, 116
        %v5431 = vpop.permute.xlu0 %5430
        %5432 = vrot.lane.b32.xlu0 %v1275, 116
        %v5433 = vpop.permute.xlu0 %5432
        %5434 = vrot.lane.b32.xlu0 %v1232, 116
        %v5435 = vpop.permute.xlu0 %5434
        %5436 = vrot.lane.b32.xlu0 %v1276, 116
        %v5437 = vpop.permute.xlu0 %5436
        %5438 = vrot.lane.b32.xlu0 %v1277, 116
        %v5439 = vpop.permute.xlu0 %5438
        %5440 = vrot.lane.b32.xlu0 %v1233, 116
        %v5441 = vpop.permute.xlu0 %5440
        %5442 = vrot.lane.b32.xlu0 %v1278, 116
        %v5443 = vpop.permute.xlu0 %5442
        %5444 = vrot.lane.b32.xlu0 %v1279, 116
        %v5445 = vpop.permute.xlu0 %5444
        %5446 = vrot.lane.b32.xlu0 %v1280, 116
        %v5447 = vpop.permute.xlu0 %5446
        %5448 = vrot.lane.b32.xlu0 %v1234, 116
        %v5449 = vpop.permute.xlu0 %5448
        %5450 = vrot.lane.b32.xlu0 %v1281, 116
        %v5451 = vpop.permute.xlu0 %5450
        %5452 = vrot.lane.b32.xlu0 %v1282, 116
        %v5453 = vpop.permute.xlu0 %5452
        %5454 = vrot.lane.b32.xlu0 %v1235, 116
        %v5455 = vpop.permute.xlu0 %5454
        %5456 = vrot.lane.b32.xlu0 %v1283, 116
        %v5457 = vpop.permute.xlu0 %5456
        %5458 = vrot.lane.b32.xlu0 %v1284, 116
        %v5459 = vpop.permute.xlu0 %5458
        %5460 = vrot.lane.b32.xlu0 %v1285, 116
        %v5461 = vpop.permute.xlu0 %5460
        %5462 = vrot.lane.b32.xlu0 %v1236, 116
        %v5463 = vpop.permute.xlu0 %5462
        %5464 = vrot.lane.b32.xlu0 %v1286, 116
        %v5465 = vpop.permute.xlu0 %5464
        %5466 = vrot.lane.b32.xlu0 %v1287, 116
        %v5467 = vpop.permute.xlu0 %5466
        %5468 = vrot.lane.b32.xlu0 %v1237, 116
        %v5469 = vpop.permute.xlu0 %5468
        %5470 = vrot.lane.b32.xlu0 %v1288, 116
        %v5471 = vpop.permute.xlu0 %5470
        %5472 = vrot.lane.b32.xlu0 %v1289, 116
        %v5473 = vpop.permute.xlu0 %5472
        %5474 = vrot.lane.b32.xlu0 %v1290, 116
        %v5475 = vpop.permute.xlu0 %5474
        %5476 = vrot.lane.b32.xlu0 %v1238, 116
        %v5477 = vpop.permute.xlu0 %5476
        %5478 = vrot.lane.b32.xlu0 %v1291, 116
        %v5479 = vpop.permute.xlu0 %5478
        %5480 = vrot.lane.b32.xlu0 %v1292, 116
        %v5481 = vpop.permute.xlu0 %5480
        %5482 = vrot.lane.b32.xlu0 %v1293, 116
        %v5483 = vpop.permute.xlu0 %5482
        %5484 = vrot.lane.b32.xlu0 %v1294, 116
        %v5485 = vpop.permute.xlu0 %5484
        %5486 = vrot.lane.b32.xlu0 %v1295, 116
        %v5487 = vpop.permute.xlu0 %5486
        %5488 = vrot.lane.b32.xlu0 %v1296, 116
        %v5489 = vpop.permute.xlu0 %5488
        %5490 = vrot.lane.b32.xlu0 %v1240, 116
        %v5491 = vpop.permute.xlu0 %5490
        %5492 = vrot.lane.b32.xlu0 %v1297, 116
        %v5493 = vpop.permute.xlu0 %5492
        %5494 = vrot.lane.b32.xlu0 %v1298, 116
        %v5495 = vpop.permute.xlu0 %5494
        %5496 = vrot.lane.b32.xlu0 %v1299, 116
        %v5497 = vpop.permute.xlu0 %5496
        %5498 = vrot.lane.b32.xlu0 %v1241, 116
        %v5499 = vpop.permute.xlu0 %5498
        %5500 = vrot.lane.b32.xlu0 %v1300, 116
        %v5501 = vpop.permute.xlu0 %5500
        %5502 = vrot.lane.b32.xlu0 %v1301, 116
        %v5503 = vpop.permute.xlu0 %5502
        %5504 = vrot.lane.b32.xlu0 %v1242, 116
        %v5505 = vpop.permute.xlu0 %5504
        %5506 = vrot.lane.b32.xlu0 %v1302, 116
        %v5507 = vpop.permute.xlu0 %5506
        %5508 = vrot.lane.b32.xlu0 %v1303, 116
        %v5509 = vpop.permute.xlu0 %5508
        %5510 = vrot.lane.b32.xlu0 %v1304, 116
        %v5511 = vpop.permute.xlu0 %5510
        %5512 = vrot.lane.b32.xlu0 %v1243, 116
        %v5513 = vpop.permute.xlu0 %5512
        %5514 = vrot.lane.b32.xlu0 %v1305, 116
        %v5515 = vpop.permute.xlu0 %5514
        %5516 = vrot.lane.b32.xlu0 %v1306, 116
        %v5517 = vpop.permute.xlu0 %5516
        %5518 = vrot.lane.b32.xlu0 %v1244, 116
        %v5519 = vpop.permute.xlu0 %5518
        %5520 = vrot.lane.b32.xlu0 %v1307, 116
        %v5521 = vpop.permute.xlu0 %5520
        %5522 = vrot.lane.b32.xlu0 %v1308, 116
        %v5523 = vpop.permute.xlu0 %5522
        %5524 = vrot.lane.b32.xlu0 %v1309, 116
        %v5525 = vpop.permute.xlu0 %5524
        %5526 = vrot.lane.b32.xlu0 %v1245, 116
        %v5527 = vpop.permute.xlu0 %5526
        %5528 = vrot.lane.b32.xlu0 %v1310, 116
        %v5529 = vpop.permute.xlu0 %5528
        %5530 = vrot.lane.b32.xlu0 %v1311, 116
        %v5531 = vpop.permute.xlu0 %5530
        %v5596 = vrot.slane %v5421, 4
        %v5597 = vsel %vm1361, %v5596, %v5405
        %v5599 = vunpack.c.l.s4 1934713408
        %v5600 = vunpack.c.0.s8 %v5599
        %v5601 = vperm.slane %v5597, %v5600
        %v5602 = vrot.slane %v5601, 4
        %v5603 = vsel %vm1361, 0.0, %v5602
        %v5604 = vrot.slane %v5453, 4
        %v5605 = vsel %vm1361, %v5604, %v5437
        %v5607 = vunpack.c.l.s4 1934713408
        %v5608 = vunpack.c.0.s8 %v5607
        %v5609 = vperm.slane %v5605, %v5608
        %v5610 = vrot.slane %v5609, 4
        %v5611 = vsel %vm1361, 0.0, %v5610
        %v5612 = vrot.slane %v5485, 4
        %v5613 = vsel %vm1361, %v5612, %v5469
        %v5615 = vunpack.c.l.s4 1934713408
        %v5616 = vunpack.c.0.s8 %v5615
        %v5617 = vperm.slane %v5613, %v5616
        %v5618 = vrot.slane %v5617, 4
        %v5619 = vsel %vm1361, 0.0, %v5618
        %v5620 = vrot.slane %v5517, 4
        %v5621 = vsel %vm1361, %v5620, %v5501
        %v5623 = vunpack.c.l.s4 1934713408
        %v5624 = vunpack.c.0.s8 %v5623
        %v5625 = vperm.slane %v5621, %v5624
        %v5626 = vrot.slane %v5625, 4
        %v5627 = vsel %vm1361, 0.0, %v5626
        %v5628 = vrot.slane %v5423, 4
        %v5629 = vsel %vm1361, %v5628, %v5407
        %v5631 = vunpack.c.l.s4 1934713408
        %v5632 = vunpack.c.0.s8 %v5631
        %v5633 = vperm.slane %v5629, %v5632
        %v5634 = vrot.slane %v5633, 4
        %v5635 = vsel %vm1361, 0.0, %v5634
        %v5636 = vrot.slane %v5455, 4
        %v5637 = vsel %vm1361, %v5636, %v5439
        %v5639 = vunpack.c.l.s4 1934713408
        %v5640 = vunpack.c.0.s8 %v5639
        %v5641 = vperm.slane %v5637, %v5640
        %v5642 = vrot.slane %v5641, 4
        %v5643 = vsel %vm1361, 0.0, %v5642
        %v5644 = vrot.slane %v5487, 4
        %v5645 = vsel %vm1361, %v5644, %v5471
        %v5647 = vunpack.c.l.s4 1934713408
        %v5648 = vunpack.c.0.s8 %v5647
        %v5649 = vperm.slane %v5645, %v5648
        %v5650 = vrot.slane %v5649, 4
        %v5651 = vsel %vm1361, 0.0, %v5650
        %v5652 = vrot.slane %v5519, 4
        %v5653 = vsel %vm1361, %v5652, %v5503
        %v5655 = vunpack.c.l.s4 1934713408
        %v5656 = vunpack.c.0.s8 %v5655
        %v5657 = vperm.slane %v5653, %v5656
        %v5658 = vrot.slane %v5657, 4
        %v5659 = vsel %vm1361, 0.0, %v5658
        %v5660 = vrot.slane %v5425, 4
        %v5661 = vsel %vm1361, %v5660, %v5409
        %v5663 = vunpack.c.l.s4 1934713408
        %v5664 = vunpack.c.0.s8 %v5663
        %v5665 = vperm.slane %v5661, %v5664
        %v5666 = vrot.slane %v5665, 4
        %v5667 = vsel %vm1361, 0.0, %v5666
        %v5668 = vrot.slane %v5457, 4
        %v5669 = vsel %vm1361, %v5668, %v5441
        %v5671 = vunpack.c.l.s4 1934713408
        %v5672 = vunpack.c.0.s8 %v5671
        %v5673 = vperm.slane %v5669, %v5672
        %v5674 = vrot.slane %v5673, 4
        %v5675 = vsel %vm1361, 0.0, %v5674
        %v5676 = vrot.slane %v5489, 4
        %v5677 = vsel %vm1361, %v5676, %v5473
        %v5679 = vunpack.c.l.s4 1934713408
        %v5680 = vunpack.c.0.s8 %v5679
        %v5681 = vperm.slane %v5677, %v5680
        %v5682 = vrot.slane %v5681, 4
        %v5683 = vsel %vm1361, 0.0, %v5682
        %v5684 = vrot.slane %v5521, 4
        %v5685 = vsel %vm1361, %v5684, %v5505
        %v5687 = vunpack.c.l.s4 1934713408
        %v5688 = vunpack.c.0.s8 %v5687
        %v5689 = vperm.slane %v5685, %v5688
        %v5690 = vrot.slane %v5689, 4
        %v5691 = vsel %vm1361, 0.0, %v5690
        %v5692 = vrot.slane %v5427, 4
        %v5693 = vsel %vm1361, %v5692, %v5411
        %v5695 = vunpack.c.l.s4 1934713408
        %v5696 = vunpack.c.0.s8 %v5695
        %v5697 = vperm.slane %v5693, %v5696
        %v5698 = vrot.slane %v5697, 4
        %v5699 = vsel %vm1361, 0.0, %v5698
        %v5700 = vrot.slane %v5459, 4
        %v5701 = vsel %vm1361, %v5700, %v5443
        %v5703 = vunpack.c.l.s4 1934713408
        %v5704 = vunpack.c.0.s8 %v5703
        %v5705 = vperm.slane %v5701, %v5704
        %v5706 = vrot.slane %v5705, 4
        %v5707 = vsel %vm1361, 0.0, %v5706
        %v5708 = vrot.slane %v5491, 4
        %v5709 = vsel %vm1361, %v5708, %v5475
        %v5711 = vunpack.c.l.s4 1934713408
        %v5712 = vunpack.c.0.s8 %v5711
        %v5713 = vperm.slane %v5709, %v5712
        %v5714 = vrot.slane %v5713, 4
        %v5715 = vsel %vm1361, 0.0, %v5714
        %v5716 = vrot.slane %v5523, 4
        %v5717 = vsel %vm1361, %v5716, %v5507
        %v5719 = vunpack.c.l.s4 1934713408
        %v5720 = vunpack.c.0.s8 %v5719
        %v5721 = vperm.slane %v5717, %v5720
        %v5722 = vrot.slane %v5721, 4
        %v5723 = vsel %vm1361, 0.0, %v5722
        %v5724 = vrot.slane %v5429, 4
        %v5725 = vsel %vm1361, %v5724, %v5413
        %v5727 = vunpack.c.l.s4 1934713408
        %v5728 = vunpack.c.0.s8 %v5727
        %v5729 = vperm.slane %v5725, %v5728
        %v5730 = vrot.slane %v5729, 4
        %v5731 = vsel %vm1361, 0.0, %v5730
        %v5732 = vrot.slane %v5461, 4
        %v5733 = vsel %vm1361, %v5732, %v5445
        %v5735 = vunpack.c.l.s4 1934713408
        %v5736 = vunpack.c.0.s8 %v5735
        %v5737 = vperm.slane %v5733, %v5736
        %v5738 = vrot.slane %v5737, 4
        %v5739 = vsel %vm1361, 0.0, %v5738
        %v5740 = vrot.slane %v5493, 4
        %v5741 = vsel %vm1361, %v5740, %v5477
        %v5743 = vunpack.c.l.s4 1934713408
        %v5744 = vunpack.c.0.s8 %v5743
        %v5745 = vperm.slane %v5741, %v5744
        %v5746 = vrot.slane %v5745, 4
        %v5747 = vsel %vm1361, 0.0, %v5746
        %v5748 = vrot.slane %v5525, 4
        %v5749 = vsel %vm1361, %v5748, %v5509
        %v5751 = vunpack.c.l.s4 1934713408
        %v5752 = vunpack.c.0.s8 %v5751
        %v5753 = vperm.slane %v5749, %v5752
        %v5754 = vrot.slane %v5753, 4
        %v5755 = vsel %vm1361, 0.0, %v5754
        %v5756 = vrot.slane %v5431, 4
        %v5757 = vsel %vm1361, %v5756, %v5415
        %v5759 = vunpack.c.l.s4 1934713408
        %v5760 = vunpack.c.0.s8 %v5759
        %v5761 = vperm.slane %v5757, %v5760
        %v5762 = vrot.slane %v5761, 4
        %v5763 = vsel %vm1361, 0.0, %v5762
        %v5764 = vrot.slane %v5463, 4
        %v5765 = vsel %vm1361, %v5764, %v5447
        %v5767 = vunpack.c.l.s4 1934713408
        %v5768 = vunpack.c.0.s8 %v5767
        %v5769 = vperm.slane %v5765, %v5768
        %v5770 = vrot.slane %v5769, 4
        %v5771 = vsel %vm1361, 0.0, %v5770
        %v5772 = vrot.slane %v5495, 4
        %v5773 = vsel %vm1361, %v5772, %v5479
        %v5775 = vunpack.c.l.s4 1934713408
        %v5776 = vunpack.c.0.s8 %v5775
        %v5777 = vperm.slane %v5773, %v5776
        %v5778 = vrot.slane %v5777, 4
        %v5779 = vsel %vm1361, 0.0, %v5778
        %v5780 = vrot.slane %v5527, 4
        %v5781 = vsel %vm1361, %v5780, %v5511
        %v5783 = vunpack.c.l.s4 1934713408
        %v5784 = vunpack.c.0.s8 %v5783
        %v5785 = vperm.slane %v5781, %v5784
        %v5786 = vrot.slane %v5785, 4
        %v5787 = vsel %vm1361, 0.0, %v5786
        %v5788 = vrot.slane %v5433, 4
        %v5789 = vsel %vm1361, %v5788, %v5417
        %v5791 = vunpack.c.l.s4 1934713408
        %v5792 = vunpack.c.0.s8 %v5791
        %v5793 = vperm.slane %v5789, %v5792
        %v5794 = vrot.slane %v5793, 4
        %v5795 = vsel %vm1361, 0.0, %v5794
        %v5796 = vrot.slane %v5465, 4
        %v5797 = vsel %vm1361, %v5796, %v5449
        %v5799 = vunpack.c.l.s4 1934713408
        %v5800 = vunpack.c.0.s8 %v5799
        %v5801 = vperm.slane %v5797, %v5800
        %v5802 = vrot.slane %v5801, 4
        %v5803 = vsel %vm1361, 0.0, %v5802
        %v5804 = vrot.slane %v5497, 4
        %v5805 = vsel %vm1361, %v5804, %v5481
        %v5807 = vunpack.c.l.s4 1934713408
        %v5808 = vunpack.c.0.s8 %v5807
        %v5809 = vperm.slane %v5805, %v5808
        %v5810 = vrot.slane %v5809, 4
        %v5811 = vsel %vm1361, 0.0, %v5810
        %v5812 = vrot.slane %v5529, 4
        %v5813 = vsel %vm1361, %v5812, %v5513
        %v5815 = vunpack.c.l.s4 1934713408
        %v5816 = vunpack.c.0.s8 %v5815
        %v5817 = vperm.slane %v5813, %v5816
        %v5818 = vrot.slane %v5817, 4
        %v5819 = vsel %vm1361, 0.0, %v5818
        %v5820 = vrot.slane %v5435, 4
        %v5821 = vsel %vm1361, %v5820, %v5419
        %v5823 = vunpack.c.l.s4 1934713408
        %v5824 = vunpack.c.0.s8 %v5823
        %v5825 = vperm.slane %v5821, %v5824
        %v5826 = vrot.slane %v5825, 4
        %v5827 = vsel %vm1361, 0.0, %v5826
        %v5828 = vrot.slane %v5467, 4
        %v5829 = vsel %vm1361, %v5828, %v5451
        %v5831 = vunpack.c.l.s4 1934713408
        %v5832 = vunpack.c.0.s8 %v5831
        %v5833 = vperm.slane %v5829, %v5832
        %v5834 = vrot.slane %v5833, 4
        %v5835 = vsel %vm1361, 0.0, %v5834
        %v5836 = vrot.slane %v5499, 4
        %v5837 = vsel %vm1361, %v5836, %v5483
        %v5839 = vunpack.c.l.s4 1934713408
        %v5840 = vunpack.c.0.s8 %v5839
        %v5841 = vperm.slane %v5837, %v5840
        %v5842 = vrot.slane %v5841, 4
        %v5843 = vsel %vm1361, 0.0, %v5842
        %v5844 = vrot.slane %v5531, 4
        %v5845 = vsel %vm1361, %v5844, %v5515
        %v5847 = vunpack.c.l.s4 1934713408
        %v5848 = vunpack.c.0.s8 %v5847
        %v5849 = vperm.slane %v5845, %v5848
        %v5850 = vrot.slane %v5849, 4
        %v5851 = vsel %vm1361, 0.0, %v5850
        %5856 = vst [vmem:[#allocation1] ss:$4 sm:$0xff] %v5601
        %s5857 = scalar_lea.vmem [#allocation1], 1
        %5858 = vst [vmem:[%s5857] ss:$4 sm:$0xff] %v5609
        %s5859 = scalar_lea.vmem [#allocation1], 2
        %5860 = vst [vmem:[%s5859] ss:$4 sm:$0xff] %v5617
        %s5861 = scalar_lea.vmem [#allocation1], 3
        %5862 = vst [vmem:[%s5861] ss:$4 sm:$0xff] %v5625
        %v5863 = vld.sshfl [vmem:[#allocation1] sm:$0xff pattern:$0x73625140]
        %5869 = vst [vmem:[#allocation1] ss:$4 sm:$0xff] %v5603
        %s5870 = scalar_lea.vmem [#allocation1], 1
        %5871 = vst [vmem:[%s5870] ss:$4 sm:$0xff] %v5611
        %s5872 = scalar_lea.vmem [#allocation1], 2
        %5873 = vst [vmem:[%s5872] ss:$4 sm:$0xff] %v5619
        %s5874 = scalar_lea.vmem [#allocation1], 3
        %5875 = vst [vmem:[%s5874] ss:$4 sm:$0xff] %v5627
        %v5876 = vld.sshfl [vmem:[#allocation1] sm:$0xff pattern:$0x73625140]
        %5877 = vrot.lane.b32.xlu0 %v5876, 2
        %v5878 = vpop.permute.xlu0 %5877
        %5884 = vst [vmem:[#allocation1] ss:$4 sm:$0xff] %v5633
        %s5885 = scalar_lea.vmem [#allocation1], 1
        %5886 = vst [vmem:[%s5885] ss:$4 sm:$0xff] %v5641
        %s5887 = scalar_lea.vmem [#allocation1], 2
        %5888 = vst [vmem:[%s5887] ss:$4 sm:$0xff] %v5649
        %s5889 = scalar_lea.vmem [#allocation1], 3
        %5890 = vst [vmem:[%s5889] ss:$4 sm:$0xff] %v5657
        %v5891 = vld.sshfl [vmem:[#allocation1] sm:$0xff pattern:$0x73625140]
        %5892 = vrot.lane.b32.xlu0 %v5891, 4
        %v5893 = vpop.permute.xlu0 %5892
        %5899 = vst [vmem:[#allocation1] ss:$4 sm:$0xff] %v5635
        %s5900 = scalar_lea.vmem [#allocation1], 1
        %5901 = vst [vmem:[%s5900] ss:$4 sm:$0xff] %v5643
        %s5902 = scalar_lea.vmem [#allocation1], 2
        %5903 = vst [vmem:[%s5902] ss:$4 sm:$0xff] %v5651
        %s5904 = scalar_lea.vmem [#allocation1], 3
        %5905 = vst [vmem:[%s5904] ss:$4 sm:$0xff] %v5659
        %v5906 = vld.sshfl [vmem:[#allocation1] sm:$0xff pattern:$0x73625140]
        %5907 = vrot.lane.b32.xlu0 %v5906, 6
        %v5908 = vpop.permute.xlu0 %5907
        %5914 = vst [vmem:[#allocation1] ss:$4 sm:$0xff] %v5665
        %s5915 = scalar_lea.vmem [#allocation1], 1
        %5916 = vst [vmem:[%s5915] ss:$4 sm:$0xff] %v5673
        %s5917 = scalar_lea.vmem [#allocation1], 2
        %5918 = vst [vmem:[%s5917] ss:$4 sm:$0xff] %v5681
        %s5919 = scalar_lea.vmem [#allocation1], 3
        %5920 = vst [vmem:[%s5919] ss:$4 sm:$0xff] %v5689
        %v5921 = vld.sshfl [vmem:[#allocation1] sm:$0xff pattern:$0x73625140]
        %5922 = vrot.lane.b32.xlu0 %v5921, 8
        %v5923 = vpop.permute.xlu0 %5922
        %5929 = vst [vmem:[#allocation1] ss:$4 sm:$0xff] %v5667
        %s5930 = scalar_lea.vmem [#allocation1], 1
        %5931 = vst [vmem:[%s5930] ss:$4 sm:$0xff] %v5675
        %s5932 = scalar_lea.vmem [#allocation1], 2
        %5933 = vst [vmem:[%s5932] ss:$4 sm:$0xff] %v5683
        %s5934 = scalar_lea.vmem [#allocation1], 3
        %5935 = vst [vmem:[%s5934] ss:$4 sm:$0xff] %v5691
        %v5936 = vld.sshfl [vmem:[#allocation1] sm:$0xff pattern:$0x73625140]
        %5937 = vrot.lane.b32.xlu0 %v5936, 10
        %v5938 = vpop.permute.xlu0 %5937
        %5944 = vst [vmem:[#allocation1] ss:$4 sm:$0xff] %v5697
        %s5945 = scalar_lea.vmem [#allocation1], 1
        %5946 = vst [vmem:[%s5945] ss:$4 sm:$0xff] %v5705
        %s5947 = scalar_lea.vmem [#allocation1], 2
        %5948 = vst [vmem:[%s5947] ss:$4 sm:$0xff] %v5713
        %s5949 = scalar_lea.vmem [#allocation1], 3
        %5950 = vst [vmem:[%s5949] ss:$4 sm:$0xff] %v5721
        %v5951 = vld.sshfl [vmem:[#allocation1] sm:$0xff pattern:$0x73625140]
        %5952 = vrot.lane.b32.xlu0 %v5951, 12
        %v5953 = vpop.permute.xlu0 %5952
        %5959 = vst [vmem:[#allocation1] ss:$4 sm:$0xff] %v5699
        %s5960 = scalar_lea.vmem [#allocation1], 1
        %5961 = vst [vmem:[%s5960] ss:$4 sm:$0xff] %v5707
        %s5962 = scalar_lea.vmem [#allocation1], 2
        %5963 = vst [vmem:[%s5962] ss:$4 sm:$0xff] %v5715
        %s5964 = scalar_lea.vmem [#allocation1], 3
        %5965 = vst [vmem:[%s5964] ss:$4 sm:$0xff] %v5723
        %v5966 = vld.sshfl [vmem:[#allocation1] sm:$0xff pattern:$0x73625140]
        %5967 = vrot.lane.b32.xlu0 %v5966, 14
        %v5968 = vpop.permute.xlu0 %5967
        %5974 = vst [vmem:[#allocation1] ss:$4 sm:$0xff] %v5729
        %s5975 = scalar_lea.vmem [#allocation1], 1
        %5976 = vst [vmem:[%s5975] ss:$4 sm:$0xff] %v5737
        %s5977 = scalar_lea.vmem [#allocation1], 2
        %5978 = vst [vmem:[%s5977] ss:$4 sm:$0xff] %v5745
        %s5979 = scalar_lea.vmem [#allocation1], 3
        %5980 = vst [vmem:[%s5979] ss:$4 sm:$0xff] %v5753
        %v5981 = vld.sshfl [vmem:[#allocation1] sm:$0xff pattern:$0x73625140]
        %5982 = vrot.lane.b32.xlu0 %v5981, 16
        %v5983 = vpop.permute.xlu0 %5982
        %5989 = vst [vmem:[#allocation1] ss:$4 sm:$0xff] %v5731
        %s5990 = scalar_lea.vmem [#allocation1], 1
        %5991 = vst [vmem:[%s5990] ss:$4 sm:$0xff] %v5739
        %s5992 = scalar_lea.vmem [#allocation1], 2
        %5993 = vst [vmem:[%s5992] ss:$4 sm:$0xff] %v5747
        %s5994 = scalar_lea.vmem [#allocation1], 3
        %5995 = vst [vmem:[%s5994] ss:$4 sm:$0xff] %v5755
        %v5996 = vld.sshfl [vmem:[#allocation1] sm:$0xff pattern:$0x73625140]
        %5997 = vrot.lane.b32.xlu0 %v5996, 18
        %v5998 = vpop.permute.xlu0 %5997
        %6004 = vst [vmem:[#allocation1] ss:$4 sm:$0xff] %v5761
        %s6005 = scalar_lea.vmem [#allocation1], 1
        %6006 = vst [vmem:[%s6005] ss:$4 sm:$0xff] %v5769
        %s6007 = scalar_lea.vmem [#allocation1], 2
        %6008 = vst [vmem:[%s6007] ss:$4 sm:$0xff] %v5777
        %s6009 = scalar_lea.vmem [#allocation1], 3
        %6010 = vst [vmem:[%s6009] ss:$4 sm:$0xff] %v5785
        %v6011 = vld.sshfl [vmem:[#allocation1] sm:$0xff pattern:$0x73625140]
        %6012 = vrot.lane.b32.xlu0 %v6011, 20
        %v6013 = vpop.permute.xlu0 %6012
        %6019 = vst [vmem:[#allocation1] ss:$4 sm:$0xff] %v5763
        %s6020 = scalar_lea.vmem [#allocation1], 1
        %6021 = vst [vmem:[%s6020] ss:$4 sm:$0xff] %v5771
        %s6022 = scalar_lea.vmem [#allocation1], 2
        %6023 = vst [vmem:[%s6022] ss:$4 sm:$0xff] %v5779
        %s6024 = scalar_lea.vmem [#allocation1], 3
        %6025 = vst [vmem:[%s6024] ss:$4 sm:$0xff] %v5787
        %v6026 = vld.sshfl [vmem:[#allocation1] sm:$0xff pattern:$0x73625140]
        %6027 = vrot.lane.b32.xlu0 %v6026, 22
        %v6028 = vpop.permute.xlu0 %6027
        %6034 = vst [vmem:[#allocation1] ss:$4 sm:$0xff] %v5793
        %s6035 = scalar_lea.vmem [#allocation1], 1
        %6036 = vst [vmem:[%s6035] ss:$4 sm:$0xff] %v5801
        %s6037 = scalar_lea.vmem [#allocation1], 2
        %6038 = vst [vmem:[%s6037] ss:$4 sm:$0xff] %v5809
        %s6039 = scalar_lea.vmem [#allocation1], 3
        %6040 = vst [vmem:[%s6039] ss:$4 sm:$0xff] %v5817
        %v6041 = vld.sshfl [vmem:[#allocation1] sm:$0xff pattern:$0x73625140]
        %6042 = vrot.lane.b32.xlu0 %v6041, 24
        %v6043 = vpop.permute.xlu0 %6042
        %6049 = vst [vmem:[#allocation1] ss:$4 sm:$0xff] %v5795
        %s6050 = scalar_lea.vmem [#allocation1], 1
        %6051 = vst [vmem:[%s6050] ss:$4 sm:$0xff] %v5803
        %s6052 = scalar_lea.vmem [#allocation1], 2
        %6053 = vst [vmem:[%s6052] ss:$4 sm:$0xff] %v5811
        %s6054 = scalar_lea.vmem [#allocation1], 3
        %6055 = vst [vmem:[%s6054] ss:$4 sm:$0xff] %v5819
        %v6056 = vld.sshfl [vmem:[#allocation1] sm:$0xff pattern:$0x73625140]
        %6057 = vrot.lane.b32.xlu0 %v6056, 26
        %v6058 = vpop.permute.xlu0 %6057
        %6064 = vst [vmem:[#allocation1] ss:$4 sm:$0xff] %v5825
        %s6065 = scalar_lea.vmem [#allocation1], 1
        %6066 = vst [vmem:[%s6065] ss:$4 sm:$0xff] %v5833
        %s6067 = scalar_lea.vmem [#allocation1], 2
        %6068 = vst [vmem:[%s6067] ss:$4 sm:$0xff] %v5841
        %s6069 = scalar_lea.vmem [#allocation1], 3
        %6070 = vst [vmem:[%s6069] ss:$4 sm:$0xff] %v5849
        %v6071 = vld.sshfl [vmem:[#allocation1] sm:$0xff pattern:$0x73625140]
        %6072 = vrot.lane.b32.xlu0 %v6071, 28
        %v6073 = vpop.permute.xlu0 %6072
        %6079 = vst [vmem:[#allocation1] ss:$4 sm:$0xff] %v5827
        %s6080 = scalar_lea.vmem [#allocation1], 1
        %6081 = vst [vmem:[%s6080] ss:$4 sm:$0xff] %v5835
        %s6082 = scalar_lea.vmem [#allocation1], 2
        %6083 = vst [vmem:[%s6082] ss:$4 sm:$0xff] %v5843
        %s6084 = scalar_lea.vmem [#allocation1], 3
        %6085 = vst [vmem:[%s6084] ss:$4 sm:$0xff] %v5851
        %v6086 = vld.sshfl [vmem:[#allocation1] sm:$0xff pattern:$0x73625140]
        %6087 = vrot.lane.b32.xlu0 %v6086, 30
        %v6088 = vpop.permute.xlu0 %6087
        %v6090 = vsel %vm1855, %v5863, %v5878
        %v6091 = vsel %vm899, %v6090, %v5893
        %v6092 = vsel %vm1858, %v6091, %v5908
        %v6093 = vsel %vm918, %v6092, %v5923
        %v6094 = vsel %vm1861, %v6093, %v5938
        %v6095 = vsel %vm937, %v6094, %v5953
        %v6096 = vsel %vm1864, %v6095, %v5968
        %v6097 = vsel %vm956, %v6096, %v5983
        %v6098 = vsel %vm1867, %v6097, %v5998
        %v6099 = vsel %vm975, %v6098, %v6013
        %v6100 = vsel %vm1870, %v6099, %v6028
        %v6101 = vsel %vm994, %v6100, %v6043
        %v6102 = vsel %vm1873, %v6101, %v6058
        %v6103 = vsel %vm1013, %v6102, %v6073
        %v6104 = vsel %vm1876, %v6103, %v6088
        %6105 = vrot.lane.b32.xlu0 %v1228, 114
        %v6106 = vpop.permute.xlu0 %6105
        %6107 = vrot.lane.b32.xlu0 %v1264, 114
        %v6108 = vpop.permute.xlu0 %6107
        %6109 = vrot.lane.b32.xlu0 %v1265, 114
        %v6110 = vpop.permute.xlu0 %6109
        %6111 = vrot.lane.b32.xlu0 %v1266, 114
        %v6112 = vpop.permute.xlu0 %6111
        %6113 = vrot.lane.b32.xlu0 %v1229, 114
        %v6114 = vpop.permute.xlu0 %6113
        %6115 = vrot.lane.b32.xlu0 %v1267, 114
        %v6116 = vpop.permute.xlu0 %6115
        %6117 = vrot.lane.b32.xlu0 %v1268, 114
        %v6118 = vpop.permute.xlu0 %6117
        %6119 = vrot.lane.b32.xlu0 %v1269, 114
        %v6120 = vpop.permute.xlu0 %6119
        %6121 = vrot.lane.b32.xlu0 %v1270, 114
        %v6122 = vpop.permute.xlu0 %6121
        %6123 = vrot.lane.b32.xlu0 %v1271, 114
        %v6124 = vpop.permute.xlu0 %6123
        %6125 = vrot.lane.b32.xlu0 %v1272, 114
        %v6126 = vpop.permute.xlu0 %6125
        %6127 = vrot.lane.b32.xlu0 %v1231, 114
        %v6128 = vpop.permute.xlu0 %6127
        %6129 = vrot.lane.b32.xlu0 %v1273, 114
        %v6130 = vpop.permute.xlu0 %6129
        %6131 = vrot.lane.b32.xlu0 %v1274, 114
        %v6132 = vpop.permute.xlu0 %6131
        %6133 = vrot.lane.b32.xlu0 %v1275, 114
        %v6134 = vpop.permute.xlu0 %6133
        %6135 = vrot.lane.b32.xlu0 %v1232, 114
        %v6136 = vpop.permute.xlu0 %6135
        %6137 = vrot.lane.b32.xlu0 %v1276, 114
        %v6138 = vpop.permute.xlu0 %6137
        %6139 = vrot.lane.b32.xlu0 %v1277, 114
        %v6140 = vpop.permute.xlu0 %6139
        %6141 = vrot.lane.b32.xlu0 %v1233, 114
        %v6142 = vpop.permute.xlu0 %6141
        %6143 = vrot.lane.b32.xlu0 %v1278, 114
        %v6144 = vpop.permute.xlu0 %6143
        %6145 = vrot.lane.b32.xlu0 %v1279, 114
        %v6146 = vpop.permute.xlu0 %6145
        %6147 = vrot.lane.b32.xlu0 %v1280, 114
        %v6148 = vpop.permute.xlu0 %6147
        %6149 = vrot.lane.b32.xlu0 %v1234, 114
        %v6150 = vpop.permute.xlu0 %6149
        %6151 = vrot.lane.b32.xlu0 %v1281, 114
        %v6152 = vpop.permute.xlu0 %6151
        %6153 = vrot.lane.b32.xlu0 %v1282, 114
        %v6154 = vpop.permute.xlu0 %6153
        %6155 = vrot.lane.b32.xlu0 %v1235, 114
        %v6156 = vpop.permute.xlu0 %6155
        %6157 = vrot.lane.b32.xlu0 %v1283, 114
        %v6158 = vpop.permute.xlu0 %6157
        %6159 = vrot.lane.b32.xlu0 %v1284, 114
        %v6160 = vpop.permute.xlu0 %6159
        %6161 = vrot.lane.b32.xlu0 %v1285, 114
        %v6162 = vpop.permute.xlu0 %6161
        %6163 = vrot.lane.b32.xlu0 %v1236, 114
        %v6164 = vpop.permute.xlu0 %6163
        %6165 = vrot.lane.b32.xlu0 %v1286, 114
        %v6166 = vpop.permute.xlu0 %6165
        %6167 = vrot.lane.b32.xlu0 %v1287, 114
        %v6168 = vpop.permute.xlu0 %6167
        %6169 = vrot.lane.b32.xlu0 %v1237, 114
        %v6170 = vpop.permute.xlu0 %6169
        %6171 = vrot.lane.b32.xlu0 %v1288, 114
        %v6172 = vpop.permute.xlu0 %6171
        %6173 = vrot.lane.b32.xlu0 %v1289, 114
        %v6174 = vpop.permute.xlu0 %6173
        %6175 = vrot.lane.b32.xlu0 %v1290, 114
        %v6176 = vpop.permute.xlu0 %6175
        %6177 = vrot.lane.b32.xlu0 %v1238, 114
        %v6178 = vpop.permute.xlu0 %6177
        %6179 = vrot.lane.b32.xlu0 %v1291, 114
        %v6180 = vpop.permute.xlu0 %6179
        %6181 = vrot.lane.b32.xlu0 %v1292, 114
        %v6182 = vpop.permute.xlu0 %6181
        %6183 = vrot.lane.b32.xlu0 %v1293, 114
        %v6184 = vpop.permute.xlu0 %6183
        %6185 = vrot.lane.b32.xlu0 %v1294, 114
        %v6186 = vpop.permute.xlu0 %6185
        %6187 = vrot.lane.b32.xlu0 %v1295, 114
        %v6188 = vpop.permute.xlu0 %6187
        %6189 = vrot.lane.b32.xlu0 %v1296, 114
        %v6190 = vpop.permute.xlu0 %6189
        %6191 = vrot.lane.b32.xlu0 %v1240, 114
        %v6192 = vpop.permute.xlu0 %6191
        %6193 = vrot.lane.b32.xlu0 %v1297, 114
        %v6194 = vpop.permute.xlu0 %6193
        %6195 = vrot.lane.b32.xlu0 %v1298, 114
        %v6196 = vpop.permute.xlu0 %6195
        %6197 = vrot.lane.b32.xlu0 %v1299, 114
        %v6198 = vpop.permute.xlu0 %6197
        %6199 = vrot.lane.b32.xlu0 %v1241, 114
        %v6200 = vpop.permute.xlu0 %6199
        %6201 = vrot.lane.b32.xlu0 %v1300, 114
        %v6202 = vpop.permute.xlu0 %6201
        %6203 = vrot.lane.b32.xlu0 %v1301, 114
        %v6204 = vpop.permute.xlu0 %6203
        %6205 = vrot.lane.b32.xlu0 %v1242, 114
        %v6206 = vpop.permute.xlu0 %6205
        %6207 = vrot.lane.b32.xlu0 %v1302, 114
        %v6208 = vpop.permute.xlu0 %6207
        %6209 = vrot.lane.b32.xlu0 %v1303, 114
        %v6210 = vpop.permute.xlu0 %6209
        %6211 = vrot.lane.b32.xlu0 %v1304, 114
        %v6212 = vpop.permute.xlu0 %6211
        %6213 = vrot.lane.b32.xlu0 %v1243, 114
        %v6214 = vpop.permute.xlu0 %6213
        %6215 = vrot.lane.b32.xlu0 %v1305, 114
        %v6216 = vpop.permute.xlu0 %6215
        %6217 = vrot.lane.b32.xlu0 %v1306, 114
        %v6218 = vpop.permute.xlu0 %6217
        %6219 = vrot.lane.b32.xlu0 %v1244, 114
        %v6220 = vpop.permute.xlu0 %6219
        %6221 = vrot.lane.b32.xlu0 %v1307, 114
        %v6222 = vpop.permute.xlu0 %6221
        %6223 = vrot.lane.b32.xlu0 %v1308, 114
        %v6224 = vpop.permute.xlu0 %6223
        %6225 = vrot.lane.b32.xlu0 %v1309, 114
        %v6226 = vpop.permute.xlu0 %6225
        %6227 = vrot.lane.b32.xlu0 %v1245, 114
        %v6228 = vpop.permute.xlu0 %6227
        %6229 = vrot.lane.b32.xlu0 %v1310, 114
        %v6230 = vpop.permute.xlu0 %6229
        %6231 = vrot.lane.b32.xlu0 %v1311, 114
        %v6232 = vpop.permute.xlu0 %6231
        %v6297 = vrot.slane %v6122, 4
        %v6298 = vsel %vm1361, %v6297, %v6106
        %v6300 = vunpack.c.l.s4 1934713408
        %v6301 = vunpack.c.0.s8 %v6300
        %v6302 = vperm.slane %v6298, %v6301
        %v6303 = vrot.slane %v6302, 4
        %v6304 = vsel %vm1361, 0.0, %v6303
        %v6305 = vrot.slane %v6154, 4
        %v6306 = vsel %vm1361, %v6305, %v6138
        %v6308 = vunpack.c.l.s4 1934713408
        %v6309 = vunpack.c.0.s8 %v6308
        %v6310 = vperm.slane %v6306, %v6309
        %v6311 = vrot.slane %v6310, 4
        %v6312 = vsel %vm1361, 0.0, %v6311
        %v6313 = vrot.slane %v6186, 4
        %v6314 = vsel %vm1361, %v6313, %v6170
        %v6316 = vunpack.c.l.s4 1934713408
        %v6317 = vunpack.c.0.s8 %v6316
        %v6318 = vperm.slane %v6314, %v6317
        %v6319 = vrot.slane %v6318, 4
        %v6320 = vsel %vm1361, 0.0, %v6319
        %v6321 = vrot.slane %v6218, 4
        %v6322 = vsel %vm1361, %v6321, %v6202
        %v6324 = vunpack.c.l.s4 1934713408
        %v6325 = vunpack.c.0.s8 %v6324
        %v6326 = vperm.slane %v6322, %v6325
        %v6327 = vrot.slane %v6326, 4
        %v6328 = vsel %vm1361, 0.0, %v6327
        %v6329 = vrot.slane %v6124, 4
        %v6330 = vsel %vm1361, %v6329, %v6108
        %v6332 = vunpack.c.l.s4 1934713408
        %v6333 = vunpack.c.0.s8 %v6332
        %v6334 = vperm.slane %v6330, %v6333
        %v6335 = vrot.slane %v6334, 4
        %v6336 = vsel %vm1361, 0.0, %v6335
        %v6337 = vrot.slane %v6156, 4
        %v6338 = vsel %vm1361, %v6337, %v6140
        %v6340 = vunpack.c.l.s4 1934713408
        %v6341 = vunpack.c.0.s8 %v6340
        %v6342 = vperm.slane %v6338, %v6341
        %v6343 = vrot.slane %v6342, 4
        %v6344 = vsel %vm1361, 0.0, %v6343
        %v6345 = vrot.slane %v6188, 4
        %v6346 = vsel %vm1361, %v6345, %v6172
        %v6348 = vunpack.c.l.s4 1934713408
        %v6349 = vunpack.c.0.s8 %v6348
        %v6350 = vperm.slane %v6346, %v6349
        %v6351 = vrot.slane %v6350, 4
        %v6352 = vsel %vm1361, 0.0, %v6351
        %v6353 = vrot.slane %v6220, 4
        %v6354 = vsel %vm1361, %v6353, %v6204
        %v6356 = vunpack.c.l.s4 1934713408
        %v6357 = vunpack.c.0.s8 %v6356
        %v6358 = vperm.slane %v6354, %v6357
        %v6359 = vrot.slane %v6358, 4
        %v6360 = vsel %vm1361, 0.0, %v6359
        %v6361 = vrot.slane %v6126, 4
        %v6362 = vsel %vm1361, %v6361, %v6110
        %v6364 = vunpack.c.l.s4 1934713408
        %v6365 = vunpack.c.0.s8 %v6364
        %v6366 = vperm.slane %v6362, %v6365
        %v6367 = vrot.slane %v6366, 4
        %v6368 = vsel %vm1361, 0.0, %v6367
        %v6369 = vrot.slane %v6158, 4
        %v6370 = vsel %vm1361, %v6369, %v6142
        %v6372 = vunpack.c.l.s4 1934713408
        %v6373 = vunpack.c.0.s8 %v6372
        %v6374 = vperm.slane %v6370, %v6373
        %v6375 = vrot.slane %v6374, 4
        %v6376 = vsel %vm1361, 0.0, %v6375
        %v6377 = vrot.slane %v6190, 4
        %v6378 = vsel %vm1361, %v6377, %v6174
        %v6380 = vunpack.c.l.s4 1934713408
        %v6381 = vunpack.c.0.s8 %v6380
        %v6382 = vperm.slane %v6378, %v6381
        %v6383 = vrot.slane %v6382, 4
        %v6384 = vsel %vm1361, 0.0, %v6383
        %v6385 = vrot.slane %v6222, 4
        %v6386 = vsel %vm1361, %v6385, %v6206
        %v6388 = vunpack.c.l.s4 1934713408
        %v6389 = vunpack.c.0.s8 %v6388
        %v6390 = vperm.slane %v6386, %v6389
        %v6391 = vrot.slane %v6390, 4
        %v6392 = vsel %vm1361, 0.0, %v6391
        %v6393 = vrot.slane %v6128, 4
        %v6394 = vsel %vm1361, %v6393, %v6112
        %v6396 = vunpack.c.l.s4 1934713408
        %v6397 = vunpack.c.0.s8 %v6396
        %v6398 = vperm.slane %v6394, %v6397
        %v6399 = vrot.slane %v6398, 4
        %v6400 = vsel %vm1361, 0.0, %v6399
        %v6401 = vrot.slane %v6160, 4
        %v6402 = vsel %vm1361, %v6401, %v6144
        %v6404 = vunpack.c.l.s4 1934713408
        %v6405 = vunpack.c.0.s8 %v6404
        %v6406 = vperm.slane %v6402, %v6405
        %v6407 = vrot.slane %v6406, 4
        %v6408 = vsel %vm1361, 0.0, %v6407
        %v6409 = vrot.slane %v6192, 4
        %v6410 = vsel %vm1361, %v6409, %v6176
        %v6412 = vunpack.c.l.s4 1934713408
        %v6413 = vunpack.c.0.s8 %v6412
        %v6414 = vperm.slane %v6410, %v6413
        %v6415 = vrot.slane %v6414, 4
        %v6416 = vsel %vm1361, 0.0, %v6415
        %v6417 = vrot.slane %v6224, 4
        %v6418 = vsel %vm1361, %v6417, %v6208
        %v6420 = vunpack.c.l.s4 1934713408
        %v6421 = vunpack.c.0.s8 %v6420
        %v6422 = vperm.slane %v6418, %v6421
        %v6423 = vrot.slane %v6422, 4
        %v6424 = vsel %vm1361, 0.0, %v6423
        %v6425 = vrot.slane %v6130, 4
        %v6426 = vsel %vm1361, %v6425, %v6114
        %v6428 = vunpack.c.l.s4 1934713408
        %v6429 = vunpack.c.0.s8 %v6428
        %v6430 = vperm.slane %v6426, %v6429
        %v6431 = vrot.slane %v6430, 4
        %v6432 = vsel %vm1361, 0.0, %v6431
        %v6433 = vrot.slane %v6162, 4
        %v6434 = vsel %vm1361, %v6433, %v6146
        %v6436 = vunpack.c.l.s4 1934713408
        %v6437 = vunpack.c.0.s8 %v6436
        %v6438 = vperm.slane %v6434, %v6437
        %v6439 = vrot.slane %v6438, 4
        %v6440 = vsel %vm1361, 0.0, %v6439
        %v6441 = vrot.slane %v6194, 4
        %v6442 = vsel %vm1361, %v6441, %v6178
        %v6444 = vunpack.c.l.s4 1934713408
        %v6445 = vunpack.c.0.s8 %v6444
        %v6446 = vperm.slane %v6442, %v6445
        %v6447 = vrot.slane %v6446, 4
        %v6448 = vsel %vm1361, 0.0, %v6447
        %v6449 = vrot.slane %v6226, 4
        %v6450 = vsel %vm1361, %v6449, %v6210
        %v6452 = vunpack.c.l.s4 1934713408
        %v6453 = vunpack.c.0.s8 %v6452
        %v6454 = vperm.slane %v6450, %v6453
        %v6455 = vrot.slane %v6454, 4
        %v6456 = vsel %vm1361, 0.0, %v6455
        %v6457 = vrot.slane %v6132, 4
        %v6458 = vsel %vm1361, %v6457, %v6116
        %v6460 = vunpack.c.l.s4 1934713408
        %v6461 = vunpack.c.0.s8 %v6460
        %v6462 = vperm.slane %v6458, %v6461
        %v6463 = vrot.slane %v6462, 4
        %v6464 = vsel %vm1361, 0.0, %v6463
        %v6465 = vrot.slane %v6164, 4
        %v6466 = vsel %vm1361, %v6465, %v6148
        %v6468 = vunpack.c.l.s4 1934713408
        %v6469 = vunpack.c.0.s8 %v6468
        %v6470 = vperm.slane %v6466, %v6469
        %v6471 = vrot.slane %v6470, 4
        %v6472 = vsel %vm1361, 0.0, %v6471
        %v6473 = vrot.slane %v6196, 4
        %v6474 = vsel %vm1361, %v6473, %v6180
        %v6476 = vunpack.c.l.s4 1934713408
        %v6477 = vunpack.c.0.s8 %v6476
        %v6478 = vperm.slane %v6474, %v6477
        %v6479 = vrot.slane %v6478, 4
        %v6480 = vsel %vm1361, 0.0, %v6479
        %v6481 = vrot.slane %v6228, 4
        %v6482 = vsel %vm1361, %v6481, %v6212
        %v6484 = vunpack.c.l.s4 1934713408
        %v6485 = vunpack.c.0.s8 %v6484
        %v6486 = vperm.slane %v6482, %v6485
        %v6487 = vrot.slane %v6486, 4
        %v6488 = vsel %vm1361, 0.0, %v6487
        %v6489 = vrot.slane %v6134, 4
        %v6490 = vsel %vm1361, %v6489, %v6118
        %v6492 = vunpack.c.l.s4 1934713408
        %v6493 = vunpack.c.0.s8 %v6492
        %v6494 = vperm.slane %v6490, %v6493
        %v6495 = vrot.slane %v6494, 4
        %v6496 = vsel %vm1361, 0.0, %v6495
        %v6497 = vrot.slane %v6166, 4
        %v6498 = vsel %vm1361, %v6497, %v6150
        %v6500 = vunpack.c.l.s4 1934713408
        %v6501 = vunpack.c.0.s8 %v6500
        %v6502 = vperm.slane %v6498, %v6501
        %v6503 = vrot.slane %v6502, 4
        %v6504 = vsel %vm1361, 0.0, %v6503
        %v6505 = vrot.slane %v6198, 4
        %v6506 = vsel %vm1361, %v6505, %v6182
        %v6508 = vunpack.c.l.s4 1934713408
        %v6509 = vunpack.c.0.s8 %v6508
        %v6510 = vperm.slane %v6506, %v6509
        %v6511 = vrot.slane %v6510, 4
        %v6512 = vsel %vm1361, 0.0, %v6511
        %v6513 = vrot.slane %v6230, 4
        %v6514 = vsel %vm1361, %v6513, %v6214
        %v6516 = vunpack.c.l.s4 1934713408
        %v6517 = vunpack.c.0.s8 %v6516
        %v6518 = vperm.slane %v6514, %v6517
        %v6519 = vrot.slane %v6518, 4
        %v6520 = vsel %vm1361, 0.0, %v6519
        %v6521 = vrot.slane %v6136, 4
        %v6522 = vsel %vm1361, %v6521, %v6120
        %v6524 = vunpack.c.l.s4 1934713408
        %v6525 = vunpack.c.0.s8 %v6524
        %v6526 = vperm.slane %v6522, %v6525
        %v6527 = vrot.slane %v6526, 4
        %v6528 = vsel %vm1361, 0.0, %v6527
        %v6529 = vrot.slane %v6168, 4
        %v6530 = vsel %vm1361, %v6529, %v6152
        %v6532 = vunpack.c.l.s4 1934713408
        %v6533 = vunpack.c.0.s8 %v6532
        %v6534 = vperm.slane %v6530, %v6533
        %v6535 = vrot.slane %v6534, 4
        %v6536 = vsel %vm1361, 0.0, %v6535
        %v6537 = vrot.slane %v6200, 4
        %v6538 = vsel %vm1361, %v6537, %v6184
        %v6540 = vunpack.c.l.s4 1934713408
        %v6541 = vunpack.c.0.s8 %v6540
        %v6542 = vperm.slane %v6538, %v6541
        %v6543 = vrot.slane %v6542, 4
        %v6544 = vsel %vm1361, 0.0, %v6543
        %v6545 = vrot.slane %v6232, 4
        %v6546 = vsel %vm1361, %v6545, %v6216
        %v6548 = vunpack.c.l.s4 1934713408
        %v6549 = vunpack.c.0.s8 %v6548
        %v6550 = vperm.slane %v6546, %v6549
        %v6551 = vrot.slane %v6550, 4
        %v6552 = vsel %vm1361, 0.0, %v6551
        %6557 = vst [vmem:[#allocation1] ss:$4 sm:$0xff] %v6302
        %s6558 = scalar_lea.vmem [#allocation1], 1
        %6559 = vst [vmem:[%s6558] ss:$4 sm:$0xff] %v6310
        %s6560 = scalar_lea.vmem [#allocation1], 2
        %6561 = vst [vmem:[%s6560] ss:$4 sm:$0xff] %v6318
        %s6562 = scalar_lea.vmem [#allocation1], 3
        %6563 = vst [vmem:[%s6562] ss:$4 sm:$0xff] %v6326
        %v6564 = vld.sshfl [vmem:[#allocation1] sm:$0xff pattern:$0x73625140]
        %6570 = vst [vmem:[#allocation1] ss:$4 sm:$0xff] %v6304
        %s6571 = scalar_lea.vmem [#allocation1], 1
        %6572 = vst [vmem:[%s6571] ss:$4 sm:$0xff] %v6312
        %s6573 = scalar_lea.vmem [#allocation1], 2
        %6574 = vst [vmem:[%s6573] ss:$4 sm:$0xff] %v6320
        %s6575 = scalar_lea.vmem [#allocation1], 3
        %6576 = vst [vmem:[%s6575] ss:$4 sm:$0xff] %v6328
        %v6577 = vld.sshfl [vmem:[#allocation1] sm:$0xff pattern:$0x73625140]
        %6578 = vrot.lane.b32.xlu0 %v6577, 2
        %v6579 = vpop.permute.xlu0 %6578
        %6585 = vst [vmem:[#allocation1] ss:$4 sm:$0xff] %v6334
        %s6586 = scalar_lea.vmem [#allocation1], 1
        %6587 = vst [vmem:[%s6586] ss:$4 sm:$0xff] %v6342
        %s6588 = scalar_lea.vmem [#allocation1], 2
        %6589 = vst [vmem:[%s6588] ss:$4 sm:$0xff] %v6350
        %s6590 = scalar_lea.vmem [#allocation1], 3
        %6591 = vst [vmem:[%s6590] ss:$4 sm:$0xff] %v6358
        %v6592 = vld.sshfl [vmem:[#allocation1] sm:$0xff pattern:$0x73625140]
        %6593 = vrot.lane.b32.xlu0 %v6592, 4
        %v6594 = vpop.permute.xlu0 %6593
        %6600 = vst [vmem:[#allocation1] ss:$4 sm:$0xff] %v6336
        %s6601 = scalar_lea.vmem [#allocation1], 1
        %6602 = vst [vmem:[%s6601] ss:$4 sm:$0xff] %v6344
        %s6603 = scalar_lea.vmem [#allocation1], 2
        %6604 = vst [vmem:[%s6603] ss:$4 sm:$0xff] %v6352
        %s6605 = scalar_lea.vmem [#allocation1], 3
        %6606 = vst [vmem:[%s6605] ss:$4 sm:$0xff] %v6360
        %v6607 = vld.sshfl [vmem:[#allocation1] sm:$0xff pattern:$0x73625140]
        %6608 = vrot.lane.b32.xlu0 %v6607, 6
        %v6609 = vpop.permute.xlu0 %6608
        %6615 = vst [vmem:[#allocation1] ss:$4 sm:$0xff] %v6366
        %s6616 = scalar_lea.vmem [#allocation1], 1
        %6617 = vst [vmem:[%s6616] ss:$4 sm:$0xff] %v6374
        %s6618 = scalar_lea.vmem [#allocation1], 2
        %6619 = vst [vmem:[%s6618] ss:$4 sm:$0xff] %v6382
        %s6620 = scalar_lea.vmem [#allocation1], 3
        %6621 = vst [vmem:[%s6620] ss:$4 sm:$0xff] %v6390
        %v6622 = vld.sshfl [vmem:[#allocation1] sm:$0xff pattern:$0x73625140]
        %6623 = vrot.lane.b32.xlu0 %v6622, 8
        %v6624 = vpop.permute.xlu0 %6623
        %6630 = vst [vmem:[#allocation1] ss:$4 sm:$0xff] %v6368
        %s6631 = scalar_lea.vmem [#allocation1], 1
        %6632 = vst [vmem:[%s6631] ss:$4 sm:$0xff] %v6376
        %s6633 = scalar_lea.vmem [#allocation1], 2
        %6634 = vst [vmem:[%s6633] ss:$4 sm:$0xff] %v6384
        %s6635 = scalar_lea.vmem [#allocation1], 3
        %6636 = vst [vmem:[%s6635] ss:$4 sm:$0xff] %v6392
        %v6637 = vld.sshfl [vmem:[#allocation1] sm:$0xff pattern:$0x73625140]
        %6638 = vrot.lane.b32.xlu0 %v6637, 10
        %v6639 = vpop.permute.xlu0 %6638
        %6645 = vst [vmem:[#allocation1] ss:$4 sm:$0xff] %v6398
        %s6646 = scalar_lea.vmem [#allocation1], 1
        %6647 = vst [vmem:[%s6646] ss:$4 sm:$0xff] %v6406
        %s6648 = scalar_lea.vmem [#allocation1], 2
        %6649 = vst [vmem:[%s6648] ss:$4 sm:$0xff] %v6414
        %s6650 = scalar_lea.vmem [#allocation1], 3
        %6651 = vst [vmem:[%s6650] ss:$4 sm:$0xff] %v6422
        %v6652 = vld.sshfl [vmem:[#allocation1] sm:$0xff pattern:$0x73625140]
        %6653 = vrot.lane.b32.xlu0 %v6652, 12
        %v6654 = vpop.permute.xlu0 %6653
        %6660 = vst [vmem:[#allocation1] ss:$4 sm:$0xff] %v6400
        %s6661 = scalar_lea.vmem [#allocation1], 1
        %6662 = vst [vmem:[%s6661] ss:$4 sm:$0xff] %v6408
        %s6663 = scalar_lea.vmem [#allocation1], 2
        %6664 = vst [vmem:[%s6663] ss:$4 sm:$0xff] %v6416
        %s6665 = scalar_lea.vmem [#allocation1], 3
        %6666 = vst [vmem:[%s6665] ss:$4 sm:$0xff] %v6424
        %v6667 = vld.sshfl [vmem:[#allocation1] sm:$0xff pattern:$0x73625140]
        %6668 = vrot.lane.b32.xlu0 %v6667, 14
        %v6669 = vpop.permute.xlu0 %6668
        %6675 = vst [vmem:[#allocation1] ss:$4 sm:$0xff] %v6430
        %s6676 = scalar_lea.vmem [#allocation1], 1
        %6677 = vst [vmem:[%s6676] ss:$4 sm:$0xff] %v6438
        %s6678 = scalar_lea.vmem [#allocation1], 2
        %6679 = vst [vmem:[%s6678] ss:$4 sm:$0xff] %v6446
        %s6680 = scalar_lea.vmem [#allocation1], 3
        %6681 = vst [vmem:[%s6680] ss:$4 sm:$0xff] %v6454
        %v6682 = vld.sshfl [vmem:[#allocation1] sm:$0xff pattern:$0x73625140]
        %6683 = vrot.lane.b32.xlu0 %v6682, 16
        %v6684 = vpop.permute.xlu0 %6683
        %6690 = vst [vmem:[#allocation1] ss:$4 sm:$0xff] %v6432
        %s6691 = scalar_lea.vmem [#allocation1], 1
        %6692 = vst [vmem:[%s6691] ss:$4 sm:$0xff] %v6440
        %s6693 = scalar_lea.vmem [#allocation1], 2
        %6694 = vst [vmem:[%s6693] ss:$4 sm:$0xff] %v6448
        %s6695 = scalar_lea.vmem [#allocation1], 3
        %6696 = vst [vmem:[%s6695] ss:$4 sm:$0xff] %v6456
        %v6697 = vld.sshfl [vmem:[#allocation1] sm:$0xff pattern:$0x73625140]
        %6698 = vrot.lane.b32.xlu0 %v6697, 18
        %v6699 = vpop.permute.xlu0 %6698
        %6705 = vst [vmem:[#allocation1] ss:$4 sm:$0xff] %v6462
        %s6706 = scalar_lea.vmem [#allocation1], 1
        %6707 = vst [vmem:[%s6706] ss:$4 sm:$0xff] %v6470
        %s6708 = scalar_lea.vmem [#allocation1], 2
        %6709 = vst [vmem:[%s6708] ss:$4 sm:$0xff] %v6478
        %s6710 = scalar_lea.vmem [#allocation1], 3
        %6711 = vst [vmem:[%s6710] ss:$4 sm:$0xff] %v6486
        %v6712 = vld.sshfl [vmem:[#allocation1] sm:$0xff pattern:$0x73625140]
        %6713 = vrot.lane.b32.xlu0 %v6712, 20
        %v6714 = vpop.permute.xlu0 %6713
        %6720 = vst [vmem:[#allocation1] ss:$4 sm:$0xff] %v6464
        %s6721 = scalar_lea.vmem [#allocation1], 1
        %6722 = vst [vmem:[%s6721] ss:$4 sm:$0xff] %v6472
        %s6723 = scalar_lea.vmem [#allocation1], 2
        %6724 = vst [vmem:[%s6723] ss:$4 sm:$0xff] %v6480
        %s6725 = scalar_lea.vmem [#allocation1], 3
        %6726 = vst [vmem:[%s6725] ss:$4 sm:$0xff] %v6488
        %v6727 = vld.sshfl [vmem:[#allocation1] sm:$0xff pattern:$0x73625140]
        %6728 = vrot.lane.b32.xlu0 %v6727, 22
        %v6729 = vpop.permute.xlu0 %6728
        %6735 = vst [vmem:[#allocation1] ss:$4 sm:$0xff] %v6494
        %s6736 = scalar_lea.vmem [#allocation1], 1
        %6737 = vst [vmem:[%s6736] ss:$4 sm:$0xff] %v6502
        %s6738 = scalar_lea.vmem [#allocation1], 2
        %6739 = vst [vmem:[%s6738] ss:$4 sm:$0xff] %v6510
        %s6740 = scalar_lea.vmem [#allocation1], 3
        %6741 = vst [vmem:[%s6740] ss:$4 sm:$0xff] %v6518
        %v6742 = vld.sshfl [vmem:[#allocation1] sm:$0xff pattern:$0x73625140]
        %6743 = vrot.lane.b32.xlu0 %v6742, 24
        %v6744 = vpop.permute.xlu0 %6743
        %6750 = vst [vmem:[#allocation1] ss:$4 sm:$0xff] %v6496
        %s6751 = scalar_lea.vmem [#allocation1], 1
        %6752 = vst [vmem:[%s6751] ss:$4 sm:$0xff] %v6504
        %s6753 = scalar_lea.vmem [#allocation1], 2
        %6754 = vst [vmem:[%s6753] ss:$4 sm:$0xff] %v6512
        %s6755 = scalar_lea.vmem [#allocation1], 3
        %6756 = vst [vmem:[%s6755] ss:$4 sm:$0xff] %v6520
        %v6757 = vld.sshfl [vmem:[#allocation1] sm:$0xff pattern:$0x73625140]
        %6758 = vrot.lane.b32.xlu0 %v6757, 26
        %v6759 = vpop.permute.xlu0 %6758
        %6765 = vst [vmem:[#allocation1] ss:$4 sm:$0xff] %v6526
        %s6766 = scalar_lea.vmem [#allocation1], 1
        %6767 = vst [vmem:[%s6766] ss:$4 sm:$0xff] %v6534
        %s6768 = scalar_lea.vmem [#allocation1], 2
        %6769 = vst [vmem:[%s6768] ss:$4 sm:$0xff] %v6542
        %s6770 = scalar_lea.vmem [#allocation1], 3
        %6771 = vst [vmem:[%s6770] ss:$4 sm:$0xff] %v6550
        %v6772 = vld.sshfl [vmem:[#allocation1] sm:$0xff pattern:$0x73625140]
        %6773 = vrot.lane.b32.xlu0 %v6772, 28
        %v6774 = vpop.permute.xlu0 %6773
        %6780 = vst [vmem:[#allocation1] ss:$4 sm:$0xff] %v6528
        %s6781 = scalar_lea.vmem [#allocation1], 1
        %6782 = vst [vmem:[%s6781] ss:$4 sm:$0xff] %v6536
        %s6783 = scalar_lea.vmem [#allocation1], 2
        %6784 = vst [vmem:[%s6783] ss:$4 sm:$0xff] %v6544
        %s6785 = scalar_lea.vmem [#allocation1], 3
        %6786 = vst [vmem:[%s6785] ss:$4 sm:$0xff] %v6552
        %v6787 = vld.sshfl [vmem:[#allocation1] sm:$0xff pattern:$0x73625140]
        %6788 = vrot.lane.b32.xlu0 %v6787, 30
        %v6789 = vpop.permute.xlu0 %6788
        %v6791 = vsel %vm1855, %v6564, %v6579
        %v6792 = vsel %vm899, %v6791, %v6594
        %v6793 = vsel %vm1858, %v6792, %v6609
        %v6794 = vsel %vm918, %v6793, %v6624
        %v6795 = vsel %vm1861, %v6794, %v6639
        %v6796 = vsel %vm937, %v6795, %v6654
        %v6797 = vsel %vm1864, %v6796, %v6669
        %v6798 = vsel %vm956, %v6797, %v6684
        %v6799 = vsel %vm1867, %v6798, %v6699
        %v6800 = vsel %vm975, %v6799, %v6714
        %v6801 = vsel %vm1870, %v6800, %v6729
        %v6802 = vsel %vm994, %v6801, %v6744
        %v6803 = vsel %vm1873, %v6802, %v6759
        %v6804 = vsel %vm1013, %v6803, %v6774
        %v6805 = vsel %vm1876, %v6804, %v6789
        %6807 = vrot.lane.b32.xlu0 %v6805, 32
        %v6808 = vpop.permute.xlu0 %6807
        %v6810 = vsel %vm1032, %v6104, %v6808
        %s6811 = scalar_lea.vmem %s215, 24 [#allocation3]
        %6812 = vst.msk [vmem:[%s6811] sm:$0xff] %vm2584, %v6810
        %s6813 = sand.u32 %s132, 1
        %s6814 = scalar_lea.sflag [#allocation4], %s6813
        %s6815 = sand.u32 %s132, 1
        %s6816 = smul.addr %s6815, 32
        %s6817 = scalar_lea.vmem [#allocation3], %s6816
        // Predicated region
        $region37: #{tpu_custom_call.1} parent=35 // pred_check
          %p6818 = pneg %p142
        $region38: #{tpu_custom_call.1} parent=35 // pred_check_branch
          %6820 = sbr.rel (%p6818) target = $region40
        $region39: #{tpu_custom_call.1} parent=35 // pred_region
          %6822 = vsyncadd %s6814, 0
          %s6823 = smul.addr %s23, 8
          %s6824 = sadd.s32 %s24, %s6823
          %s6825 = smul.addr %s6824, 8
          %s6826 = scalar_lea.hbm %s4, %s6825
          %s6827 = sshll.u32 %s6817, 4
          %s6828 = int_to_ptr.vmem [resolvable:$true] %s6827
          %s6829 = sshll.u32 %s6826, 4
          %s6830 = int_to_ptr.hbm [resolvable:$true] %s6829
          %6835 = dma.vmem_to_hbm [thread:$0]  %s6828, 512, %s6830, %s6814, 128, 256, 8
        $region40: #{tpu_custom_call.1} parent=35 // pred_fallthru
          _
      $region36: #{tpu_custom_call.1} parent=5 // pred_fallthru
        _
      %p6836 = scmp.le.s32.totalorder 2, %s14
      // Predicated region
      $region41: #{tpu_custom_call.1} parent=5 // pred_check
        %p6837 = pneg %p6836
      $region42: #{tpu_custom_call.1} parent=5 // pred_check_branch
        %6839 = sbr.rel (%p6837) target = $region44
      $region43: #{tpu_custom_call.1} parent=5 // pred_region
        %s6840 = ssub.s32 %s14, 2
        // Predicated region
        $region45: #{tpu_custom_call.1} parent=43 // pred_check
          %p6841 = pneg %p148
        $region46: #{tpu_custom_call.1} parent=43 // pred_check_branch
          %6843 = sbr.rel (%p6841) target = $region48
        $region47: #{tpu_custom_call.1} parent=43 // pred_region
          %s6844 = sand.u32 %s133, 1
          %s6845 = scalar_lea.sflag [#allocation4], %s6844
          %s6846 = sand.u32 %s133, 1
          %s6847 = smul.addr %s6846, 32
          %s6848 = scalar_lea.vmem [#allocation3], %s6847
          %6850 = dma.done %s6845, 512
        $region48: #{tpu_custom_call.1} parent=43 // pred_fallthru
          _
      $region44: #{tpu_custom_call.1} parent=5 // pred_fallthru
        _
    $region6: #{tpu_custom_call.1} parent=1 // loop_footer
      %s18 = sadd.s32 1, %s14
    $region7: #{tpu_custom_call.1} parent=1 // loop_footer_branch
      %13 = sbr.rel target = $region3
    $region8: #{tpu_custom_call.1} parent=1 // loop_exit
      _
    %6851 = vsyncpa [#allocation4], 1
    %s6852 = scalar_lea.sflag [#allocation4], 1
    %6853 = vsyncpa %s6852, 1

</llo_original>
